<compile_context>
chip_gen: v6e
topology: v6e:2x2x1
jax: 0.10.0
libtpu: 0.0.40
codegen_flags: <defaults>
</compile_context>

<pallas_src>
import functools

import jax
import jax.numpy as jnp
from jax import lax
from jax.experimental import pallas as pl
from jax.experimental.pallas import tpu as pltpu

DIM = 32                # hidden dim ("dim" in the torch module, shrunk from 64)
N_ATOM_JUMPS = 3
SET2SET_STEPS = 3


def _round8(n):
    return ((n + 7) // 8) * 8


def _slab_layout(n_node_features, n_edge_features):
    """Row layout of the packed small-parameter slab: name -> (offset, k_in, width, rows)."""
    entries = [
        ("lin0",   n_node_features, DIM),
        ("nn1",    n_edge_features, 128),
        ("conv",   DIM,             DIM),
        ("gru_ih", DIM,             3 * DIM),
        ("gru_hh", DIM,             3 * DIM),
        ("ls",     3 * DIM,         4 * DIM),
        ("lin1",   2 * DIM,         DIM),
        ("lin2t",  1,               DIM),     # lin2 stored transposed (w^T row + bias row)
    ]
    layout, off = {}, 0
    for name, k, w in entries:
        rows = _round8(k + 1)                 # 8-row alignment -> clean (8,128) tile slices
        layout[name] = (off, k, w, rows)
        off += rows
    return layout, off


def _gilmer_kernel(layout, x_ref, edge_ref, idx_ref, rr_ref, nn2_ref, p_ref,
                   out_ref, wflat_ref):
    f32, bf16 = jnp.float32, jnp.bfloat16
    n_nodes = x_ref.shape[0]
    n_edges = edge_ref.shape[0]
    n_graphs = out_ref.shape[1]
    fe = edge_ref.shape[1] - 1                # last lane of edge_ref is the src index

    def mm(a, b):
        return jnp.dot(a, b, preferred_element_type=f32)

    def get_wb(name):
        off, k, width, rows = layout[name]
        blk = p_ref[off:off + rows, :]        # aligned (rows, 128) VMEM load
        return blk[:k, :width], blk[k:k + 1, :width]

    # ---- lin0 + relu (also the initial GRU hidden state) ------------------------------
    w0, b0 = get_wb("lin0")
    out = jnp.maximum(mm(x_ref[...], w0) + b0, 0.0)
    h = out

    # ---- edge network: MLP(edge_attr) -> per-edge flattened (DIM,DIM) weights ---------
    edge_full = edge_ref[...]
    eattr = edge_full[:, :fe]
    src_col = edge_full[:, fe:fe + 1].astype(jnp.int32)          # (E, 1)
    w1, b1 = get_wb("nn1")
    e_hidden = jnp.maximum(mm(eattr, w1) + b1, 0.0)              # (E, 128)
    nn2_full = nn2_ref[...]
    # Stage w_flat in VMEM scratch so it is not a vreg-live value across the jumps.
    wflat_ref[...] = mm(e_hidden, nn2_full[:-1, :]) + nn2_full[-1:, :]   # (E, DIM*DIM)

    # ---- structural masks (built in-kernel, cast to bf16 for the MXU) -----------------
    iota_en = lax.broadcasted_iota(jnp.int32, (n_edges, n_nodes), 1)
    gather_b = jnp.where(src_col == iota_en, 1.0, 0.0).astype(bf16)      # (E, N) x_j gather

    dst_row = idx_ref[0:1, :n_edges]                                     # (1, E)
    iota_ne = lax.broadcasted_iota(jnp.int32, (n_nodes, n_edges), 0)
    scat_f = jnp.where(dst_row == iota_ne, 1.0, 0.0)                     # (N, E) scatter-sum
    deg = jnp.sum(scat_f, axis=1, keepdims=True)                         # (N, 1)
    inv_col = jnp.where(deg > 0.0, 1.0 / jnp.maximum(deg, 1.0), 0.0)     # exact mean norm
    scat_b = scat_f.astype(bf16)

    batch_row = idx_ref[1:2, :n_nodes]                                   # (1, N)
    iota_bn = lax.broadcasted_iota(jnp.int32, (n_graphs, n_nodes), 0)
    in_graph = batch_row == iota_bn                                      # (B, N) membership

    # ---- hoisted loop-invariant params / bias broadcasts --------------------------------
    conv_w, conv_bias = get_wb("conv")
    conv_b_bc = jnp.broadcast_to(conv_bias, (n_nodes, DIM))
    gru_wih, gru_bih = get_wb("gru_ih")
    gru_whh, gru_bhh = get_wb("gru_hh")
    bih_bc = jnp.broadcast_to(gru_bih, (n_nodes, 3 * DIM))
    bhh_bc = jnp.broadcast_to(gru_bhh, (n_nodes, 3 * DIM))

    # ---- n_atom_jumps x (NNConv(mean) + relu + GRU cell) -------------------------------
    for _ in range(N_ATOM_JUMPS):
        # message path: bf16 MXU operands, f32 accumulation, f32 elementwise (v5e-safe)
        x_src = mm(gather_b, out.astype(bf16))                           # (E, DIM)  = x_j
        prod = mm(x_src.astype(bf16), rr_ref[0:DIM, :]) * wflat_ref[...]  # (E, DIM*DIM)
        msgs = lax.dot_general(prod.astype(bf16), rr_ref[DIM:2 * DIM, :],
                               (((1,), (1,)), ((), ())),
                               preferred_element_type=f32)               # (E, DIM) x_j @ W_e
        aggr = mm(scat_b, msgs.astype(bf16)) * inv_col                   # (N, DIM) mean aggr
        m = jnp.maximum(aggr + mm(out, conv_w) + conv_b_bc, 0.0)

        # GRU cell (gate order r, z, n as in torch.nn.GRU); r,z share one sigmoid slab
        gi = mm(m, gru_wih) + bih_bc
        gh = mm(h, gru_whh) + bhh_bc
        rz = jax.nn.sigmoid(gi[:, :2 * DIM] + gh[:, :2 * DIM])
        r = rz[:, :DIM]
        z = rz[:, DIM:]
        n = jnp.tanh(gi[:, 2 * DIM:] + r * gh[:, 2 * DIM:])
        h = (1.0 - z) * n + z * h
        out = h

    # ---- Set2Set (LSTM cell; columns pre-reordered to [i, f, o | g]) -------------------
    ls_w, ls_b = get_wb("ls")
    ls_b_bc = jnp.broadcast_to(ls_b, (n_graphs, 4 * DIM))
    q = jnp.zeros((n_graphs, DIM), f32)
    r_read = jnp.zeros((n_graphs, DIM), f32)
    hh = jnp.zeros((n_graphs, DIM), f32)
    cc = jnp.zeros((n_graphs, DIM), f32)
    for _ in range(SET2SET_STEPS):
        gates = mm(jnp.concatenate([q, r_read, hh], axis=1), ls_w) + ls_b_bc
        ifo = jax.nn.sigmoid(gates[:, :3 * DIM])        # one EUP launch for i, f, o
        g_g = jnp.tanh(gates[:, 3 * DIM:])
        i_g = ifo[:, :DIM]
        f_g = ifo[:, DIM:2 * DIM]
        o_g = ifo[:, 2 * DIM:]
        cc = f_g * cc + i_g * g_g
        hh = o_g * jnp.tanh(cc)
        q = hh

        # attention: score[b, n] = q_b . x_n, softmax within each graph
        scores = lax.dot_general(q, out, (((1,), (1,)), ((), ())),
                                 preferred_element_type=f32)             # (B, N)
        maxg = jnp.max(jnp.where(in_graph, scores, -1e30), axis=1, keepdims=True)
        exps = jnp.where(in_graph, jnp.exp(scores - maxg), 0.0)
        denom = jnp.maximum(jnp.sum(exps, axis=1, keepdims=True), 1e-30)
        attn = exps * pl.reciprocal(denom, approx=True)
        r_read = mm(attn, out)                                           # (B, DIM)

    # ---- head: relu(lin1(q_star)) -> lin2, emitted lane-major as (1, B) ----------------
    w1h, b1h = get_wb("lin1")
    z1 = jnp.maximum(mm(jnp.concatenate([q, r_read], axis=1), w1h) + b1h, 0.0)
    off2, _, _, rows2 = layout["lin2t"]
    blk2 = p_ref[off2:off2 + rows2, :]
    w2t = blk2[0:1, :DIM]                                                # (1, DIM) = lin2_w^T
    b2 = blk2[1:2, 0:1]                                                  # (1, 1)
    out_ref[...] = lax.dot_general(w2t, z1, (((1,), (1,)), ((), ())),
                                   preferred_element_type=f32) + b2      # (1, B)


def gilmer_forward(x, edge_index, edge_attr, batch, n_graphs, params):
    (lin0_w, lin0_b, nn_w1, nn_b1, nn_w2, nn_b2, root_w, conv_b,
     gru_wih, gru_whh, gru_bih, gru_bhh,
     ls_wih, ls_whh, ls_bih, ls_bhh,
     lin1_w, lin1_b, lin2_w, lin2_b) = params
    n_nodes, n_node_features = x.shape
    n_edges, n_edge_features = edge_attr.shape
    src, dst = edge_index[0], edge_index[1]

    # -- input 2: edge features with the (exact small-int) src index packed as an extra lane
    edge_in = jnp.concatenate(
        [edge_attr.astype(jnp.float32), src.astype(jnp.float32)[:, None]], axis=1)

    # -- input 3: lane-major packed integer indices (dst per edge, graph id per node)
    L = max(n_edges, n_nodes)
    idx = jnp.full((2, L), -1, jnp.int32)
    idx = idx.at[0, :n_edges].set(dst.astype(jnp.int32))
    idx = idx.at[1, :n_nodes].set(batch.astype(jnp.int32))

    # -- input 4: host-built bf16 expand / transposed-reduce matrices for the message matmul
    #    Rexp[d, j] = 1 iff j // DIM == d ;  RredT[k, j] = 1 iff j % DIM == k
    jj = jnp.arange(DIM * DIM)[None, :]
    dd = jnp.arange(DIM)[:, None]
    rr = jnp.concatenate([(jj // DIM) == dd, (jj % DIM) == dd],
                         axis=0).astype(jnp.bfloat16)                     # (2*DIM, DIM*DIM)

    # -- input 5: edge-NN second layer slab (dominant parameter, kept unpadded)
    nn2_wb = jnp.concatenate([nn_w2, nn_b2], axis=0).astype(jnp.float32)  # (129, DIM*DIM)

    # -- input 6: all remaining params packed into one 128-lane slab, 8-row-aligned blocks
    layout, total_rows = _slab_layout(n_node_features, n_edge_features)
    slab = jnp.zeros((total_rows, 128), jnp.float32)

    def put(s, name, w, b):
        off, k, width, _ = layout[name]
        s = s.at[off:off + k, :width].set(w)
        return s.at[off + k:off + k + 1, :width].set(b)

    slab = put(slab, "lin0", lin0_w, lin0_b)
    slab = put(slab, "nn1", nn_w1, nn_b1)
    slab = put(slab, "conv", root_w, conv_b)
    slab = put(slab, "gru_ih", gru_wih, gru_bih)
    slab = put(slab, "gru_hh", gru_whh, gru_bhh)
    # Set2Set LSTM: fuse [Wih; Whh], sum biases, reorder gate columns [i,f,g,o] -> [i,f,o,g]
    perm = jnp.concatenate([jnp.arange(2 * DIM), jnp.arange(3 * DIM, 4 * DIM),
                            jnp.arange(2 * DIM, 3 * DIM)])
    slab = put(slab, "ls", jnp.concatenate([ls_wih, ls_whh], axis=0)[:, perm],
               (ls_bih + ls_bhh)[:, perm])
    slab = put(slab, "lin1", lin1_w, lin1_b)
    slab = put(slab, "lin2t", lin2_w.T, jnp.pad(lin2_b, ((0, 0), (0, DIM - 1))))

    vmem = pl.BlockSpec(memory_space=pltpu.MemorySpace.VMEM)
    out = pl.pallas_call(
        functools.partial(_gilmer_kernel, layout),
        out_shape=jax.ShapeDtypeStruct((1, n_graphs), jnp.float32),       # lane-major output
        in_specs=[vmem] * 6,
        out_specs=vmem,
        scratch_shapes=[pltpu.VMEM((n_edges, DIM * DIM), jnp.float32)],   # w_flat home
        # 32 MiB fits every generation's scoped default; raise toward ~100 MiB on v6e and
        # keep <= ~56 MiB on v7x if the graph is scaled up.
        compiler_params=pltpu.CompilerParams(vmem_limit_bytes=32 * 1024 * 1024),
    )(x.astype(jnp.float32), edge_in, idx, rr, nn2_wb, slab)
    return out.reshape(-1)


def reference_forward(x, edge_index, edge_attr, batch, n_graphs, params):
    """Pure-JAX f32 reference (sparse gather/scatter formulation) for correctness check."""
    (lin0_w, lin0_b, nn_w1, nn_b1, nn_w2, nn_b2, root_w, conv_b,
     gru_wih, gru_whh, gru_bih, gru_bhh,
     ls_wih, ls_whh, ls_bih, ls_bhh,
     lin1_w, lin1_b, lin2_w, lin2_b) = params
    src, dst = edge_index[0], edge_index[1]
    n_nodes = x.shape[0]

    out = jax.nn.relu(x @ lin0_w + lin0_b)
    h = out
    e_hidden = jax.nn.relu(edge_attr @ nn_w1 + nn_b1)
    w_e = (e_hidden @ nn_w2 + nn_b2).reshape(-1, DIM, DIM)
    deg = jnp.zeros((n_nodes,)).at[dst].add(1.0)
    for _ in range(N_ATOM_JUMPS):
        msgs = jnp.einsum('ed,edk->ek', out[src], w_e)
        aggr = jnp.zeros((n_nodes, DIM)).at[dst].add(msgs) / jnp.maximum(deg, 1.0)[:, None]
        m = jax.nn.relu(aggr + out @ root_w + conv_b)
        gi = m @ gru_wih + gru_bih
        gh = h @ gru_whh + gru_bhh
        r = jax.nn.sigmoid(gi[:, :DIM] + gh[:, :DIM])
        z = jax.nn.sigmoid(gi[:, DIM:2 * DIM] + gh[:, DIM:2 * DIM])
        n = jnp.tanh(gi[:, 2 * DIM:] + r * gh[:, 2 * DIM:])
        h = (1.0 - z) * n + z * h
        out = h

    q = jnp.zeros((n_graphs, DIM)); rr = jnp.zeros((n_graphs, DIM))
    hh = jnp.zeros((n_graphs, DIM)); cc = jnp.zeros((n_graphs, DIM))
    for _ in range(SET2SET_STEPS):
        q_star = jnp.concatenate([q, rr], axis=1)
        gates = q_star @ ls_wih + ls_bih + hh @ ls_whh + ls_bhh
        i_g = jax.nn.sigmoid(gates[:, :DIM]); f_g = jax.nn.sigmoid(gates[:, DIM:2 * DIM])
        g_g = jnp.tanh(gates[:, 2 * DIM:3 * DIM]); o_g = jax.nn.sigmoid(gates[:, 3 * DIM:])
        cc = f_g * cc + i_g * g_g
        hh = o_g * jnp.tanh(cc)
        q = hh
        e = jnp.sum(out * q[batch], axis=-1)
        e_max = jnp.full((n_graphs,), -1e30).at[batch].max(e)
        ex = jnp.exp(e - e_max[batch])
        denom = jnp.zeros((n_graphs,)).at[batch].add(ex)
        a = ex / denom[batch]
        rr = jnp.zeros((n_graphs, DIM)).at[batch].add(a[:, None] * out)

    q_star = jnp.concatenate([q, rr], axis=1)
    z1 = jax.nn.relu(q_star @ lin1_w + lin1_b)
    return (z1 @ lin2_w + lin2_b).reshape(-1)


if __name__ == "__main__":
    n_node_features, n_edge_features = 6, 4
    n_nodes, n_graphs = 10, 2

    # two 5-node ring graphs, both edge directions (undirected)
    ring = [(i, (i + 1) % 5) for i in range(5)]
    edges = []
    for a, b in ring:
        edges += [(a, b), (b, a)]
    for a, b in ring:
        edges += [(a + 5, b + 5), (b + 5, a + 5)]
    edge_index = jnp.array(edges, dtype=jnp.int32).T            # (2, E), E = 20
    n_edges = edge_index.shape[1]
    batch = jnp.array([0] * 5 + [1] * 5, dtype=jnp.int32)

    keys = jax.random.split(jax.random.PRNGKey(0), 32)

    def w(k, shape, scale=0.1):
        return (scale * jax.random.normal(k, shape)).astype(jnp.float32)

    x = w(keys[0], (n_nodes, n_node_features), 1.0)
    edge_attr = w(keys[1], (n_edges, n_edge_features), 1.0)

    params = (
        w(keys[3], (n_node_features, DIM)), w(keys[4], (1, DIM)),        # lin0
        w(keys[5], (n_edge_features, 128)), w(keys[6], (1, 128)),        # edge nn layer 1
        w(keys[7], (128, DIM * DIM)), w(keys[8], (1, DIM * DIM)),        # edge nn layer 2
        w(keys[9], (DIM, DIM)), w(keys[10], (1, DIM)),                   # NNConv root / bias
        w(keys[11], (DIM, 3 * DIM)), w(keys[12], (DIM, 3 * DIM)),        # GRU W_ih, W_hh
        w(keys[13], (1, 3 * DIM)), w(keys[14], (1, 3 * DIM)),            # GRU b_ih, b_hh
        w(keys[15], (2 * DIM, 4 * DIM)), w(keys[16], (DIM, 4 * DIM)),    # Set2Set LSTM W_ih, W_hh
        w(keys[17], (1, 4 * DIM)), w(keys[18], (1, 4 * DIM)),            # Set2Set LSTM b_ih, b_hh
        w(keys[19], (2 * DIM, DIM)), w(keys[20], (1, DIM)),              # lin1
        w(keys[21], (DIM, 1)), w(keys[22], (1, 1)),                      # lin2
    )

    out = jax.block_until_ready(
        gilmer_forward(x, edge_index, edge_attr, batch, n_graphs, params))
    ref = jax.block_until_ready(
        reference_forward(x, edge_index, edge_attr, batch, n_graphs, params))

    assert out.shape == (n_graphs,)
    assert bool(jnp.all(jnp.isfinite(out)))
    # Tolerance loosened (vs. pure-f32) to cover the bf16 MXU message path + approx reciprocal.
    assert bool(jnp.allclose(out, ref, atol=3e-2, rtol=3e-2))
    print("KERNEL_OK")
</pallas_src>

<mosaic_0001>
module attributes {stable_mosaic.version = 11 : i64} {
  func.func @_gilmer_kernel(%arg0: memref<10x6xf32, #tpu.memory_space<vmem>>, %arg1: memref<20x5xf32, #tpu.memory_space<vmem>>, %arg2: memref<2x20xi32, #tpu.memory_space<vmem>>, %arg3: memref<64x1024xbf16, #tpu.memory_space<vmem>>, %arg4: memref<129x1024xf32, #tpu.memory_space<vmem>>, %arg5: memref<320x128xf32, #tpu.memory_space<vmem>>, %arg6: memref<1x2xf32, #tpu.memory_space<vmem>>, %arg7: memref<20x1024xf32, #tpu.memory_space<vmem>>) attributes {dimension_semantics = [], scalar_prefetch = 0 : i64, scratch_operands = 1 : i64, tpu.core_type = #tpu.core_type<tc>} {
    %c0 = arith.constant 0 : index
    %c0_0 = arith.constant 0 : index
    %0 = vector.load %arg5[%c0, %c0_0] : memref<320x128xf32, #tpu.memory_space<vmem>>, vector<8x128xf32>
    %1 = vector.extract_strided_slice %0 {offsets = [0, 0], sizes = [6, 32], strides = [1, 1]} : vector<8x128xf32> to vector<6x32xf32>
    %2 = vector.extract_strided_slice %0 {offsets = [6, 0], sizes = [1, 32], strides = [1, 1]} : vector<8x128xf32> to vector<1x32xf32>
    %c0_1 = arith.constant 0 : index
    %c0_2 = arith.constant 0 : index
    %3 = vector.load %arg0[%c0_1, %c0_2] : memref<10x6xf32, #tpu.memory_space<vmem>>, vector<10x6xf32>
    %cst = arith.constant dense<0.000000e+00> : vector<10x32xf32>
    %4 = tpu.matmul %3, %1, %cst {dimension_numbers = #tpu.dot_dimension_numbers<[1], [0], [0], [1], [0, 0, 1, 1], [], []>} : vector<10x6xf32>, vector<6x32xf32>, vector<10x32xf32> -> vector<10x32xf32>
    %5 = vector.broadcast %2 : vector<1x32xf32> to vector<10x32xf32>
    %6 = arith.addf %4, %5 : vector<10x32xf32>
    %cst_3 = arith.constant 0.000000e+00 : f32
    %7 = vector.broadcast %cst_3 : f32 to vector<10x32xf32>
    %8 = arith.maximumf %6, %7 : vector<10x32xf32>
    %c0_4 = arith.constant 0 : index
    %c0_5 = arith.constant 0 : index
    %9 = vector.load %arg1[%c0_4, %c0_5] : memref<20x5xf32, #tpu.memory_space<vmem>>, vector<20x5xf32>
    %10 = vector.extract_strided_slice %9 {offsets = [0, 0], sizes = [20, 4], strides = [1, 1]} : vector<20x5xf32> to vector<20x4xf32>
    %11 = vector.extract_strided_slice %9 {offsets = [0, 4], sizes = [20, 1], strides = [1, 1]} : vector<20x5xf32> to vector<20x1xf32>
    %12 = arith.fptosi %11 : vector<20x1xf32> to vector<20x1xi32>
    %c8 = arith.constant 8 : index
    %c0_6 = arith.constant 0 : index
    %13 = vector.load %arg5[%c8, %c0_6] : memref<320x128xf32, #tpu.memory_space<vmem>>, vector<8x128xf32>
    %14 = vector.extract_strided_slice %13 {offsets = [0, 0], sizes = [4, 128], strides = [1, 1]} : vector<8x128xf32> to vector<4x128xf32>
    %15 = vector.extract_strided_slice %13 {offsets = [4, 0], sizes = [1, 128], strides = [1, 1]} : vector<8x128xf32> to vector<1x128xf32>
    %cst_7 = arith.constant dense<0.000000e+00> : vector<20x128xf32>
    %16 = tpu.matmul %10, %14, %cst_7 {dimension_numbers = #tpu.dot_dimension_numbers<[1], [0], [0], [1], [0, 0, 1, 1], [], []>} : vector<20x4xf32>, vector<4x128xf32>, vector<20x128xf32> -> vector<20x128xf32>
    %17 = vector.broadcast %15 : vector<1x128xf32> to vector<20x128xf32>
    %18 = arith.addf %16, %17 : vector<20x128xf32>
    %cst_8 = arith.constant 0.000000e+00 : f32
    %19 = vector.broadcast %cst_8 : f32 to vector<20x128xf32>
    %20 = arith.maximumf %18, %19 : vector<20x128xf32>
    %c0_9 = arith.constant 0 : index
    %c0_10 = arith.constant 0 : index
    %21 = vector.load %arg4[%c0_9, %c0_10] : memref<129x1024xf32, #tpu.memory_space<vmem>>, vector<129x1024xf32>
    %22 = vector.extract_strided_slice %21 {offsets = [0, 0], sizes = [128, 1024], strides = [1, 1]} : vector<129x1024xf32> to vector<128x1024xf32>
    %cst_11 = arith.constant dense<0.000000e+00> : vector<20x1024xf32>
    %23 = tpu.matmul %20, %22, %cst_11 {dimension_numbers = #tpu.dot_dimension_numbers<[1], [0], [0], [1], [0, 0, 1, 1], [], []>} : vector<20x128xf32>, vector<128x1024xf32>, vector<20x1024xf32> -> vector<20x1024xf32>
    %24 = vector.extract_strided_slice %21 {offsets = [128, 0], sizes = [1, 1024], strides = [1, 1]} : vector<129x1024xf32> to vector<1x1024xf32>
    %25 = vector.broadcast %24 : vector<1x1024xf32> to vector<20x1024xf32>
    %26 = arith.addf %23, %25 : vector<20x1024xf32>
    %c0_12 = arith.constant 0 : index
    %c0_13 = arith.constant 0 : index
    %27 = vector.load %arg7[%c0_12, %c0_13] : memref<20x1024xf32, #tpu.memory_space<vmem>>, vector<20x1024xf32>
    tpu.vector_store %arg7[%c0_12, %c0_13], %26 {strides = array<i32>} : memref<20x1024xf32, #tpu.memory_space<vmem>>, vector<20x1024xf32>,
    %28 = tpu.iota {dimensions = array<i32: 1>} : vector<20x10xi32>
    %29 = vector.broadcast %12 : vector<20x1xi32> to vector<20x10xi32>
    %30 = arith.cmpi eq, %29, %28 : vector<20x10xi32>
    %cst_14 = arith.constant 1.000000e+00 : f32
    %cst_15 = arith.constant 0.000000e+00 : f32
    %31 = vector.broadcast %cst_14 : f32 to vector<20x10xf32>
    %32 = vector.broadcast %cst_15 : f32 to vector<20x10xf32>
    %33 = arith.select %30, %31, %32 : vector<20x10xi1>, vector<20x10xf32>
    %34 = arith.truncf %33 : vector<20x10xf32> to vector<20x10xbf16>
    %c0_16 = arith.constant 0 : index
    %c0_17 = arith.constant 0 : index
    %35 = vector.load %arg2[%c0_16, %c0_17] : memref<2x20xi32, #tpu.memory_space<vmem>>, vector<1x20xi32>
    %36 = tpu.iota {dimensions = array<i32: 0>} : vector<10x20xi32>
    %37 = vector.broadcast %35 : vector<1x20xi32> to vector<10x20xi32>
    %38 = arith.cmpi eq, %37, %36 : vector<10x20xi32>
    %cst_18 = arith.constant 1.000000e+00 : f32
    %cst_19 = arith.constant 0.000000e+00 : f32
    %39 = vector.broadcast %cst_18 : f32 to vector<10x20xf32>
    %40 = vector.broadcast %cst_19 : f32 to vector<10x20xf32>
    %41 = arith.select %38, %39, %40 : vector<10x20xi1>, vector<10x20xf32>
    %cst_20 = arith.constant dense<0.000000e+00> : vector<10xf32>
    %42 = vector.multi_reduction <add>, %41, %cst_20 [1] : vector<10x20xf32> to vector<10xf32>
    %43 = vector.shape_cast %42 : vector<10xf32> to vector<10x1xf32>
    %cst_21 = arith.constant 0.000000e+00 : f32
    %44 = vector.broadcast %cst_21 : f32 to vector<10x1xf32>
    %45 = arith.cmpf ogt, %43, %44 : vector<10x1xf32>
    %cst_22 = arith.constant 1.000000e+00 : f32
    %46 = vector.broadcast %cst_22 : f32 to vector<10x1xf32>
    %47 = arith.maximumf %43, %46 : vector<10x1xf32>
    %cst_23 = arith.constant 1.000000e+00 : f32
    %48 = vector.broadcast %cst_23 : f32 to vector<10x1xf32>
    %49 = arith.divf %48, %47 : vector<10x1xf32>
    %cst_24 = arith.constant 0.000000e+00 : f32
    %50 = vector.broadcast %cst_24 : f32 to vector<10x1xf32>
    %51 = arith.select %45, %49, %50 : vector<10x1xi1>, vector<10x1xf32>
    %52 = arith.truncf %41 : vector<10x20xf32> to vector<10x20xbf16>
    %c1 = arith.constant 1 : index
    %c0_25 = arith.constant 0 : index
    %53 = vector.load %arg2[%c1, %c0_25] : memref<2x20xi32, #tpu.memory_space<vmem>>, vector<1x10xi32>
    %54 = tpu.iota {dimensions = array<i32: 0>} : vector<2x10xi32>
    %55 = vector.broadcast %53 : vector<1x10xi32> to vector<2x10xi32>
    %56 = arith.cmpi eq, %55, %54 : vector<2x10xi32>
    %c16 = arith.constant 16 : index
    %c0_26 = arith.constant 0 : index
    %57 = vector.load %arg5[%c16, %c0_26] : memref<320x128xf32, #tpu.memory_space<vmem>>, vector<40x128xf32>
    %58 = vector.extract_strided_slice %57 {offsets = [0, 0], sizes = [32, 32], strides = [1, 1]} : vector<40x128xf32> to vector<32x32xf32>
    %59 = vector.extract_strided_slice %57 {offsets = [32, 0], sizes = [1, 32], strides = [1, 1]} : vector<40x128xf32> to vector<1x32xf32>
    %60 = vector.shape_cast %59 : vector<1x32xf32> to vector<1x32xf32>
    %61 = vector.broadcast %60 : vector<1x32xf32> to vector<10x32xf32>
    %c56 = arith.constant 56 : index
    %c0_27 = arith.constant 0 : index
    %62 = vector.load %arg5[%c56, %c0_27] : memref<320x128xf32, #tpu.memory_space<vmem>>, vector<40x128xf32>
    %63 = vector.extract_strided_slice %62 {offsets = [0, 0], sizes = [32, 96], strides = [1, 1]} : vector<40x128xf32> to vector<32x96xf32>
    %64 = vector.extract_strided_slice %62 {offsets = [32, 0], sizes = [1, 96], strides = [1, 1]} : vector<40x128xf32> to vector<1x96xf32>
    %c96 = arith.constant 96 : index
    %c0_28 = arith.constant 0 : index
    %65 = vector.load %arg5[%c96, %c0_28] : memref<320x128xf32, #tpu.memory_space<vmem>>, vector<40x128xf32>
    %66 = vector.extract_strided_slice %65 {offsets = [0, 0], sizes = [32, 96], strides = [1, 1]} : vector<40x128xf32> to vector<32x96xf32>
    %67 = vector.extract_strided_slice %65 {offsets = [32, 0], sizes = [1, 96], strides = [1, 1]} : vector<40x128xf32> to vector<1x96xf32>
    %68 = vector.shape_cast %64 : vector<1x96xf32> to vector<1x96xf32>
    %69 = vector.broadcast %68 : vector<1x96xf32> to vector<10x96xf32>
    %70 = vector.shape_cast %67 : vector<1x96xf32> to vector<1x96xf32>
    %71 = vector.broadcast %70 : vector<1x96xf32> to vector<10x96xf32>
    %72 = arith.truncf %8 : vector<10x32xf32> to vector<10x32xbf16>
    %cst_29 = arith.constant dense<0.000000e+00> : vector<20x32xf32>
    %73 = tpu.matmul %34, %72, %cst_29 {dimension_numbers = #tpu.dot_dimension_numbers<[1], [0], [0], [1], [0, 0, 1, 1], [], []>} : vector<20x10xbf16>, vector<10x32xbf16>, vector<20x32xf32> -> vector<20x32xf32>
    %74 = arith.truncf %73 : vector<20x32xf32> to vector<20x32xbf16>
    %c0_30 = arith.constant 0 : index
    %c0_31 = arith.constant 0 : index
    %75 = vector.load %arg3[%c0_30, %c0_31] : memref<64x1024xbf16, #tpu.memory_space<vmem>>, vector<32x1024xbf16>
    %cst_32 = arith.constant dense<0.000000e+00> : vector<20x1024xf32>
    %76 = tpu.matmul %74, %75, %cst_32 {dimension_numbers = #tpu.dot_dimension_numbers<[1], [0], [0], [1], [0, 0, 1, 1], [], []>} : vector<20x32xbf16>, vector<32x1024xbf16>, vector<20x1024xf32> -> vector<20x1024xf32>
    %c0_33 = arith.constant 0 : index
    %c0_34 = arith.constant 0 : index
    %77 = vector.load %arg7[%c0_33, %c0_34] : memref<20x1024xf32, #tpu.memory_space<vmem>>, vector<20x1024xf32>
    %78 = arith.mulf %76, %77 : vector<20x1024xf32>
    %79 = arith.truncf %78 : vector<20x1024xf32> to vector<20x1024xbf16>
    %c32 = arith.constant 32 : index
    %c0_35 = arith.constant 0 : index
    %80 = vector.load %arg3[%c32, %c0_35] : memref<64x1024xbf16, #tpu.memory_space<vmem>>, vector<32x1024xbf16>
    %cst_36 = arith.constant dense<0.000000e+00> : vector<20x32xf32>
    %81 = tpu.matmul %79, %80, %cst_36 {dimension_numbers = #tpu.dot_dimension_numbers<[1], [1], [0], [0], [0, 0, 1, 0], [], []>} : vector<20x1024xbf16>, vector<32x1024xbf16>, vector<20x32xf32> -> vector<20x32xf32>
    %82 = arith.truncf %81 : vector<20x32xf32> to vector<20x32xbf16>
    %cst_37 = arith.constant dense<0.000000e+00> : vector<10x32xf32>
    %83 = tpu.matmul %52, %82, %cst_37 {dimension_numbers = #tpu.dot_dimension_numbers<[1], [0], [0], [1], [0, 0, 1, 1], [], []>} : vector<10x20xbf16>, vector<20x32xbf16>, vector<10x32xf32> -> vector<10x32xf32>
    %84 = vector.broadcast %51 : vector<10x1xf32> to vector<10x32xf32>
    %85 = arith.mulf %83, %84 : vector<10x32xf32>
    %cst_38 = arith.constant dense<0.000000e+00> : vector<10x32xf32>
    %86 = tpu.matmul %8, %58, %cst_38 {dimension_numbers = #tpu.dot_dimension_numbers<[1], [0], [0], [1], [0, 0, 1, 1], [], []>} : vector<10x32xf32>, vector<32x32xf32>, vector<10x32xf32> -> vector<10x32xf32>
    %87 = arith.addf %85, %86 : vector<10x32xf32>
    %88 = arith.addf %87, %61 : vector<10x32xf32>
    %cst_39 = arith.constant 0.000000e+00 : f32
    %89 = vector.broadcast %cst_39 : f32 to vector<10x32xf32>
    %90 = arith.maximumf %88, %89 : vector<10x32xf32>
    %cst_40 = arith.constant dense<0.000000e+00> : vector<10x96xf32>
    %91 = tpu.matmul %90, %63, %cst_40 {dimension_numbers = #tpu.dot_dimension_numbers<[1], [0], [0], [1], [0, 0, 1, 1], [], []>} : vector<10x32xf32>, vector<32x96xf32>, vector<10x96xf32> -> vector<10x96xf32>
    %92 = arith.addf %91, %69 : vector<10x96xf32>
    %cst_41 = arith.constant dense<0.000000e+00> : vector<10x96xf32>
    %93 = tpu.matmul %8, %66, %cst_41 {dimension_numbers = #tpu.dot_dimension_numbers<[1], [0], [0], [1], [0, 0, 1, 1], [], []>} : vector<10x32xf32>, vector<32x96xf32>, vector<10x96xf32> -> vector<10x96xf32>
    %94 = arith.addf %93, %71 : vector<10x96xf32>
    %95 = vector.extract_strided_slice %92 {offsets = [0, 0], sizes = [10, 64], strides = [1, 1]} : vector<10x96xf32> to vector<10x64xf32>
    %96 = vector.extract_strided_slice %94 {offsets = [0, 0], sizes = [10, 64], strides = [1, 1]} : vector<10x96xf32> to vector<10x64xf32>
    %97 = arith.addf %95, %96 : vector<10x64xf32>
    %98 = arith.negf %97 : vector<10x64xf32>
    %99 = math.exp %98 : vector<10x64xf32>
    %cst_42 = arith.constant 1.000000e+00 : f32
    %100 = vector.broadcast %cst_42 : f32 to vector<10x64xf32>
    %101 = arith.addf %100, %99 : vector<10x64xf32>
    %102 = arith.divf %100, %101 : vector<10x64xf32>
    %103 = vector.extract_strided_slice %102 {offsets = [0, 0], sizes = [10, 32], strides = [1, 1]} : vector<10x64xf32> to vector<10x32xf32>
    %104 = vector.extract_strided_slice %102 {offsets = [0, 32], sizes = [10, 32], strides = [1, 1]} : vector<10x64xf32> to vector<10x32xf32>
    %105 = vector.extract_strided_slice %92 {offsets = [0, 64], sizes = [10, 32], strides = [1, 1]} : vector<10x96xf32> to vector<10x32xf32>
    %106 = vector.extract_strided_slice %94 {offsets = [0, 64], sizes = [10, 32], strides = [1, 1]} : vector<10x96xf32> to vector<10x32xf32>
    %107 = arith.mulf %103, %106 : vector<10x32xf32>
    %108 = arith.addf %105, %107 : vector<10x32xf32>
    %109 = math.tanh %108 : vector<10x32xf32>
    %cst_43 = arith.constant 1.000000e+00 : f32
    %110 = vector.broadcast %cst_43 : f32 to vector<10x32xf32>
    %111 = arith.subf %110, %104 : vector<10x32xf32>
    %112 = arith.mulf %111, %109 : vector<10x32xf32>
    %113 = arith.mulf %104, %8 : vector<10x32xf32>
    %114 = arith.addf %112, %113 : vector<10x32xf32>
    %115 = arith.truncf %114 : vector<10x32xf32> to vector<10x32xbf16>
    %cst_44 = arith.constant dense<0.000000e+00> : vector<20x32xf32>
    %116 = tpu.matmul %34, %115, %cst_44 {dimension_numbers = #tpu.dot_dimension_numbers<[1], [0], [0], [1], [0, 0, 1, 1], [], []>} : vector<20x10xbf16>, vector<10x32xbf16>, vector<20x32xf32> -> vector<20x32xf32>
    %117 = arith.truncf %116 : vector<20x32xf32> to vector<20x32xbf16>
    %c0_45 = arith.constant 0 : index
    %c0_46 = arith.constant 0 : index
    %118 = vector.load %arg3[%c0_45, %c0_46] : memref<64x1024xbf16, #tpu.memory_space<vmem>>, vector<32x1024xbf16>
    %cst_47 = arith.constant dense<0.000000e+00> : vector<20x1024xf32>
    %119 = tpu.matmul %117, %118, %cst_47 {dimension_numbers = #tpu.dot_dimension_numbers<[1], [0], [0], [1], [0, 0, 1, 1], [], []>} : vector<20x32xbf16>, vector<32x1024xbf16>, vector<20x1024xf32> -> vector<20x1024xf32>
    %c0_48 = arith.constant 0 : index
    %c0_49 = arith.constant 0 : index
    %120 = vector.load %arg7[%c0_48, %c0_49] : memref<20x1024xf32, #tpu.memory_space<vmem>>, vector<20x1024xf32>
    %121 = arith.mulf %119, %120 : vector<20x1024xf32>
    %122 = arith.truncf %121 : vector<20x1024xf32> to vector<20x1024xbf16>
    %c32_50 = arith.constant 32 : index
    %c0_51 = arith.constant 0 : index
    %123 = vector.load %arg3[%c32_50, %c0_51] : memref<64x1024xbf16, #tpu.memory_space<vmem>>, vector<32x1024xbf16>
    %cst_52 = arith.constant dense<0.000000e+00> : vector<20x32xf32>
    %124 = tpu.matmul %122, %123, %cst_52 {dimension_numbers = #tpu.dot_dimension_numbers<[1], [1], [0], [0], [0, 0, 1, 0], [], []>} : vector<20x1024xbf16>, vector<32x1024xbf16>, vector<20x32xf32> -> vector<20x32xf32>
    %125 = arith.truncf %124 : vector<20x32xf32> to vector<20x32xbf16>
    %cst_53 = arith.constant dense<0.000000e+00> : vector<10x32xf32>
    %126 = tpu.matmul %52, %125, %cst_53 {dimension_numbers = #tpu.dot_dimension_numbers<[1], [0], [0], [1], [0, 0, 1, 1], [], []>} : vector<10x20xbf16>, vector<20x32xbf16>, vector<10x32xf32> -> vector<10x32xf32>
    %127 = vector.broadcast %51 : vector<10x1xf32> to vector<10x32xf32>
    %128 = arith.mulf %126, %127 : vector<10x32xf32>
    %cst_54 = arith.constant dense<0.000000e+00> : vector<10x32xf32>
    %129 = tpu.matmul %114, %58, %cst_54 {dimension_numbers = #tpu.dot_dimension_numbers<[1], [0], [0], [1], [0, 0, 1, 1], [], []>} : vector<10x32xf32>, vector<32x32xf32>, vector<10x32xf32> -> vector<10x32xf32>
    %130 = arith.addf %128, %129 : vector<10x32xf32>
    %131 = arith.addf %130, %61 : vector<10x32xf32>
    %cst_55 = arith.constant 0.000000e+00 : f32
    %132 = vector.broadcast %cst_55 : f32 to vector<10x32xf32>
    %133 = arith.maximumf %131, %132 : vector<10x32xf32>
    %cst_56 = arith.constant dense<0.000000e+00> : vector<10x96xf32>
    %134 = tpu.matmul %133, %63, %cst_56 {dimension_numbers = #tpu.dot_dimension_numbers<[1], [0], [0], [1], [0, 0, 1, 1], [], []>} : vector<10x32xf32>, vector<32x96xf32>, vector<10x96xf32> -> vector<10x96xf32>
    %135 = arith.addf %134, %69 : vector<10x96xf32>
    %cst_57 = arith.constant dense<0.000000e+00> : vector<10x96xf32>
    %136 = tpu.matmul %114, %66, %cst_57 {dimension_numbers = #tpu.dot_dimension_numbers<[1], [0], [0], [1], [0, 0, 1, 1], [], []>} : vector<10x32xf32>, vector<32x96xf32>, vector<10x96xf32> -> vector<10x96xf32>
    %137 = arith.addf %136, %71 : vector<10x96xf32>
    %138 = vector.extract_strided_slice %135 {offsets = [0, 0], sizes = [10, 64], strides = [1, 1]} : vector<10x96xf32> to vector<10x64xf32>
    %139 = vector.extract_strided_slice %137 {offsets = [0, 0], sizes = [10, 64], strides = [1, 1]} : vector<10x96xf32> to vector<10x64xf32>
    %140 = arith.addf %138, %139 : vector<10x64xf32>
    %141 = arith.negf %140 : vector<10x64xf32>
    %142 = math.exp %141 : vector<10x64xf32>
    %cst_58 = arith.constant 1.000000e+00 : f32
    %143 = vector.broadcast %cst_58 : f32 to vector<10x64xf32>
    %144 = arith.addf %143, %142 : vector<10x64xf32>
    %145 = arith.divf %143, %144 : vector<10x64xf32>
    %146 = vector.extract_strided_slice %145 {offsets = [0, 0], sizes = [10, 32], strides = [1, 1]} : vector<10x64xf32> to vector<10x32xf32>
    %147 = vector.extract_strided_slice %145 {offsets = [0, 32], sizes = [10, 32], strides = [1, 1]} : vector<10x64xf32> to vector<10x32xf32>
    %148 = vector.extract_strided_slice %135 {offsets = [0, 64], sizes = [10, 32], strides = [1, 1]} : vector<10x96xf32> to vector<10x32xf32>
    %149 = vector.extract_strided_slice %137 {offsets = [0, 64], sizes = [10, 32], strides = [1, 1]} : vector<10x96xf32> to vector<10x32xf32>
    %150 = arith.mulf %146, %149 : vector<10x32xf32>
    %151 = arith.addf %148, %150 : vector<10x32xf32>
    %152 = math.tanh %151 : vector<10x32xf32>
    %cst_59 = arith.constant 1.000000e+00 : f32
    %153 = vector.broadcast %cst_59 : f32 to vector<10x32xf32>
    %154 = arith.subf %153, %147 : vector<10x32xf32>
    %155 = arith.mulf %154, %152 : vector<10x32xf32>
    %156 = arith.mulf %147, %114 : vector<10x32xf32>
    %157 = arith.addf %155, %156 : vector<10x32xf32>
    %158 = arith.truncf %157 : vector<10x32xf32> to vector<10x32xbf16>
    %cst_60 = arith.constant dense<0.000000e+00> : vector<20x32xf32>
    %159 = tpu.matmul %34, %158, %cst_60 {dimension_numbers = #tpu.dot_dimension_numbers<[1], [0], [0], [1], [0, 0, 1, 1], [], []>} : vector<20x10xbf16>, vector<10x32xbf16>, vector<20x32xf32> -> vector<20x32xf32>
    %160 = arith.truncf %159 : vector<20x32xf32> to vector<20x32xbf16>
    %c0_61 = arith.constant 0 : index
    %c0_62 = arith.constant 0 : index
    %161 = vector.load %arg3[%c0_61, %c0_62] : memref<64x1024xbf16, #tpu.memory_space<vmem>>, vector<32x1024xbf16>
    %cst_63 = arith.constant dense<0.000000e+00> : vector<20x1024xf32>
    %162 = tpu.matmul %160, %161, %cst_63 {dimension_numbers = #tpu.dot_dimension_numbers<[1], [0], [0], [1], [0, 0, 1, 1], [], []>} : vector<20x32xbf16>, vector<32x1024xbf16>, vector<20x1024xf32> -> vector<20x1024xf32>
    %c0_64 = arith.constant 0 : index
    %c0_65 = arith.constant 0 : index
    %163 = vector.load %arg7[%c0_64, %c0_65] : memref<20x1024xf32, #tpu.memory_space<vmem>>, vector<20x1024xf32>
    %164 = arith.mulf %162, %163 : vector<20x1024xf32>
    %165 = arith.truncf %164 : vector<20x1024xf32> to vector<20x1024xbf16>
    %c32_66 = arith.constant 32 : index
    %c0_67 = arith.constant 0 : index
    %166 = vector.load %arg3[%c32_66, %c0_67] : memref<64x1024xbf16, #tpu.memory_space<vmem>>, vector<32x1024xbf16>
    %cst_68 = arith.constant dense<0.000000e+00> : vector<20x32xf32>
    %167 = tpu.matmul %165, %166, %cst_68 {dimension_numbers = #tpu.dot_dimension_numbers<[1], [1], [0], [0], [0, 0, 1, 0], [], []>} : vector<20x1024xbf16>, vector<32x1024xbf16>, vector<20x32xf32> -> vector<20x32xf32>
    %168 = arith.truncf %167 : vector<20x32xf32> to vector<20x32xbf16>
    %cst_69 = arith.constant dense<0.000000e+00> : vector<10x32xf32>
    %169 = tpu.matmul %52, %168, %cst_69 {dimension_numbers = #tpu.dot_dimension_numbers<[1], [0], [0], [1], [0, 0, 1, 1], [], []>} : vector<10x20xbf16>, vector<20x32xbf16>, vector<10x32xf32> -> vector<10x32xf32>
    %170 = vector.broadcast %51 : vector<10x1xf32> to vector<10x32xf32>
    %171 = arith.mulf %169, %170 : vector<10x32xf32>
    %cst_70 = arith.constant dense<0.000000e+00> : vector<10x32xf32>
    %172 = tpu.matmul %157, %58, %cst_70 {dimension_numbers = #tpu.dot_dimension_numbers<[1], [0], [0], [1], [0, 0, 1, 1], [], []>} : vector<10x32xf32>, vector<32x32xf32>, vector<10x32xf32> -> vector<10x32xf32>
    %173 = arith.addf %171, %172 : vector<10x32xf32>
    %174 = arith.addf %173, %61 : vector<10x32xf32>
    %cst_71 = arith.constant 0.000000e+00 : f32
    %175 = vector.broadcast %cst_71 : f32 to vector<10x32xf32>
    %176 = arith.maximumf %174, %175 : vector<10x32xf32>
    %cst_72 = arith.constant dense<0.000000e+00> : vector<10x96xf32>
    %177 = tpu.matmul %176, %63, %cst_72 {dimension_numbers = #tpu.dot_dimension_numbers<[1], [0], [0], [1], [0, 0, 1, 1], [], []>} : vector<10x32xf32>, vector<32x96xf32>, vector<10x96xf32> -> vector<10x96xf32>
    %178 = arith.addf %177, %69 : vector<10x96xf32>
    %cst_73 = arith.constant dense<0.000000e+00> : vector<10x96xf32>
    %179 = tpu.matmul %157, %66, %cst_73 {dimension_numbers = #tpu.dot_dimension_numbers<[1], [0], [0], [1], [0, 0, 1, 1], [], []>} : vector<10x32xf32>, vector<32x96xf32>, vector<10x96xf32> -> vector<10x96xf32>
    %180 = arith.addf %179, %71 : vector<10x96xf32>
    %181 = vector.extract_strided_slice %178 {offsets = [0, 0], sizes = [10, 64], strides = [1, 1]} : vector<10x96xf32> to vector<10x64xf32>
    %182 = vector.extract_strided_slice %180 {offsets = [0, 0], sizes = [10, 64], strides = [1, 1]} : vector<10x96xf32> to vector<10x64xf32>
    %183 = arith.addf %181, %182 : vector<10x64xf32>
    %184 = arith.negf %183 : vector<10x64xf32>
    %185 = math.exp %184 : vector<10x64xf32>
    %cst_74 = arith.constant 1.000000e+00 : f32
    %186 = vector.broadcast %cst_74 : f32 to vector<10x64xf32>
    %187 = arith.addf %186, %185 : vector<10x64xf32>
    %188 = arith.divf %186, %187 : vector<10x64xf32>
    %189 = vector.extract_strided_slice %188 {offsets = [0, 0], sizes = [10, 32], strides = [1, 1]} : vector<10x64xf32> to vector<10x32xf32>
    %190 = vector.extract_strided_slice %188 {offsets = [0, 32], sizes = [10, 32], strides = [1, 1]} : vector<10x64xf32> to vector<10x32xf32>
    %191 = vector.extract_strided_slice %178 {offsets = [0, 64], sizes = [10, 32], strides = [1, 1]} : vector<10x96xf32> to vector<10x32xf32>
    %192 = vector.extract_strided_slice %180 {offsets = [0, 64], sizes = [10, 32], strides = [1, 1]} : vector<10x96xf32> to vector<10x32xf32>
    %193 = arith.mulf %189, %192 : vector<10x32xf32>
    %194 = arith.addf %191, %193 : vector<10x32xf32>
    %195 = math.tanh %194 : vector<10x32xf32>
    %cst_75 = arith.constant 1.000000e+00 : f32
    %196 = vector.broadcast %cst_75 : f32 to vector<10x32xf32>
    %197 = arith.subf %196, %190 : vector<10x32xf32>
    %198 = arith.mulf %197, %195 : vector<10x32xf32>
    %199 = arith.mulf %190, %157 : vector<10x32xf32>
    %200 = arith.addf %198, %199 : vector<10x32xf32>
    %c136 = arith.constant 136 : index
    %c0_76 = arith.constant 0 : index
    %201 = vector.load %arg5[%c136, %c0_76] : memref<320x128xf32, #tpu.memory_space<vmem>>, vector<104x128xf32>
    %202 = vector.extract_strided_slice %201 {offsets = [0, 0], sizes = [96, 128], strides = [1, 1]} : vector<104x128xf32> to vector<96x128xf32>
    %203 = vector.extract_strided_slice %201 {offsets = [96, 0], sizes = [1, 128], strides = [1, 1]} : vector<104x128xf32> to vector<1x128xf32>
    %204 = vector.shape_cast %203 : vector<1x128xf32> to vector<1x128xf32>
    %205 = vector.broadcast %204 : vector<1x128xf32> to vector<2x128xf32>
    %cst_77 = arith.constant 0.000000e+00 : f32
    %206 = vector.broadcast %cst_77 : f32 to vector<2x32xf32>
    %cst_78 = arith.constant 0.000000e+00 : f32
    %207 = vector.broadcast %cst_78 : f32 to vector<2x32xf32>
    %cst_79 = arith.constant 0.000000e+00 : f32
    %208 = vector.broadcast %cst_79 : f32 to vector<2x32xf32>
    %cst_80 = arith.constant 0.000000e+00 : f32
    %209 = vector.broadcast %cst_80 : f32 to vector<2x32xf32>
    %210 = tpu.concatenate %206, %207, %208 in 1 : vector<2x32xf32>, vector<2x32xf32>, vector<2x32xf32> -> vector<2x96xf32>
    %cst_81 = arith.constant dense<0.000000e+00> : vector<2x128xf32>
    %211 = tpu.matmul %210, %202, %cst_81 {dimension_numbers = #tpu.dot_dimension_numbers<[1], [0], [0], [1], [0, 0, 1, 1], [], []>} : vector<2x96xf32>, vector<96x128xf32>, vector<2x128xf32> -> vector<2x128xf32>
    %212 = arith.addf %211, %205 : vector<2x128xf32>
    %213 = vector.extract_strided_slice %212 {offsets = [0, 0], sizes = [2, 96], strides = [1, 1]} : vector<2x128xf32> to vector<2x96xf32>
    %214 = arith.negf %213 : vector<2x96xf32>
    %215 = math.exp %214 : vector<2x96xf32>
    %cst_82 = arith.constant 1.000000e+00 : f32
    %216 = vector.broadcast %cst_82 : f32 to vector<2x96xf32>
    %217 = arith.addf %216, %215 : vector<2x96xf32>
    %218 = arith.divf %216, %217 : vector<2x96xf32>
    %219 = vector.extract_strided_slice %212 {offsets = [0, 96], sizes = [2, 32], strides = [1, 1]} : vector<2x128xf32> to vector<2x32xf32>
    %220 = math.tanh %219 : vector<2x32xf32>
    %221 = vector.extract_strided_slice %218 {offsets = [0, 0], sizes = [2, 32], strides = [1, 1]} : vector<2x96xf32> to vector<2x32xf32>
    %222 = vector.extract_strided_slice %218 {offsets = [0, 32], sizes = [2, 32], strides = [1, 1]} : vector<2x96xf32> to vector<2x32xf32>
    %223 = vector.extract_strided_slice %218 {offsets = [0, 64], sizes = [2, 32], strides = [1, 1]} : vector<2x96xf32> to vector<2x32xf32>
    %224 = arith.mulf %222, %209 : vector<2x32xf32>
    %225 = arith.mulf %221, %220 : vector<2x32xf32>
    %226 = arith.addf %224, %225 : vector<2x32xf32>
    %227 = math.tanh %226 : vector<2x32xf32>
    %228 = arith.mulf %223, %227 : vector<2x32xf32>
    %cst_83 = arith.constant dense<0.000000e+00> : vector<2x10xf32>
    %229 = tpu.matmul %228, %200, %cst_83 {dimension_numbers = #tpu.dot_dimension_numbers<[1], [1], [0], [0], [0, 0, 1, 0], [], []>} : vector<2x32xf32>, vector<10x32xf32>, vector<2x10xf32> -> vector<2x10xf32>
    %cst_84 = arith.constant -1.000000e+30 : f32
    %230 = vector.broadcast %cst_84 : f32 to vector<2x10xf32>
    %231 = arith.select %56, %229, %230 : vector<2x10xi1>, vector<2x10xf32>
    %cst_85 = arith.constant dense<0xFF800000> : vector<2xf32>
    %232 = vector.multi_reduction <maximumf>, %231, %cst_85 [1] : vector<2x10xf32> to vector<2xf32>
    %233 = vector.shape_cast %232 : vector<2xf32> to vector<2x1xf32>
    %234 = vector.broadcast %233 : vector<2x1xf32> to vector<2x10xf32>
    %235 = arith.subf %229, %234 : vector<2x10xf32>
    %236 = math.exp %235 : vector<2x10xf32>
    %cst_86 = arith.constant 0.000000e+00 : f32
    %237 = vector.broadcast %cst_86 : f32 to vector<2x10xf32>
    %238 = arith.select %56, %236, %237 : vector<2x10xi1>, vector<2x10xf32>
    %cst_87 = arith.constant dense<0.000000e+00> : vector<2xf32>
    %239 = vector.multi_reduction <add>, %238, %cst_87 [1] : vector<2x10xf32> to vector<2xf32>
    %240 = vector.shape_cast %239 : vector<2xf32> to vector<2x1xf32>
    %cst_88 = arith.constant 1.000000e-30 : f32
    %241 = vector.broadcast %cst_88 : f32 to vector<2x1xf32>
    %242 = arith.maximumf %240, %241 : vector<2x1xf32>
    %243 = tpu.reciprocal %242 {approx = true} : vector<2x1xf32> -> vector<2x1xf32>
    %244 = vector.broadcast %243 : vector<2x1xf32> to vector<2x10xf32>
    %245 = arith.mulf %238, %244 : vector<2x10xf32>
    %cst_89 = arith.constant dense<0.000000e+00> : vector<2x32xf32>
    %246 = tpu.matmul %245, %200, %cst_89 {dimension_numbers = #tpu.dot_dimension_numbers<[1], [0], [0], [1], [0, 0, 1, 1], [], []>} : vector<2x10xf32>, vector<10x32xf32>, vector<2x32xf32> -> vector<2x32xf32>
    %247 = tpu.concatenate %228, %246, %228 in 1 : vector<2x32xf32>, vector<2x32xf32>, vector<2x32xf32> -> vector<2x96xf32>
    %cst_90 = arith.constant dense<0.000000e+00> : vector<2x128xf32>
    %248 = tpu.matmul %247, %202, %cst_90 {dimension_numbers = #tpu.dot_dimension_numbers<[1], [0], [0], [1], [0, 0, 1, 1], [], []>} : vector<2x96xf32>, vector<96x128xf32>, vector<2x128xf32> -> vector<2x128xf32>
    %249 = arith.addf %248, %205 : vector<2x128xf32>
    %250 = vector.extract_strided_slice %249 {offsets = [0, 0], sizes = [2, 96], strides = [1, 1]} : vector<2x128xf32> to vector<2x96xf32>
    %251 = arith.negf %250 : vector<2x96xf32>
    %252 = math.exp %251 : vector<2x96xf32>
    %cst_91 = arith.constant 1.000000e+00 : f32
    %253 = vector.broadcast %cst_91 : f32 to vector<2x96xf32>
    %254 = arith.addf %253, %252 : vector<2x96xf32>
    %255 = arith.divf %253, %254 : vector<2x96xf32>
    %256 = vector.extract_strided_slice %249 {offsets = [0, 96], sizes = [2, 32], strides = [1, 1]} : vector<2x128xf32> to vector<2x32xf32>
    %257 = math.tanh %256 : vector<2x32xf32>
    %258 = vector.extract_strided_slice %255 {offsets = [0, 0], sizes = [2, 32], strides = [1, 1]} : vector<2x96xf32> to vector<2x32xf32>
    %259 = vector.extract_strided_slice %255 {offsets = [0, 32], sizes = [2, 32], strides = [1, 1]} : vector<2x96xf32> to vector<2x32xf32>
    %260 = vector.extract_strided_slice %255 {offsets = [0, 64], sizes = [2, 32], strides = [1, 1]} : vector<2x96xf32> to vector<2x32xf32>
    %261 = arith.mulf %259, %226 : vector<2x32xf32>
    %262 = arith.mulf %258, %257 : vector<2x32xf32>
    %263 = arith.addf %261, %262 : vector<2x32xf32>
    %264 = math.tanh %263 : vector<2x32xf32>
    %265 = arith.mulf %260, %264 : vector<2x32xf32>
    %cst_92 = arith.constant dense<0.000000e+00> : vector<2x10xf32>
    %266 = tpu.matmul %265, %200, %cst_92 {dimension_numbers = #tpu.dot_dimension_numbers<[1], [1], [0], [0], [0, 0, 1, 0], [], []>} : vector<2x32xf32>, vector<10x32xf32>, vector<2x10xf32> -> vector<2x10xf32>
    %cst_93 = arith.constant -1.000000e+30 : f32
    %267 = vector.broadcast %cst_93 : f32 to vector<2x10xf32>
    %268 = arith.select %56, %266, %267 : vector<2x10xi1>, vector<2x10xf32>
    %cst_94 = arith.constant dense<0xFF800000> : vector<2xf32>
    %269 = vector.multi_reduction <maximumf>, %268, %cst_94 [1] : vector<2x10xf32> to vector<2xf32>
    %270 = vector.shape_cast %269 : vector<2xf32> to vector<2x1xf32>
    %271 = vector.broadcast %270 : vector<2x1xf32> to vector<2x10xf32>
    %272 = arith.subf %266, %271 : vector<2x10xf32>
    %273 = math.exp %272 : vector<2x10xf32>
    %cst_95 = arith.constant 0.000000e+00 : f32
    %274 = vector.broadcast %cst_95 : f32 to vector<2x10xf32>
    %275 = arith.select %56, %273, %274 : vector<2x10xi1>, vector<2x10xf32>
    %cst_96 = arith.constant dense<0.000000e+00> : vector<2xf32>
    %276 = vector.multi_reduction <add>, %275, %cst_96 [1] : vector<2x10xf32> to vector<2xf32>
    %277 = vector.shape_cast %276 : vector<2xf32> to vector<2x1xf32>
    %cst_97 = arith.constant 1.000000e-30 : f32
    %278 = vector.broadcast %cst_97 : f32 to vector<2x1xf32>
    %279 = arith.maximumf %277, %278 : vector<2x1xf32>
    %280 = tpu.reciprocal %279 {approx = true} : vector<2x1xf32> -> vector<2x1xf32>
    %281 = vector.broadcast %280 : vector<2x1xf32> to vector<2x10xf32>
    %282 = arith.mulf %275, %281 : vector<2x10xf32>
    %cst_98 = arith.constant dense<0.000000e+00> : vector<2x32xf32>
    %283 = tpu.matmul %282, %200, %cst_98 {dimension_numbers = #tpu.dot_dimension_numbers<[1], [0], [0], [1], [0, 0, 1, 1], [], []>} : vector<2x10xf32>, vector<10x32xf32>, vector<2x32xf32> -> vector<2x32xf32>
    %284 = tpu.concatenate %265, %283, %265 in 1 : vector<2x32xf32>, vector<2x32xf32>, vector<2x32xf32> -> vector<2x96xf32>
    %cst_99 = arith.constant dense<0.000000e+00> : vector<2x128xf32>
    %285 = tpu.matmul %284, %202, %cst_99 {dimension_numbers = #tpu.dot_dimension_numbers<[1], [0], [0], [1], [0, 0, 1, 1], [], []>} : vector<2x96xf32>, vector<96x128xf32>, vector<2x128xf32> -> vector<2x128xf32>
    %286 = arith.addf %285, %205 : vector<2x128xf32>
    %287 = vector.extract_strided_slice %286 {offsets = [0, 0], sizes = [2, 96], strides = [1, 1]} : vector<2x128xf32> to vector<2x96xf32>
    %288 = arith.negf %287 : vector<2x96xf32>
    %289 = math.exp %288 : vector<2x96xf32>
    %cst_100 = arith.constant 1.000000e+00 : f32
    %290 = vector.broadcast %cst_100 : f32 to vector<2x96xf32>
    %291 = arith.addf %290, %289 : vector<2x96xf32>
    %292 = arith.divf %290, %291 : vector<2x96xf32>
    %293 = vector.extract_strided_slice %286 {offsets = [0, 96], sizes = [2, 32], strides = [1, 1]} : vector<2x128xf32> to vector<2x32xf32>
    %294 = math.tanh %293 : vector<2x32xf32>
    %295 = vector.extract_strided_slice %292 {offsets = [0, 0], sizes = [2, 32], strides = [1, 1]} : vector<2x96xf32> to vector<2x32xf32>
    %296 = vector.extract_strided_slice %292 {offsets = [0, 32], sizes = [2, 32], strides = [1, 1]} : vector<2x96xf32> to vector<2x32xf32>
    %297 = vector.extract_strided_slice %292 {offsets = [0, 64], sizes = [2, 32], strides = [1, 1]} : vector<2x96xf32> to vector<2x32xf32>
    %298 = arith.mulf %296, %263 : vector<2x32xf32>
    %299 = arith.mulf %295, %294 : vector<2x32xf32>
    %300 = arith.addf %298, %299 : vector<2x32xf32>
    %301 = math.tanh %300 : vector<2x32xf32>
    %302 = arith.mulf %297, %301 : vector<2x32xf32>
    %cst_101 = arith.constant dense<0.000000e+00> : vector<2x10xf32>
    %303 = tpu.matmul %302, %200, %cst_101 {dimension_numbers = #tpu.dot_dimension_numbers<[1], [1], [0], [0], [0, 0, 1, 0], [], []>} : vector<2x32xf32>, vector<10x32xf32>, vector<2x10xf32> -> vector<2x10xf32>
    %cst_102 = arith.constant -1.000000e+30 : f32
    %304 = vector.broadcast %cst_102 : f32 to vector<2x10xf32>
    %305 = arith.select %56, %303, %304 : vector<2x10xi1>, vector<2x10xf32>
    %cst_103 = arith.constant dense<0xFF800000> : vector<2xf32>
    %306 = vector.multi_reduction <maximumf>, %305, %cst_103 [1] : vector<2x10xf32> to vector<2xf32>
    %307 = vector.shape_cast %306 : vector<2xf32> to vector<2x1xf32>
    %308 = vector.broadcast %307 : vector<2x1xf32> to vector<2x10xf32>
    %309 = arith.subf %303, %308 : vector<2x10xf32>
    %310 = math.exp %309 : vector<2x10xf32>
    %cst_104 = arith.constant 0.000000e+00 : f32
    %311 = vector.broadcast %cst_104 : f32 to vector<2x10xf32>
    %312 = arith.select %56, %310, %311 : vector<2x10xi1>, vector<2x10xf32>
    %cst_105 = arith.constant dense<0.000000e+00> : vector<2xf32>
    %313 = vector.multi_reduction <add>, %312, %cst_105 [1] : vector<2x10xf32> to vector<2xf32>
    %314 = vector.shape_cast %313 : vector<2xf32> to vector<2x1xf32>
    %cst_106 = arith.constant 1.000000e-30 : f32
    %315 = vector.broadcast %cst_106 : f32 to vector<2x1xf32>
    %316 = arith.maximumf %314, %315 : vector<2x1xf32>
    %317 = tpu.reciprocal %316 {approx = true} : vector<2x1xf32> -> vector<2x1xf32>
    %318 = vector.broadcast %317 : vector<2x1xf32> to vector<2x10xf32>
    %319 = arith.mulf %312, %318 : vector<2x10xf32>
    %cst_107 = arith.constant dense<0.000000e+00> : vector<2x32xf32>
    %320 = tpu.matmul %319, %200, %cst_107 {dimension_numbers = #tpu.dot_dimension_numbers<[1], [0], [0], [1], [0, 0, 1, 1], [], []>} : vector<2x10xf32>, vector<10x32xf32>, vector<2x32xf32> -> vector<2x32xf32>
    %c240 = arith.constant 240 : index
    %c0_108 = arith.constant 0 : index
    %321 = vector.load %arg5[%c240, %c0_108] : memref<320x128xf32, #tpu.memory_space<vmem>>, vector<72x128xf32>
    %322 = vector.extract_strided_slice %321 {offsets = [0, 0], sizes = [64, 32], strides = [1, 1]} : vector<72x128xf32> to vector<64x32xf32>
    %323 = vector.extract_strided_slice %321 {offsets = [64, 0], sizes = [1, 32], strides = [1, 1]} : vector<72x128xf32> to vector<1x32xf32>
    %324 = tpu.concatenate %302, %320 in 1 : vector<2x32xf32>, vector<2x32xf32> -> vector<2x64xf32>
    %cst_109 = arith.constant dense<0.000000e+00> : vector<2x32xf32>
    %325 = tpu.matmul %324, %322, %cst_109 {dimension_numbers = #tpu.dot_dimension_numbers<[1], [0], [0], [1], [0, 0, 1, 1], [], []>} : vector<2x64xf32>, vector<64x32xf32>, vector<2x32xf32> -> vector<2x32xf32>
    %326 = vector.broadcast %323 : vector<1x32xf32> to vector<2x32xf32>
    %327 = arith.addf %325, %326 : vector<2x32xf32>
    %cst_110 = arith.constant 0.000000e+00 : f32
    %328 = vector.broadcast %cst_110 : f32 to vector<2x32xf32>
    %329 = arith.maximumf %327, %328 : vector<2x32xf32>
    %c312 = arith.constant 312 : index
    %c0_111 = arith.constant 0 : index
    %330 = vector.load %arg5[%c312, %c0_111] : memref<320x128xf32, #tpu.memory_space<vmem>>, vector<8x128xf32>
    %331 = vector.extract_strided_slice %330 {offsets = [0, 0], sizes = [1, 32], strides = [1, 1]} : vector<8x128xf32> to vector<1x32xf32>
    %332 = vector.extract_strided_slice %330 {offsets = [1, 0], sizes = [1, 1], strides = [1, 1]} : vector<8x128xf32> to vector<1x1xf32>
    %cst_112 = arith.constant dense<0.000000e+00> : vector<1x2xf32>
    %333 = tpu.matmul %331, %329, %cst_112 {dimension_numbers = #tpu.dot_dimension_numbers<[1], [1], [0], [0], [0, 0, 1, 0], [], []>} : vector<1x32xf32>, vector<2x32xf32>, vector<1x2xf32> -> vector<1x2xf32>
    %334 = vector.broadcast %332 : vector<1x1xf32> to vector<1x2xf32>
    %335 = arith.addf %333, %334 : vector<1x2xf32>
    %c0_113 = arith.constant 0 : index
    %c0_114 = arith.constant 0 : index
    %336 = vector.load %arg6[%c0_113, %c0_114] : memref<1x2xf32, #tpu.memory_space<vmem>>, vector<1x2xf32>
    tpu.vector_store %arg6[%c0_113, %c0_114], %335 {strides = array<i32>} : memref<1x2xf32, #tpu.memory_space<vmem>>, vector<1x2xf32>,
    return
  }
}

</mosaic_0001>

<llo_original>
// kernel: tpu_custom_call.1
$region0: #{tpu_custom_call.1}
  #allocation0 [shape = 'u32[]', space=smem, size = 0x4, offset = 0x4, fixed_abs, tag = 'smem constant byte address 0x4 - core index']
  #allocation1 [shape = 'u32[144,128]{1,0:T(1,128)}', space=vmem, size = 0x12000, scoped, tag = 'internal scratch']
  #allocation2 [shape = 'f32[20,1024]{1,0:T(8,128)}', space=vmem, size = 0x18000, scoped, tag = 'scratch operand']
  %s0 = inlined_call_operand.vmem [shape: f32[10,6], index: 0, kind: input, shape index: {}]
  %s1 = inlined_call_operand.vmem [shape: f32[20,5], index: 1, kind: input, shape index: {}]
  %s2 = inlined_call_operand.vmem [shape: s32[2,20], index: 2, kind: input, shape index: {}]
  %s3 = inlined_call_operand.hbm [shape: bf16[64,1024], index: 3, kind: input, shape index: {}]
  %s4 = inlined_call_operand.hbm [shape: f32[129,1024], index: 4, kind: input, shape index: {}]
  %s5 = inlined_call_operand.hbm [shape: f32[320,128], index: 5, kind: input, shape index: {}]
  %s6 = inlined_call_operand.hbm [shape: f32[1,2], index: 6, kind: output, shape index: {}]
  %s7 = sld [smem:[#allocation0]]
  $region46: #{tpu_custom_call.1} parent=0
    _
  %s9 = ssub.s32 1, %s7
  %s10 = scalar_select 0, %s9, %s7
  $region1: #{tpu_custom_call.1} parent=0
    #allocation3 [shape = 'u8[131072]{0}', space=vmem, size = 0x20000, scoped, tag = 'input window, operand 3, single buffered']
    #allocation4 [shape = 's32[1]{0}', space=sflag, size = 0x4, scoped, tag = 'scoped memory for tpu_custom_call.1']
    #allocation5 [shape = 's32[1]{0}', space=sflag, size = 0x4, scoped, tag = 'scoped memory for tpu_custom_call.1']
    #allocation6 [shape = 'u8[557056]{0}', space=vmem, size = 0x88000, scoped, tag = 'input window, operand 4, single buffered']
    #allocation7 [shape = 's32[1]{0}', space=sflag, size = 0x4, scoped, tag = 'scoped memory for tpu_custom_call.1']
    #allocation8 [shape = 'u8[163840]{0}', space=vmem, size = 0x28000, scoped, tag = 'input window, operand 5, single buffered']
    #allocation9 [shape = 'u8[512]{0}', space=vmem, size = 0x400, scoped, tag = 'output window, operand 0, single buffered']
    %11 = vsyncpa [#allocation4], 0
    %12 = vsyncpa [#allocation7], 0
    %13 = vsyncpa [#allocation5], 0
    // Predicated region
    $region2: #{tpu_custom_call.1} parent=1 // pred_check
      _
    $region3: #{tpu_custom_call.1} parent=1 // pred_check_branch
      %15 = sbr.rel (0) target = $region5
    $region4: #{tpu_custom_call.1} parent=1 // pred_region
      _
    $region5: #{tpu_custom_call.1} parent=1 // pred_fallthru
      _
    // Predicated region
    $region6: #{tpu_custom_call.1} parent=1 // pred_check
      _
    $region7: #{tpu_custom_call.1} parent=1 // pred_check_branch
      %17 = sbr.rel (0) target = $region9
    $region8: #{tpu_custom_call.1} parent=1 // pred_region
      _
    $region9: #{tpu_custom_call.1} parent=1 // pred_fallthru
      _
    // Predicated region
    $region10: #{tpu_custom_call.1} parent=1 // pred_check
      _
    $region11: #{tpu_custom_call.1} parent=1 // pred_check_branch
      %19 = sbr.rel (0) target = $region13
    $region12: #{tpu_custom_call.1} parent=1 // pred_region
      _
    $region13: #{tpu_custom_call.1} parent=1 // pred_fallthru
      _
    // Predicated region
    $region14: #{tpu_custom_call.1} parent=1 // pred_check
      _
    $region15: #{tpu_custom_call.1} parent=1 // pred_check_branch
      %21 = sbr.rel (0) target = $region17
    $region16: #{tpu_custom_call.1} parent=1 // pred_region
      %s23 = ssub.s32 4096, 4096
      %24 = vsyncadd [#allocation4], %s23
      %s25 = sshll.u32 [#allocation3], 4
      %s26 = int_to_ptr.vmem [resolvable:$true] %s25
      %31 = dma.hbm_to_vmem [thread:$0]  %s3, 4096, %s26, [#allocation4], 512, 512, 32
    $region17: #{tpu_custom_call.1} parent=1 // pred_fallthru
      _
    // Predicated region
    $region18: #{tpu_custom_call.1} parent=1 // pred_check
      _
    $region19: #{tpu_custom_call.1} parent=1 // pred_check_branch
      %33 = sbr.rel (0) target = $region21
    $region20: #{tpu_custom_call.1} parent=1 // pred_region
      %s35 = ssub.s32 17408, 17408
      %36 = vsyncadd [#allocation7], %s35
      %s37 = sshll.u32 [#allocation6], 4
      %s38 = int_to_ptr.vmem [resolvable:$true] %s37
      %43 = dma.hbm_to_vmem [thread:$0]  %s4, 17408, %s38, [#allocation7], 1024, 1024, 64
    $region21: #{tpu_custom_call.1} parent=1 // pred_fallthru
      _
    // Predicated region
    $region22: #{tpu_custom_call.1} parent=1 // pred_check
      _
    $region23: #{tpu_custom_call.1} parent=1 // pred_check_branch
      %45 = sbr.rel (0) target = $region25
    $region24: #{tpu_custom_call.1} parent=1 // pred_region
      %s47 = ssub.s32 5120, 5120
      %48 = vsyncadd [#allocation7], %s47
      %s49 = sshll.u32 [#allocation8], 4
      %s50 = int_to_ptr.vmem [resolvable:$true] %s49
      %55 = dma.hbm_to_vmem [thread:$0]  %s5, 5120, %s50, [#allocation7], 128, 128, 8
    $region25: #{tpu_custom_call.1} parent=1 // pred_fallthru
      _
    // Predicated region
    $region26: #{tpu_custom_call.1} parent=1 // pred_check
      _
    $region27: #{tpu_custom_call.1} parent=1 // pred_check_branch
      %57 = sbr.rel (0) target = $region29
    $region28: #{tpu_custom_call.1} parent=1 // pred_region
      %58 = dma.done [#allocation4], 4096
    $region29: #{tpu_custom_call.1} parent=1 // pred_fallthru
      _
    // Predicated region
    $region30: #{tpu_custom_call.1} parent=1 // pred_check
      _
    $region31: #{tpu_custom_call.1} parent=1 // pred_check_branch
      %60 = sbr.rel (0) target = $region33
    $region32: #{tpu_custom_call.1} parent=1 // pred_region
      %61 = dma.done [#allocation7], 17408
    $region33: #{tpu_custom_call.1} parent=1 // pred_fallthru
      _
    // Predicated region
    $region34: #{tpu_custom_call.1} parent=1 // pred_check
      _
    $region35: #{tpu_custom_call.1} parent=1 // pred_check_branch
      %63 = sbr.rel (0) target = $region37
    $region36: #{tpu_custom_call.1} parent=1 // pred_region
      %64 = dma.done [#allocation7], 5120
    $region37: #{tpu_custom_call.1} parent=1 // pred_fallthru
      _
    %v66 = vld [vmem:[#allocation8] sm:$0xff]
    %v67 = vld [vmem:[%s0] sm:$0xff]
    %v68 = vld [vmem:[%s0 + $0x8] sm:$0x3]
    %v69 = vlaneseq
    %v70 = vshrl.u32 %v69, 7
    %v71 = vsub.s32 6, %v70
    %v72 = vrot.slane %v66, %v71
    %vm73 = vcmask 48128
    %v75 = vsel %vm73, %v67, 0
    %v78 = vsel %vm73, %v68, 0
    %vm80 = vcmask 1045504
    %v82 = vsel %vm80, %v66, 0
    %84 = vmatprep.subr.mxu0 0.0
    %85 = vmatpush1.msra.mxu0 0.0
    %86 = vmatprep.subr.mxu0 0.0
    %87 = vmatpush1.msra.mxu0 0.0
    %88 = vmatprep.subr.mxu0 0.0
    %89 = vmatpush1.msra.mxu0 0.0
    %90 = vmatprep.subr.mxu0 0.0
    %91 = vmatpush1.msra.mxu0 0.0
    %92 = vmatprep.subr.mxu0 0.0
    %93 = vmatpush1.msra.mxu0 0.0
    %94 = vmatprep.subr.mxu0 0.0
    %95 = vmatpush1.msra.mxu0 0.0
    %96 = vmatprep.subr.mxu0 0.0
    %97 = vmatpush1.msra.mxu0 0.0
    %98 = vmatprep.subr.mxu0 0.0
    %99 = vmatpush1.msra.mxu0 0.0
    %100 = vmatprep.subr.mxu0 0.0
    %101 = vmatpush1.msra.mxu0 0.0
    %102 = vmatprep.subr.mxu0 0.0
    %103 = vmatpush1.msra.mxu0 0.0
    %104 = vmatprep.subr.mxu0 0.0
    %105 = vmatpush1.msra.mxu0 0.0
    %106 = vmatprep.subr.mxu0 0.0
    %107 = vmatpush1.msra.mxu0 0.0
    %108 = vmatprep.subr.mxu0 0.0
    %109 = vmatpush1.msra.mxu0 0.0
    %110 = vmatprep.subr.mxu0 0.0
    %111 = vmatpush1.msra.mxu0 0.0
    %112 = vmatprep.subr.mxu0 0.0
    %113 = vmatpush1.msra.mxu0 0.0
    %114 = vmatprep.subr.mxu0 0.0
    %115 = vmatpush1.msra.mxu0 %v82
    %116 = vmatprep.subr.mxu0 0.0
    %117 = vmatpush2.msra.mxu0 0.0
    %118 = vmatprep.subr.mxu0 0.0
    %119 = vmatpush2.msra.mxu0 0.0
    %120 = vmatprep.subr.mxu0 0.0
    %121 = vmatpush2.msra.mxu0 0.0
    %122 = vmatprep.subr.mxu0 0.0
    %123 = vmatpush2.msra.mxu0 0.0
    %124 = vmatprep.subr.mxu0 0.0
    %125 = vmatpush2.msra.mxu0 0.0
    %126 = vmatprep.subr.mxu0 0.0
    %127 = vmatpush2.msra.mxu0 0.0
    %128 = vmatprep.subr.mxu0 0.0
    %129 = vmatpush2.msra.mxu0 0.0
    %130 = vmatprep.subr.mxu0 0.0
    %131 = vmatpush2.msra.mxu0 0.0
    %132 = vmatprep.subr.mxu0 0.0
    %133 = vmatpush2.msra.mxu0 0.0
    %134 = vmatprep.subr.mxu0 0.0
    %135 = vmatpush2.msra.mxu0 0.0
    %136 = vmatprep.subr.mxu0 0.0
    %137 = vmatpush2.msra.mxu0 0.0
    %138 = vmatprep.subr.mxu0 0.0
    %139 = vmatpush2.msra.mxu0 0.0
    %140 = vmatprep.subr.mxu0 0.0
    %141 = vmatpush2.msra.mxu0 0.0
    %142 = vmatprep.subr.mxu0 0.0
    %143 = vmatpush2.msra.mxu0 0.0
    %144 = vmatprep.subr.mxu0 0.0
    %145 = vmatpush2.msra.mxu0 0.0
    %146 = vmatprep.subr.mxu0 0.0
    %147 = vmatpush2.msra.mxu0 0.0
    %148 = vmatprep.mubr.f32.mxu0 0.0
    %149 = vmatmul.mubr.f32.gmra.mxu0 %v75
    %v150 = vpop.f32.mrf.mxu0
    %v151 = vadd.f32 %v72, %v150
    %v152 = vpop.f32.mrf.mxu0
    %153 = vmatprep.mubr.f32.mxu0 0.0
    %154 = vmatmul.mubr.f32.gmra.mxu0 %v78
    %v155 = vpop.f32.mrf.mxu0
    %v156 = vadd.f32 %v72, %v155
    %v157 = vpop.f32.mrf.mxu0
    %158 = vdwg.mxu0
    %v159 = vmax.f32 %v151, 0.0
    %v160 = vmax.f32 %v156, 0.0
    %v161 = vld [vmem:[%s1] sm:$0xff]
    %v162 = vld [vmem:[%s1 + $0x8] sm:$0xff]
    %v163 = vld [vmem:[%s1 + $0x10] sm:$0xf]
    %v164 = vcvt.f32.s32.to.zero.pseudo %v161
    %v165 = vcvt.f32.s32.to.zero.pseudo %v162
    %v166 = vcvt.f32.s32.to.zero.pseudo %v163
    %v167 = vld [vmem:[#allocation8 + $0x8] sm:$0xff]
    %v168 = vlaneseq
    %v169 = vshrl.u32 %v168, 7
    %v170 = vsub.s32 4, %v169
    %v171 = vrot.slane %v167, %v170
    %vm172 = vcmask 31744
    %v174 = vsel %vm172, %v161, 0
    %v177 = vsel %vm172, %v162, 0
    %v180 = vsel %vm172, %v163, 0
    %vm182 = vcmask 1043456
    %v184 = vsel %vm182, %v167, 0
    %186 = vmatprep.subr.mxu0 0.0
    %187 = vmatpush1.msra.mxu0 0.0
    %188 = vmatprep.subr.mxu0 0.0
    %189 = vmatpush1.msra.mxu0 0.0
    %190 = vmatprep.subr.mxu0 0.0
    %191 = vmatpush1.msra.mxu0 0.0
    %192 = vmatprep.subr.mxu0 0.0
    %193 = vmatpush1.msra.mxu0 0.0
    %194 = vmatprep.subr.mxu0 0.0
    %195 = vmatpush1.msra.mxu0 0.0
    %196 = vmatprep.subr.mxu0 0.0
    %197 = vmatpush1.msra.mxu0 0.0
    %198 = vmatprep.subr.mxu0 0.0
    %199 = vmatpush1.msra.mxu0 0.0
    %200 = vmatprep.subr.mxu0 0.0
    %201 = vmatpush1.msra.mxu0 0.0
    %202 = vmatprep.subr.mxu0 0.0
    %203 = vmatpush1.msra.mxu0 0.0
    %204 = vmatprep.subr.mxu0 0.0
    %205 = vmatpush1.msra.mxu0 0.0
    %206 = vmatprep.subr.mxu0 0.0
    %207 = vmatpush1.msra.mxu0 0.0
    %208 = vmatprep.subr.mxu0 0.0
    %209 = vmatpush1.msra.mxu0 0.0
    %210 = vmatprep.subr.mxu0 0.0
    %211 = vmatpush1.msra.mxu0 0.0
    %212 = vmatprep.subr.mxu0 0.0
    %213 = vmatpush1.msra.mxu0 0.0
    %214 = vmatprep.subr.mxu0 0.0
    %215 = vmatpush1.msra.mxu0 0.0
    %216 = vmatprep.subr.mxu0 0.0
    %217 = vmatpush1.msra.mxu0 %v184
    %218 = vmatprep.subr.mxu0 0.0
    %219 = vmatpush2.msra.mxu0 0.0
    %220 = vmatprep.subr.mxu0 0.0
    %221 = vmatpush2.msra.mxu0 0.0
    %222 = vmatprep.subr.mxu0 0.0
    %223 = vmatpush2.msra.mxu0 0.0
    %224 = vmatprep.subr.mxu0 0.0
    %225 = vmatpush2.msra.mxu0 0.0
    %226 = vmatprep.subr.mxu0 0.0
    %227 = vmatpush2.msra.mxu0 0.0
    %228 = vmatprep.subr.mxu0 0.0
    %229 = vmatpush2.msra.mxu0 0.0
    %230 = vmatprep.subr.mxu0 0.0
    %231 = vmatpush2.msra.mxu0 0.0
    %232 = vmatprep.subr.mxu0 0.0
    %233 = vmatpush2.msra.mxu0 0.0
    %234 = vmatprep.subr.mxu0 0.0
    %235 = vmatpush2.msra.mxu0 0.0
    %236 = vmatprep.subr.mxu0 0.0
    %237 = vmatpush2.msra.mxu0 0.0
    %238 = vmatprep.subr.mxu0 0.0
    %239 = vmatpush2.msra.mxu0 0.0
    %240 = vmatprep.subr.mxu0 0.0
    %241 = vmatpush2.msra.mxu0 0.0
    %242 = vmatprep.subr.mxu0 0.0
    %243 = vmatpush2.msra.mxu0 0.0
    %244 = vmatprep.subr.mxu0 0.0
    %245 = vmatpush2.msra.mxu0 0.0
    %246 = vmatprep.subr.mxu0 0.0
    %247 = vmatpush2.msra.mxu0 0.0
    %248 = vmatprep.subr.mxu0 0.0
    %249 = vmatpush2.msra.mxu0 0.0
    %250 = vmatprep.mubr.f32.mxu0 0.0
    %251 = vmatmul.mubr.f32.gmra.mxu0 %v174
    %v252 = vpop.f32.mrf.mxu0
    %v253 = vadd.f32 %v171, %v252
    %v254 = vpop.f32.mrf.mxu0
    %255 = vmatprep.mubr.f32.mxu0 0.0
    %256 = vmatmul.mubr.f32.gmra.mxu0 %v177
    %v257 = vpop.f32.mrf.mxu0
    %v258 = vadd.f32 %v171, %v257
    %v259 = vpop.f32.mrf.mxu0
    %260 = vmatprep.mubr.f32.mxu0 0.0
    %261 = vmatmul.mubr.f32.gmra.mxu0 %v180
    %v262 = vpop.f32.mrf.mxu0
    %v263 = vadd.f32 %v171, %v262
    %v264 = vpop.f32.mrf.mxu0
    %265 = vdwg.mxu0
    %v266 = vmax.f32 %v253, 0.0
    %v267 = vmax.f32 %v258, 0.0
    %v268 = vmax.f32 %v263, 0.0
    %v269 = vld [vmem:[#allocation6] sm:$0xff]
    %v270 = vld [vmem:[#allocation6 + $0x8] sm:$0xff]
    %v271 = vld [vmem:[#allocation6 + $0x10] sm:$0xff]
    %v272 = vld [vmem:[#allocation6 + $0x18] sm:$0xff]
    %v273 = vld [vmem:[#allocation6 + $0x20] sm:$0xff]
    %v274 = vld [vmem:[#allocation6 + $0x28] sm:$0xff]
    %v275 = vld [vmem:[#allocation6 + $0x30] sm:$0xff]
    %v276 = vld [vmem:[#allocation6 + $0x38] sm:$0xff]
    %v277 = vld [vmem:[#allocation6 + $0x40] sm:$0xff]
    %v278 = vld [vmem:[#allocation6 + $0x48] sm:$0xff]
    %v279 = vld [vmem:[#allocation6 + $0x50] sm:$0xff]
    %v280 = vld [vmem:[#allocation6 + $0x58] sm:$0xff]
    %v281 = vld [vmem:[#allocation6 + $0x60] sm:$0xff]
    %v282 = vld [vmem:[#allocation6 + $0x68] sm:$0xff]
    %v283 = vld [vmem:[#allocation6 + $0x70] sm:$0xff]
    %v284 = vld [vmem:[#allocation6 + $0x78] sm:$0xff]
    %v285 = vld [vmem:[#allocation6 + $0x80] sm:$0xff]
    %v286 = vld [vmem:[#allocation6 + $0x88] sm:$0xff]
    %v287 = vld [vmem:[#allocation6 + $0x90] sm:$0xff]
    %v288 = vld [vmem:[#allocation6 + $0x98] sm:$0xff]
    %v289 = vld [vmem:[#allocation6 + $0xa0] sm:$0xff]
    %v290 = vld [vmem:[#allocation6 + $0xa8] sm:$0xff]
    %v291 = vld [vmem:[#allocation6 + $0xb0] sm:$0xff]
    %v292 = vld [vmem:[#allocation6 + $0xb8] sm:$0xff]
    %v293 = vld [vmem:[#allocation6 + $0xc0] sm:$0xff]
    %v294 = vld [vmem:[#allocation6 + $0xc8] sm:$0xff]
    %v295 = vld [vmem:[#allocation6 + $0xd0] sm:$0xff]
    %v296 = vld [vmem:[#allocation6 + $0xd8] sm:$0xff]
    %v297 = vld [vmem:[#allocation6 + $0xe0] sm:$0xff]
    %v298 = vld [vmem:[#allocation6 + $0xe8] sm:$0xff]
    %v299 = vld [vmem:[#allocation6 + $0xf0] sm:$0xff]
    %v300 = vld [vmem:[#allocation6 + $0xf8] sm:$0xff]
    %v301 = vld [vmem:[#allocation6 + $0x100] sm:$0xff]
    %v302 = vld [vmem:[#allocation6 + $0x108] sm:$0xff]
    %v303 = vld [vmem:[#allocation6 + $0x110] sm:$0xff]
    %v304 = vld [vmem:[#allocation6 + $0x118] sm:$0xff]
    %v305 = vld [vmem:[#allocation6 + $0x120] sm:$0xff]
    %v306 = vld [vmem:[#allocation6 + $0x128] sm:$0xff]
    %v307 = vld [vmem:[#allocation6 + $0x130] sm:$0xff]
    %v308 = vld [vmem:[#allocation6 + $0x138] sm:$0xff]
    %v309 = vld [vmem:[#allocation6 + $0x140] sm:$0xff]
    %v310 = vld [vmem:[#allocation6 + $0x148] sm:$0xff]
    %v311 = vld [vmem:[#allocation6 + $0x150] sm:$0xff]
    %v312 = vld [vmem:[#allocation6 + $0x158] sm:$0xff]
    %v313 = vld [vmem:[#allocation6 + $0x160] sm:$0xff]
    %v314 = vld [vmem:[#allocation6 + $0x168] sm:$0xff]
    %v315 = vld [vmem:[#allocation6 + $0x170] sm:$0xff]
    %v316 = vld [vmem:[#allocation6 + $0x178] sm:$0xff]
    %v317 = vld [vmem:[#allocation6 + $0x180] sm:$0xff]
    %v318 = vld [vmem:[#allocation6 + $0x188] sm:$0xff]
    %v319 = vld [vmem:[#allocation6 + $0x190] sm:$0xff]
    %v320 = vld [vmem:[#allocation6 + $0x198] sm:$0xff]
    %v321 = vld [vmem:[#allocation6 + $0x1a0] sm:$0xff]
    %v322 = vld [vmem:[#allocation6 + $0x1a8] sm:$0xff]
    %v323 = vld [vmem:[#allocation6 + $0x1b0] sm:$0xff]
    %v324 = vld [vmem:[#allocation6 + $0x1b8] sm:$0xff]
    %v325 = vld [vmem:[#allocation6 + $0x1c0] sm:$0xff]
    %v326 = vld [vmem:[#allocation6 + $0x1c8] sm:$0xff]
    %v327 = vld [vmem:[#allocation6 + $0x1d0] sm:$0xff]
    %v328 = vld [vmem:[#allocation6 + $0x1d8] sm:$0xff]
    %v329 = vld [vmem:[#allocation6 + $0x1e0] sm:$0xff]
    %v330 = vld [vmem:[#allocation6 + $0x1e8] sm:$0xff]
    %v331 = vld [vmem:[#allocation6 + $0x1f0] sm:$0xff]
    %v332 = vld [vmem:[#allocation6 + $0x1f8] sm:$0xff]
    %v333 = vld [vmem:[#allocation6 + $0x200] sm:$0xff]
    %v334 = vld [vmem:[#allocation6 + $0x208] sm:$0xff]
    %v335 = vld [vmem:[#allocation6 + $0x210] sm:$0xff]
    %v336 = vld [vmem:[#allocation6 + $0x218] sm:$0xff]
    %v337 = vld [vmem:[#allocation6 + $0x220] sm:$0xff]
    %v338 = vld [vmem:[#allocation6 + $0x228] sm:$0xff]
    %v339 = vld [vmem:[#allocation6 + $0x230] sm:$0xff]
    %v340 = vld [vmem:[#allocation6 + $0x238] sm:$0xff]
    %v341 = vld [vmem:[#allocation6 + $0x240] sm:$0xff]
    %v342 = vld [vmem:[#allocation6 + $0x248] sm:$0xff]
    %v343 = vld [vmem:[#allocation6 + $0x250] sm:$0xff]
    %v344 = vld [vmem:[#allocation6 + $0x258] sm:$0xff]
    %v345 = vld [vmem:[#allocation6 + $0x260] sm:$0xff]
    %v346 = vld [vmem:[#allocation6 + $0x268] sm:$0xff]
    %v347 = vld [vmem:[#allocation6 + $0x270] sm:$0xff]
    %v348 = vld [vmem:[#allocation6 + $0x278] sm:$0xff]
    %v349 = vld [vmem:[#allocation6 + $0x280] sm:$0xff]
    %v350 = vld [vmem:[#allocation6 + $0x288] sm:$0xff]
    %v351 = vld [vmem:[#allocation6 + $0x290] sm:$0xff]
    %v352 = vld [vmem:[#allocation6 + $0x298] sm:$0xff]
    %v353 = vld [vmem:[#allocation6 + $0x2a0] sm:$0xff]
    %v354 = vld [vmem:[#allocation6 + $0x2a8] sm:$0xff]
    %v355 = vld [vmem:[#allocation6 + $0x2b0] sm:$0xff]
    %v356 = vld [vmem:[#allocation6 + $0x2b8] sm:$0xff]
    %v357 = vld [vmem:[#allocation6 + $0x2c0] sm:$0xff]
    %v358 = vld [vmem:[#allocation6 + $0x2c8] sm:$0xff]
    %v359 = vld [vmem:[#allocation6 + $0x2d0] sm:$0xff]
    %v360 = vld [vmem:[#allocation6 + $0x2d8] sm:$0xff]
    %v361 = vld [vmem:[#allocation6 + $0x2e0] sm:$0xff]
    %v362 = vld [vmem:[#allocation6 + $0x2e8] sm:$0xff]
    %v363 = vld [vmem:[#allocation6 + $0x2f0] sm:$0xff]
    %v364 = vld [vmem:[#allocation6 + $0x2f8] sm:$0xff]
    %v365 = vld [vmem:[#allocation6 + $0x300] sm:$0xff]
    %v366 = vld [vmem:[#allocation6 + $0x308] sm:$0xff]
    %v367 = vld [vmem:[#allocation6 + $0x310] sm:$0xff]
    %v368 = vld [vmem:[#allocation6 + $0x318] sm:$0xff]
    %v369 = vld [vmem:[#allocation6 + $0x320] sm:$0xff]
    %v370 = vld [vmem:[#allocation6 + $0x328] sm:$0xff]
    %v371 = vld [vmem:[#allocation6 + $0x330] sm:$0xff]
    %v372 = vld [vmem:[#allocation6 + $0x338] sm:$0xff]
    %v373 = vld [vmem:[#allocation6 + $0x340] sm:$0xff]
    %v374 = vld [vmem:[#allocation6 + $0x348] sm:$0xff]
    %v375 = vld [vmem:[#allocation6 + $0x350] sm:$0xff]
    %v376 = vld [vmem:[#allocation6 + $0x358] sm:$0xff]
    %v377 = vld [vmem:[#allocation6 + $0x360] sm:$0xff]
    %v378 = vld [vmem:[#allocation6 + $0x368] sm:$0xff]
    %v379 = vld [vmem:[#allocation6 + $0x370] sm:$0xff]
    %v380 = vld [vmem:[#allocation6 + $0x378] sm:$0xff]
    %v381 = vld [vmem:[#allocation6 + $0x380] sm:$0xff]
    %v382 = vld [vmem:[#allocation6 + $0x388] sm:$0xff]
    %v383 = vld [vmem:[#allocation6 + $0x390] sm:$0xff]
    %v384 = vld [vmem:[#allocation6 + $0x398] sm:$0xff]
    %v385 = vld [vmem:[#allocation6 + $0x3a0] sm:$0xff]
    %v386 = vld [vmem:[#allocation6 + $0x3a8] sm:$0xff]
    %v387 = vld [vmem:[#allocation6 + $0x3b0] sm:$0xff]
    %v388 = vld [vmem:[#allocation6 + $0x3b8] sm:$0xff]
    %v389 = vld [vmem:[#allocation6 + $0x3c0] sm:$0xff]
    %v390 = vld [vmem:[#allocation6 + $0x3c8] sm:$0xff]
    %v391 = vld [vmem:[#allocation6 + $0x3d0] sm:$0xff]
    %v392 = vld [vmem:[#allocation6 + $0x3d8] sm:$0xff]
    %v393 = vld [vmem:[#allocation6 + $0x3e0] sm:$0xff]
    %v394 = vld [vmem:[#allocation6 + $0x3e8] sm:$0xff]
    %v395 = vld [vmem:[#allocation6 + $0x3f0] sm:$0xff]
    %v396 = vld [vmem:[#allocation6 + $0x3f8] sm:$0xff]
    %v397 = vld [vmem:[#allocation6 + $0x400] sm:$0x1]
    %v398 = vld [vmem:[#allocation6 + $0x408] sm:$0x1]
    %v399 = vld [vmem:[#allocation6 + $0x410] sm:$0x1]
    %v400 = vld [vmem:[#allocation6 + $0x418] sm:$0x1]
    %v401 = vld [vmem:[#allocation6 + $0x420] sm:$0x1]
    %v402 = vld [vmem:[#allocation6 + $0x428] sm:$0x1]
    %v403 = vld [vmem:[#allocation6 + $0x430] sm:$0x1]
    %v404 = vld [vmem:[#allocation6 + $0x438] sm:$0x1]
    %v405 = vlaneseq
    %v406 = vshrl.u32 %v405, 7
    %v407 = vsub.s32 0, %v406
    %v408 = vrot.slane %v397, %v407
    %v409 = vlaneseq
    %v410 = vshrl.u32 %v409, 7
    %v411 = vsub.s32 0, %v410
    %v412 = vrot.slane %v398, %v411
    %v413 = vlaneseq
    %v414 = vshrl.u32 %v413, 7
    %v415 = vsub.s32 0, %v414
    %v416 = vrot.slane %v399, %v415
    %v417 = vlaneseq
    %v418 = vshrl.u32 %v417, 7
    %v419 = vsub.s32 0, %v418
    %v420 = vrot.slane %v400, %v419
    %v421 = vlaneseq
    %v422 = vshrl.u32 %v421, 7
    %v423 = vsub.s32 0, %v422
    %v424 = vrot.slane %v401, %v423
    %v425 = vlaneseq
    %v426 = vshrl.u32 %v425, 7
    %v427 = vsub.s32 0, %v426
    %v428 = vrot.slane %v402, %v427
    %v429 = vlaneseq
    %v430 = vshrl.u32 %v429, 7
    %v431 = vsub.s32 0, %v430
    %v432 = vrot.slane %v403, %v431
    %v433 = vlaneseq
    %v434 = vshrl.u32 %v433, 7
    %v435 = vsub.s32 0, %v434
    %v436 = vrot.slane %v404, %v435
    %437 = vmatprep.subr.mxu0 %v390
    %438 = vmatpush1.msra.mxu0 %v389
    %439 = vmatprep.subr.mxu0 %v382
    %440 = vmatpush1.msra.mxu0 %v381
    %441 = vmatprep.subr.mxu0 %v374
    %442 = vmatpush1.msra.mxu0 %v373
    %443 = vmatprep.subr.mxu0 %v366
    %444 = vmatpush1.msra.mxu0 %v365
    %445 = vmatprep.subr.mxu0 %v358
    %446 = vmatpush1.msra.mxu0 %v357
    %447 = vmatprep.subr.mxu0 %v350
    %448 = vmatpush1.msra.mxu0 %v349
    %449 = vmatprep.subr.mxu0 %v342
    %450 = vmatpush1.msra.mxu0 %v341
    %451 = vmatprep.subr.mxu0 %v334
    %452 = vmatpush1.msra.mxu0 %v333
    %453 = vmatprep.subr.mxu0 %v326
    %454 = vmatpush1.msra.mxu0 %v325
    %455 = vmatprep.subr.mxu0 %v318
    %456 = vmatpush1.msra.mxu0 %v317
    %457 = vmatprep.subr.mxu0 %v310
    %458 = vmatpush1.msra.mxu0 %v309
    %459 = vmatprep.subr.mxu0 %v302
    %460 = vmatpush1.msra.mxu0 %v301
    %461 = vmatprep.subr.mxu0 %v294
    %462 = vmatpush1.msra.mxu0 %v293
    %463 = vmatprep.subr.mxu0 %v286
    %464 = vmatpush1.msra.mxu0 %v285
    %465 = vmatprep.subr.mxu0 %v278
    %466 = vmatpush1.msra.mxu0 %v277
    %467 = vmatprep.subr.mxu0 %v270
    %468 = vmatpush1.msra.mxu0 %v269
    %469 = vmatprep.subr.mxu0 0.0
    %470 = vmatpush2.msra.mxu0 0.0
    %471 = vmatprep.subr.mxu0 0.0
    %472 = vmatpush2.msra.mxu0 0.0
    %473 = vmatprep.subr.mxu0 0.0
    %474 = vmatpush2.msra.mxu0 0.0
    %475 = vmatprep.subr.mxu0 0.0
    %476 = vmatpush2.msra.mxu0 0.0
    %477 = vmatprep.subr.mxu0 0.0
    %478 = vmatpush2.msra.mxu0 0.0
    %479 = vmatprep.subr.mxu0 0.0
    %480 = vmatpush2.msra.mxu0 0.0
    %481 = vmatprep.subr.mxu0 0.0
    %482 = vmatpush2.msra.mxu0 0.0
    %483 = vmatprep.subr.mxu0 0.0
    %484 = vmatpush2.msra.mxu0 0.0
    %485 = vmatprep.subr.mxu0 0.0
    %486 = vmatpush2.msra.mxu0 0.0
    %487 = vmatprep.subr.mxu0 0.0
    %488 = vmatpush2.msra.mxu0 0.0
    %489 = vmatprep.subr.mxu0 0.0
    %490 = vmatpush2.msra.mxu0 0.0
    %491 = vmatprep.subr.mxu0 0.0
    %492 = vmatpush2.msra.mxu0 0.0
    %493 = vmatprep.subr.mxu0 0.0
    %494 = vmatpush2.msra.mxu0 0.0
    %495 = vmatprep.subr.mxu0 0.0
    %496 = vmatpush2.msra.mxu0 0.0
    %497 = vmatprep.subr.mxu0 0.0
    %498 = vmatpush2.msra.mxu0 0.0
    %499 = vmatprep.subr.mxu0 0.0
    %500 = vmatpush2.msra.mxu0 0.0
    %501 = vmatprep.mubr.f32.mxu0 0.0
    %502 = vmatmul.mubr.f32.gmra.mxu0 %v266
    %v503 = vpop.f32.mrf.mxu0
    %v504 = vadd.f32 %v408, %v503
    %v505 = vpop.f32.mrf.mxu0
    %v506 = vadd.f32 %v412, %v505
    %507 = vmatprep.mubr.f32.mxu0 0.0
    %508 = vmatmul.mubr.f32.gmra.mxu0 %v267
    %v509 = vpop.f32.mrf.mxu0
    %v510 = vadd.f32 %v408, %v509
    %v511 = vpop.f32.mrf.mxu0
    %v512 = vadd.f32 %v412, %v511
    %513 = vmatprep.mubr.f32.mxu0 0.0
    %514 = vmatmul.mubr.f32.gmra.mxu0 %v268
    %v515 = vpop.f32.mrf.mxu0
    %v516 = vadd.f32 %v408, %v515
    %v517 = vpop.f32.mrf.mxu0
    %v518 = vadd.f32 %v412, %v517
    %519 = vdwg.mxu0
    %520 = vmatprep.subr.mxu0 %v392
    %521 = vmatpush1.msra.mxu0 %v391
    %522 = vmatprep.subr.mxu0 %v384
    %523 = vmatpush1.msra.mxu0 %v383
    %524 = vmatprep.subr.mxu0 %v376
    %525 = vmatpush1.msra.mxu0 %v375
    %526 = vmatprep.subr.mxu0 %v368
    %527 = vmatpush1.msra.mxu0 %v367
    %528 = vmatprep.subr.mxu0 %v360
    %529 = vmatpush1.msra.mxu0 %v359
    %530 = vmatprep.subr.mxu0 %v352
    %531 = vmatpush1.msra.mxu0 %v351
    %532 = vmatprep.subr.mxu0 %v344
    %533 = vmatpush1.msra.mxu0 %v343
    %534 = vmatprep.subr.mxu0 %v336
    %535 = vmatpush1.msra.mxu0 %v335
    %536 = vmatprep.subr.mxu0 %v328
    %537 = vmatpush1.msra.mxu0 %v327
    %538 = vmatprep.subr.mxu0 %v320
    %539 = vmatpush1.msra.mxu0 %v319
    %540 = vmatprep.subr.mxu0 %v312
    %541 = vmatpush1.msra.mxu0 %v311
    %542 = vmatprep.subr.mxu0 %v304
    %543 = vmatpush1.msra.mxu0 %v303
    %544 = vmatprep.subr.mxu0 %v296
    %545 = vmatpush1.msra.mxu0 %v295
    %546 = vmatprep.subr.mxu0 %v288
    %547 = vmatpush1.msra.mxu0 %v287
    %548 = vmatprep.subr.mxu0 %v280
    %549 = vmatpush1.msra.mxu0 %v279
    %550 = vmatprep.subr.mxu0 %v272
    %551 = vmatpush1.msra.mxu0 %v271
    %552 = vmatprep.subr.mxu0 0.0
    %553 = vmatpush2.msra.mxu0 0.0
    %554 = vmatprep.subr.mxu0 0.0
    %555 = vmatpush2.msra.mxu0 0.0
    %556 = vmatprep.subr.mxu0 0.0
    %557 = vmatpush2.msra.mxu0 0.0
    %558 = vmatprep.subr.mxu0 0.0
    %559 = vmatpush2.msra.mxu0 0.0
    %560 = vmatprep.subr.mxu0 0.0
    %561 = vmatpush2.msra.mxu0 0.0
    %562 = vmatprep.subr.mxu0 0.0
    %563 = vmatpush2.msra.mxu0 0.0
    %564 = vmatprep.subr.mxu0 0.0
    %565 = vmatpush2.msra.mxu0 0.0
    %566 = vmatprep.subr.mxu0 0.0
    %567 = vmatpush2.msra.mxu0 0.0
    %568 = vmatprep.subr.mxu0 0.0
    %569 = vmatpush2.msra.mxu0 0.0
    %570 = vmatprep.subr.mxu0 0.0
    %571 = vmatpush2.msra.mxu0 0.0
    %572 = vmatprep.subr.mxu0 0.0
    %573 = vmatpush2.msra.mxu0 0.0
    %574 = vmatprep.subr.mxu0 0.0
    %575 = vmatpush2.msra.mxu0 0.0
    %576 = vmatprep.subr.mxu0 0.0
    %577 = vmatpush2.msra.mxu0 0.0
    %578 = vmatprep.subr.mxu0 0.0
    %579 = vmatpush2.msra.mxu0 0.0
    %580 = vmatprep.subr.mxu0 0.0
    %581 = vmatpush2.msra.mxu0 0.0
    %582 = vmatprep.subr.mxu0 0.0
    %583 = vmatpush2.msra.mxu0 0.0
    %584 = vmatprep.mubr.f32.mxu0 0.0
    %585 = vmatmul.mubr.f32.gmra.mxu0 %v266
    %v586 = vpop.f32.mrf.mxu0
    %v587 = vadd.f32 %v416, %v586
    %v588 = vpop.f32.mrf.mxu0
    %v589 = vadd.f32 %v420, %v588
    %590 = vmatprep.mubr.f32.mxu0 0.0
    %591 = vmatmul.mubr.f32.gmra.mxu0 %v267
    %v592 = vpop.f32.mrf.mxu0
    %v593 = vadd.f32 %v416, %v592
    %v594 = vpop.f32.mrf.mxu0
    %v595 = vadd.f32 %v420, %v594
    %596 = vmatprep.mubr.f32.mxu0 0.0
    %597 = vmatmul.mubr.f32.gmra.mxu0 %v268
    %v598 = vpop.f32.mrf.mxu0
    %v599 = vadd.f32 %v416, %v598
    %v600 = vpop.f32.mrf.mxu0
    %v601 = vadd.f32 %v420, %v600
    %602 = vdwg.mxu0
    %603 = vmatprep.subr.mxu0 %v394
    %604 = vmatpush1.msra.mxu0 %v393
    %605 = vmatprep.subr.mxu0 %v386
    %606 = vmatpush1.msra.mxu0 %v385
    %607 = vmatprep.subr.mxu0 %v378
    %608 = vmatpush1.msra.mxu0 %v377
    %609 = vmatprep.subr.mxu0 %v370
    %610 = vmatpush1.msra.mxu0 %v369
    %611 = vmatprep.subr.mxu0 %v362
    %612 = vmatpush1.msra.mxu0 %v361
    %613 = vmatprep.subr.mxu0 %v354
    %614 = vmatpush1.msra.mxu0 %v353
    %615 = vmatprep.subr.mxu0 %v346
    %616 = vmatpush1.msra.mxu0 %v345
    %617 = vmatprep.subr.mxu0 %v338
    %618 = vmatpush1.msra.mxu0 %v337
    %619 = vmatprep.subr.mxu0 %v330
    %620 = vmatpush1.msra.mxu0 %v329
    %621 = vmatprep.subr.mxu0 %v322
    %622 = vmatpush1.msra.mxu0 %v321
    %623 = vmatprep.subr.mxu0 %v314
    %624 = vmatpush1.msra.mxu0 %v313
    %625 = vmatprep.subr.mxu0 %v306
    %626 = vmatpush1.msra.mxu0 %v305
    %627 = vmatprep.subr.mxu0 %v298
    %628 = vmatpush1.msra.mxu0 %v297
    %629 = vmatprep.subr.mxu0 %v290
    %630 = vmatpush1.msra.mxu0 %v289
    %631 = vmatprep.subr.mxu0 %v282
    %632 = vmatpush1.msra.mxu0 %v281
    %633 = vmatprep.subr.mxu0 %v274
    %634 = vmatpush1.msra.mxu0 %v273
    %635 = vmatprep.subr.mxu0 0.0
    %636 = vmatpush2.msra.mxu0 0.0
    %637 = vmatprep.subr.mxu0 0.0
    %638 = vmatpush2.msra.mxu0 0.0
    %639 = vmatprep.subr.mxu0 0.0
    %640 = vmatpush2.msra.mxu0 0.0
    %641 = vmatprep.subr.mxu0 0.0
    %642 = vmatpush2.msra.mxu0 0.0
    %643 = vmatprep.subr.mxu0 0.0
    %644 = vmatpush2.msra.mxu0 0.0
    %645 = vmatprep.subr.mxu0 0.0
    %646 = vmatpush2.msra.mxu0 0.0
    %647 = vmatprep.subr.mxu0 0.0
    %648 = vmatpush2.msra.mxu0 0.0
    %649 = vmatprep.subr.mxu0 0.0
    %650 = vmatpush2.msra.mxu0 0.0
    %651 = vmatprep.subr.mxu0 0.0
    %652 = vmatpush2.msra.mxu0 0.0
    %653 = vmatprep.subr.mxu0 0.0
    %654 = vmatpush2.msra.mxu0 0.0
    %655 = vmatprep.subr.mxu0 0.0
    %656 = vmatpush2.msra.mxu0 0.0
    %657 = vmatprep.subr.mxu0 0.0
    %658 = vmatpush2.msra.mxu0 0.0
    %659 = vmatprep.subr.mxu0 0.0
    %660 = vmatpush2.msra.mxu0 0.0
    %661 = vmatprep.subr.mxu0 0.0
    %662 = vmatpush2.msra.mxu0 0.0
    %663 = vmatprep.subr.mxu0 0.0
    %664 = vmatpush2.msra.mxu0 0.0
    %665 = vmatprep.subr.mxu0 0.0
    %666 = vmatpush2.msra.mxu0 0.0
    %667 = vmatprep.mubr.f32.mxu0 0.0
    %668 = vmatmul.mubr.f32.gmra.mxu0 %v266
    %v669 = vpop.f32.mrf.mxu0
    %v670 = vadd.f32 %v424, %v669
    %v671 = vpop.f32.mrf.mxu0
    %v672 = vadd.f32 %v428, %v671
    %673 = vmatprep.mubr.f32.mxu0 0.0
    %674 = vmatmul.mubr.f32.gmra.mxu0 %v267
    %v675 = vpop.f32.mrf.mxu0
    %v676 = vadd.f32 %v424, %v675
    %v677 = vpop.f32.mrf.mxu0
    %v678 = vadd.f32 %v428, %v677
    %679 = vmatprep.mubr.f32.mxu0 0.0
    %680 = vmatmul.mubr.f32.gmra.mxu0 %v268
    %v681 = vpop.f32.mrf.mxu0
    %v682 = vadd.f32 %v424, %v681
    %v683 = vpop.f32.mrf.mxu0
    %v684 = vadd.f32 %v428, %v683
    %685 = vdwg.mxu0
    %686 = vmatprep.subr.mxu0 %v396
    %687 = vmatpush1.msra.mxu0 %v395
    %688 = vmatprep.subr.mxu0 %v388
    %689 = vmatpush1.msra.mxu0 %v387
    %690 = vmatprep.subr.mxu0 %v380
    %691 = vmatpush1.msra.mxu0 %v379
    %692 = vmatprep.subr.mxu0 %v372
    %693 = vmatpush1.msra.mxu0 %v371
    %694 = vmatprep.subr.mxu0 %v364
    %695 = vmatpush1.msra.mxu0 %v363
    %696 = vmatprep.subr.mxu0 %v356
    %697 = vmatpush1.msra.mxu0 %v355
    %698 = vmatprep.subr.mxu0 %v348
    %699 = vmatpush1.msra.mxu0 %v347
    %700 = vmatprep.subr.mxu0 %v340
    %701 = vmatpush1.msra.mxu0 %v339
    %702 = vmatprep.subr.mxu0 %v332
    %703 = vmatpush1.msra.mxu0 %v331
    %704 = vmatprep.subr.mxu0 %v324
    %705 = vmatpush1.msra.mxu0 %v323
    %706 = vmatprep.subr.mxu0 %v316
    %707 = vmatpush1.msra.mxu0 %v315
    %708 = vmatprep.subr.mxu0 %v308
    %709 = vmatpush1.msra.mxu0 %v307
    %710 = vmatprep.subr.mxu0 %v300
    %711 = vmatpush1.msra.mxu0 %v299
    %712 = vmatprep.subr.mxu0 %v292
    %713 = vmatpush1.msra.mxu0 %v291
    %714 = vmatprep.subr.mxu0 %v284
    %715 = vmatpush1.msra.mxu0 %v283
    %716 = vmatprep.subr.mxu0 %v276
    %717 = vmatpush1.msra.mxu0 %v275
    %718 = vmatprep.subr.mxu0 0.0
    %719 = vmatpush2.msra.mxu0 0.0
    %720 = vmatprep.subr.mxu0 0.0
    %721 = vmatpush2.msra.mxu0 0.0
    %722 = vmatprep.subr.mxu0 0.0
    %723 = vmatpush2.msra.mxu0 0.0
    %724 = vmatprep.subr.mxu0 0.0
    %725 = vmatpush2.msra.mxu0 0.0
    %726 = vmatprep.subr.mxu0 0.0
    %727 = vmatpush2.msra.mxu0 0.0
    %728 = vmatprep.subr.mxu0 0.0
    %729 = vmatpush2.msra.mxu0 0.0
    %730 = vmatprep.subr.mxu0 0.0
    %731 = vmatpush2.msra.mxu0 0.0
    %732 = vmatprep.subr.mxu0 0.0
    %733 = vmatpush2.msra.mxu0 0.0
    %734 = vmatprep.subr.mxu0 0.0
    %735 = vmatpush2.msra.mxu0 0.0
    %736 = vmatprep.subr.mxu0 0.0
    %737 = vmatpush2.msra.mxu0 0.0
    %738 = vmatprep.subr.mxu0 0.0
    %739 = vmatpush2.msra.mxu0 0.0
    %740 = vmatprep.subr.mxu0 0.0
    %741 = vmatpush2.msra.mxu0 0.0
    %742 = vmatprep.subr.mxu0 0.0
    %743 = vmatpush2.msra.mxu0 0.0
    %744 = vmatprep.subr.mxu0 0.0
    %745 = vmatpush2.msra.mxu0 0.0
    %746 = vmatprep.subr.mxu0 0.0
    %747 = vmatpush2.msra.mxu0 0.0
    %748 = vmatprep.subr.mxu0 0.0
    %749 = vmatpush2.msra.mxu0 0.0
    %750 = vmatprep.mubr.f32.mxu0 0.0
    %751 = vmatmul.mubr.f32.gmra.mxu0 %v266
    %v752 = vpop.f32.mrf.mxu0
    %v753 = vadd.f32 %v432, %v752
    %v754 = vpop.f32.mrf.mxu0
    %v755 = vadd.f32 %v436, %v754
    %756 = vmatprep.mubr.f32.mxu0 0.0
    %757 = vmatmul.mubr.f32.gmra.mxu0 %v267
    %v758 = vpop.f32.mrf.mxu0
    %v759 = vadd.f32 %v432, %v758
    %v760 = vpop.f32.mrf.mxu0
    %v761 = vadd.f32 %v436, %v760
    %762 = vmatprep.mubr.f32.mxu0 0.0
    %763 = vmatmul.mubr.f32.gmra.mxu0 %v268
    %v764 = vpop.f32.mrf.mxu0
    %v765 = vadd.f32 %v432, %v764
    %v766 = vpop.f32.mrf.mxu0
    %v767 = vadd.f32 %v436, %v766
    %768 = vdwg.mxu0
    %769 = vst [vmem:[#allocation2] sm:$0xff] %v504
    %770 = vst [vmem:[#allocation2 + $0x8] sm:$0xff] %v506
    %771 = vst [vmem:[#allocation2 + $0x10] sm:$0xff] %v587
    %772 = vst [vmem:[#allocation2 + $0x18] sm:$0xff] %v589
    %773 = vst [vmem:[#allocation2 + $0x20] sm:$0xff] %v670
    %774 = vst [vmem:[#allocation2 + $0x28] sm:$0xff] %v672
    %775 = vst [vmem:[#allocation2 + $0x30] sm:$0xff] %v753
    %776 = vst [vmem:[#allocation2 + $0x38] sm:$0xff] %v755
    %777 = vst [vmem:[#allocation2 + $0x40] sm:$0xff] %v510
    %778 = vst [vmem:[#allocation2 + $0x48] sm:$0xff] %v512
    %779 = vst [vmem:[#allocation2 + $0x50] sm:$0xff] %v593
    %780 = vst [vmem:[#allocation2 + $0x58] sm:$0xff] %v595
    %781 = vst [vmem:[#allocation2 + $0x60] sm:$0xff] %v676
    %782 = vst [vmem:[#allocation2 + $0x68] sm:$0xff] %v678
    %783 = vst [vmem:[#allocation2 + $0x70] sm:$0xff] %v759
    %784 = vst [vmem:[#allocation2 + $0x78] sm:$0xff] %v761
    %785 = vst [vmem:[#allocation2 + $0x80] sm:$0xf] %v516
    %786 = vst [vmem:[#allocation2 + $0x88] sm:$0xf] %v518
    %787 = vst [vmem:[#allocation2 + $0x90] sm:$0xf] %v599
    %788 = vst [vmem:[#allocation2 + $0x98] sm:$0xf] %v601
    %789 = vst [vmem:[#allocation2 + $0xa0] sm:$0xf] %v682
    %790 = vst [vmem:[#allocation2 + $0xa8] sm:$0xf] %v684
    %791 = vst [vmem:[#allocation2 + $0xb0] sm:$0xf] %v765
    %792 = vst [vmem:[#allocation2 + $0xb8] sm:$0xf] %v767
    %v793 = vlaneseq
    %v794 = vand.u32 %v793, 127
    %795 = vset.pattern.permute.xlu0 4
    %796 = vperm.xlu0 %795, %v164
    %v797 = vpop.permute.xlu0 %796
    %798 = vset.pattern.permute.xlu0 4
    %799 = vperm.xlu0 %798, %v165
    %v800 = vpop.permute.xlu0 %799
    %801 = vset.pattern.permute.xlu0 4
    %802 = vperm.xlu0 %801, %v166
    %v803 = vpop.permute.xlu0 %802
    %vm804 = vcmp.eq.s32.totalorder %v797, %v794
    %vm805 = vcmp.eq.s32.totalorder %v800, %v794
    %vm806 = vcmp.eq.s32.totalorder %v803, %v794
    %v807 = vsel %vm804, 1.0, 0.0
    %v808 = vsel %vm805, 1.0, 0.0
    %v809 = vsel %vm806, 1.0, 0.0
    %v810 = vpack.c.bf16 %v808, %v807
    %v811 = vpack.c.bf16 %v809, %v809
    %v812 = vld [vmem:[%s2] sm:$0x1]
    %v813 = vlaneseq
    %v814 = vshrl.u32 %v813, 7
    %v815 = vadd.s32 %v814, 8
    %v816 = vlaneseq
    %v817 = vshrl.u32 %v816, 7
    %v818 = vsub.s32 0, %v817
    %v819 = vrot.slane %v812, %v818
    %vm820 = vcmp.eq.s32.totalorder %v819, %v814
    %vm821 = vcmp.eq.s32.totalorder %v819, %v815
    %v822 = vsel %vm820, 1.0, 0.0
    %v823 = vsel %vm821, 1.0, 0.0
    %vm824 = vcmask 162816
    %v825 = vsel %vm824, %v822, 0.0
    %826 = vadd.xlane.f32.xlu0 %v825
    %v827 = vpop.xlane.xlu0 %826
    %vm828 = vcmask 156672
    %v829 = vsel %vm828, %v823, 0.0
    %830 = vadd.xlane.f32.xlu0 %v829
    %v831 = vpop.xlane.xlu0 %830
    %vm832 = vcmp.gt.f32.partialorder %v827, 0.0
    %vm833 = vcmp.gt.f32.partialorder %v831, 0.0
    %v834 = vmax.f32 %v827, 1.0
    %v835 = vmax.f32 %v831, 1.0
    %v836 = vrcp.pop %v834
    %v837 = vmul.f32 1.0, %v836
    %v838 = vrcp.pop %v835
    %v839 = vmul.f32 1.0, %v838
    %v840 = vsel %vm832, %v837, 0.0
    %v841 = vsel %vm833, %v839, 0.0
    %v842 = vpack.c.bf16 %v823, %v822
    %v843 = vld [vmem:[%s2 + $0x1] sm:$0x1]
    %v844 = vlaneseq
    %v845 = vshrl.u32 %v844, 7
    %v846 = vsub.s32 0, %v845
    %v847 = vrot.slane %v843, %v846
    %vm848 = vcmp.eq.s32.totalorder %v847, %v814
    %v849 = vld [vmem:[#allocation8 + $0x10] sm:$0xff]
    %v850 = vld [vmem:[#allocation8 + $0x18] sm:$0xff]
    %v851 = vld [vmem:[#allocation8 + $0x20] sm:$0xff]
    %v852 = vld [vmem:[#allocation8 + $0x28] sm:$0xff]
    %v853 = vld [vmem:[#allocation8 + $0x30] sm:$0xff]
    %v854 = vlaneseq
    %v855 = vshrl.u32 %v854, 7
    %v856 = vsub.s32 0, %v855
    %v857 = vrot.slane %v853, %v856
    %v858 = vld [vmem:[#allocation8 + $0x38] sm:$0xff]
    %v859 = vld [vmem:[#allocation8 + $0x40] sm:$0xff]
    %v860 = vld [vmem:[#allocation8 + $0x48] sm:$0xff]
    %v861 = vld [vmem:[#allocation8 + $0x50] sm:$0xff]
    %v862 = vld [vmem:[#allocation8 + $0x58] sm:$0xff]
    %v863 = vld [vmem:[#allocation8 + $0x60] sm:$0xff]
    %v864 = vld [vmem:[#allocation8 + $0x68] sm:$0xff]
    %v865 = vld [vmem:[#allocation8 + $0x70] sm:$0xff]
    %v866 = vld [vmem:[#allocation8 + $0x78] sm:$0xff]
    %v867 = vld [vmem:[#allocation8 + $0x80] sm:$0xff]
    %v868 = vlaneseq
    %v869 = vshrl.u32 %v868, 7
    %v870 = vsub.s32 0, %v869
    %v871 = vrot.slane %v862, %v870
    %v872 = vlaneseq
    %v873 = vshrl.u32 %v872, 7
    %v874 = vsub.s32 0, %v873
    %v875 = vrot.slane %v867, %v874
    %v876 = vpack.c.bf16 %v160, %v159
    %vm877 = vcmask 80896
    %v879 = vsel %vm877, %v810, 0
    %v882 = vsel %vm877, %v811, 0
    %vm884 = vcmask 1044480
    %v886 = vsel %vm884, %v876, 0
    %888 = vmatprep.subr.bf16.mxu0 0
    %889 = vmatpush1.bf16.msra.mxu0 0
    %890 = vmatprep.subr.bf16.mxu0 0
    %891 = vmatpush1.bf16.msra.mxu0 0
    %892 = vmatprep.subr.bf16.mxu0 0
    %893 = vmatpush1.bf16.msra.mxu0 0
    %894 = vmatprep.subr.bf16.mxu0 0
    %895 = vmatpush1.bf16.msra.mxu0 0
    %896 = vmatprep.subr.bf16.mxu0 0
    %897 = vmatpush1.bf16.msra.mxu0 0
    %898 = vmatprep.subr.bf16.mxu0 0
    %899 = vmatpush1.bf16.msra.mxu0 0
    %900 = vmatprep.subr.bf16.mxu0 0
    %901 = vmatpush1.bf16.msra.mxu0 0
    %902 = vmatprep.subr.bf16.mxu0 0
    %903 = vmatpush1.bf16.msra.mxu0 %v886
    %904 = vmatprep.subr.bf16.mxu0 0
    %905 = vmatpush2.bf16.msra.mxu0 0
    %906 = vmatprep.subr.bf16.mxu0 0
    %907 = vmatpush2.bf16.msra.mxu0 0
    %908 = vmatprep.subr.bf16.mxu0 0
    %909 = vmatpush2.bf16.msra.mxu0 0
    %910 = vmatprep.subr.bf16.mxu0 0
    %911 = vmatpush2.bf16.msra.mxu0 0
    %912 = vmatprep.subr.bf16.mxu0 0
    %913 = vmatpush2.bf16.msra.mxu0 0
    %914 = vmatprep.subr.bf16.mxu0 0
    %915 = vmatpush2.bf16.msra.mxu0 0
    %916 = vmatprep.subr.bf16.mxu0 0
    %917 = vmatpush2.bf16.msra.mxu0 0
    %918 = vmatprep.subr.bf16.mxu0 0
    %919 = vmatpush2.bf16.msra.mxu0 0
    %920 = vmatprep.mubr.bf16.mxu0 0
    %921 = vmatmul.mubr.bf16.gmra.mxu0 %v879
    %v922 = vpop.f32.mrf.mxu0
    %v923 = vadd.f32 0.0, %v922
    %v924 = vpop.f32.mrf.mxu0
    %v925 = vpop.f32.mrf.mxu0
    %v926 = vadd.f32 0.0, %v925
    %v927 = vpop.f32.mrf.mxu0
    %928 = vmatprep.mubr.bf16.mxu0 0
    %929 = vmatmul.mubr.bf16.gmra.mxu0 %v882
    %v930 = vpop.f32.mrf.mxu0
    %v931 = vadd.f32 0.0, %v930
    %v932 = vpop.f32.mrf.mxu0
    %v933 = vpop.f32.mrf.mxu0
    %v934 = vpop.f32.mrf.mxu0
    %935 = vdwg.mxu0
    %v936 = vpack.c.bf16 %v926, %v923
    %v937 = vpack.c.bf16 %v931, %v931
    %v938 = vld [vmem:[#allocation3] sm:$0xff]
    %v939 = vld [vmem:[#allocation3 + $0x8] sm:$0xff]
    %v940 = vld [vmem:[#allocation3 + $0x10] sm:$0xff]
    %v941 = vld [vmem:[#allocation3 + $0x18] sm:$0xff]
    %v942 = vld [vmem:[#allocation3 + $0x20] sm:$0xff]
    %v943 = vld [vmem:[#allocation3 + $0x28] sm:$0xff]
    %v944 = vld [vmem:[#allocation3 + $0x30] sm:$0xff]
    %v945 = vld [vmem:[#allocation3 + $0x38] sm:$0xff]
    %v946 = vld [vmem:[#allocation3 + $0x40] sm:$0xff]
    %v947 = vld [vmem:[#allocation3 + $0x48] sm:$0xff]
    %v948 = vld [vmem:[#allocation3 + $0x50] sm:$0xff]
    %v949 = vld [vmem:[#allocation3 + $0x58] sm:$0xff]
    %v950 = vld [vmem:[#allocation3 + $0x60] sm:$0xff]
    %v951 = vld [vmem:[#allocation3 + $0x68] sm:$0xff]
    %v952 = vld [vmem:[#allocation3 + $0x70] sm:$0xff]
    %v953 = vld [vmem:[#allocation3 + $0x78] sm:$0xff]
    %v970 = vunpack.c.l.b16 %v938
    %v971 = vunpack.c.h.b16 %v938
    %v972 = vunpack.c.l.b16 %v939
    %v973 = vunpack.c.h.b16 %v939
    %v974 = vunpack.c.l.b16 %v940
    %v975 = vunpack.c.h.b16 %v940
    %v976 = vunpack.c.l.b16 %v941
    %v977 = vunpack.c.h.b16 %v941
    %v978 = vunpack.c.l.b16 %v942
    %v979 = vunpack.c.h.b16 %v942
    %v980 = vunpack.c.l.b16 %v943
    %v981 = vunpack.c.h.b16 %v943
    %v982 = vunpack.c.l.b16 %v944
    %v983 = vunpack.c.h.b16 %v944
    %v984 = vunpack.c.l.b16 %v945
    %v985 = vunpack.c.h.b16 %v945
    %v986 = vunpack.c.l.b16 %v946
    %v987 = vunpack.c.h.b16 %v946
    %v988 = vunpack.c.l.b16 %v947
    %v989 = vunpack.c.h.b16 %v947
    %v990 = vunpack.c.l.b16 %v948
    %v991 = vunpack.c.h.b16 %v948
    %v992 = vunpack.c.l.b16 %v949
    %v993 = vunpack.c.h.b16 %v949
    %v994 = vunpack.c.l.b16 %v950
    %v995 = vunpack.c.h.b16 %v950
    %v996 = vunpack.c.l.b16 %v951
    %v997 = vunpack.c.h.b16 %v951
    %v998 = vunpack.c.l.b16 %v952
    %v999 = vunpack.c.h.b16 %v952
    %v1000 = vunpack.c.l.b16 %v953
    %v1001 = vunpack.c.h.b16 %v953
    %v1002 = vpack.c.b16 %v978, %v970
    %v1003 = vpack.c.b16 %v979, %v971
    %v1004 = vpack.c.b16 %v980, %v972
    %v1005 = vpack.c.b16 %v981, %v973
    %v1006 = vpack.c.b16 %v982, %v974
    %v1007 = vpack.c.b16 %v983, %v975
    %v1008 = vpack.c.b16 %v984, %v976
    %v1009 = vpack.c.b16 %v985, %v977
    %v1010 = vpack.c.b16 %v994, %v986
    %v1011 = vpack.c.b16 %v995, %v987
    %v1012 = vpack.c.b16 %v996, %v988
    %v1013 = vpack.c.b16 %v997, %v989
    %v1014 = vpack.c.b16 %v998, %v990
    %v1015 = vpack.c.b16 %v999, %v991
    %v1016 = vpack.c.b16 %v1000, %v992
    %v1017 = vpack.c.b16 %v1001, %v993
    %vm1034 = vcmask 261120
    %v1036 = vsel %vm1034, %v936, 0
    %v1039 = vsel %vm1034, %v937, 0
    %1041 = vmatprep.subr.bf16.mxu0 0
    %1042 = vmatpush1.bf16.msra.mxu0 0
    %1043 = vmatprep.subr.bf16.mxu0 0
    %1044 = vmatpush1.bf16.msra.mxu0 0
    %1045 = vmatprep.subr.bf16.mxu0 0
    %1046 = vmatpush1.bf16.msra.mxu0 0
    %1047 = vmatprep.subr.bf16.mxu0 0
    %1048 = vmatpush1.bf16.msra.mxu0 0
    %1049 = vmatprep.subr.bf16.mxu0 0
    %1050 = vmatpush1.bf16.msra.mxu0 0
    %1051 = vmatprep.subr.bf16.mxu0 0
    %1052 = vmatpush1.bf16.msra.mxu0 0
    %1053 = vmatprep.subr.bf16.mxu0 %v1011
    %1054 = vmatpush1.bf16.msra.mxu0 %v1010
    %1055 = vmatprep.subr.bf16.mxu0 %v1003
    %1056 = vmatpush1.bf16.msra.mxu0 %v1002
    %1057 = vmatprep.subr.bf16.mxu0 0
    %1058 = vmatpush2.bf16.msra.mxu0 0
    %1059 = vmatprep.subr.bf16.mxu0 0
    %1060 = vmatpush2.bf16.msra.mxu0 0
    %1061 = vmatprep.subr.bf16.mxu0 0
    %1062 = vmatpush2.bf16.msra.mxu0 0
    %1063 = vmatprep.subr.bf16.mxu0 0
    %1064 = vmatpush2.bf16.msra.mxu0 0
    %1065 = vmatprep.subr.bf16.mxu0 0
    %1066 = vmatpush2.bf16.msra.mxu0 0
    %1067 = vmatprep.subr.bf16.mxu0 0
    %1068 = vmatpush2.bf16.msra.mxu0 0
    %1069 = vmatprep.subr.bf16.mxu0 0
    %1070 = vmatpush2.bf16.msra.mxu0 0
    %1071 = vmatprep.subr.bf16.mxu0 0
    %1072 = vmatpush2.bf16.msra.mxu0 0
    %1073 = vmatprep.mubr.bf16.mxu0 0
    %1074 = vmatmul.mubr.bf16.gmra.mxu0 %v1036
    %v1075 = vpop.f32.mrf.mxu0
    %v1076 = vadd.f32 0.0, %v1075
    %v1077 = vpop.f32.mrf.mxu0
    %v1078 = vadd.f32 0.0, %v1077
    %v1079 = vpop.f32.mrf.mxu0
    %v1080 = vadd.f32 0.0, %v1079
    %v1081 = vpop.f32.mrf.mxu0
    %v1082 = vadd.f32 0.0, %v1081
    %1083 = vmatprep.mubr.bf16.mxu0 0
    %1084 = vmatmul.mubr.bf16.gmra.mxu0 %v1039
    %v1085 = vpop.f32.mrf.mxu0
    %v1086 = vadd.f32 0.0, %v1085
    %v1087 = vpop.f32.mrf.mxu0
    %v1088 = vadd.f32 0.0, %v1087
    %v1089 = vpop.f32.mrf.mxu0
    %v1090 = vpop.f32.mrf.mxu0
    %1091 = vdwg.mxu0
    %1092 = vmatprep.subr.bf16.mxu0 0
    %1093 = vmatpush1.bf16.msra.mxu0 0
    %1094 = vmatprep.subr.bf16.mxu0 0
    %1095 = vmatpush1.bf16.msra.mxu0 0
    %1096 = vmatprep.subr.bf16.mxu0 0
    %1097 = vmatpush1.bf16.msra.mxu0 0
    %1098 = vmatprep.subr.bf16.mxu0 0
    %1099 = vmatpush1.bf16.msra.mxu0 0
    %1100 = vmatprep.subr.bf16.mxu0 0
    %1101 = vmatpush1.bf16.msra.mxu0 0
    %1102 = vmatprep.subr.bf16.mxu0 0
    %1103 = vmatpush1.bf16.msra.mxu0 0
    %1104 = vmatprep.subr.bf16.mxu0 %v1013
    %1105 = vmatpush1.bf16.msra.mxu0 %v1012
    %1106 = vmatprep.subr.bf16.mxu0 %v1005
    %1107 = vmatpush1.bf16.msra.mxu0 %v1004
    %1108 = vmatprep.subr.bf16.mxu0 0
    %1109 = vmatpush2.bf16.msra.mxu0 0
    %1110 = vmatprep.subr.bf16.mxu0 0
    %1111 = vmatpush2.bf16.msra.mxu0 0
    %1112 = vmatprep.subr.bf16.mxu0 0
    %1113 = vmatpush2.bf16.msra.mxu0 0
    %1114 = vmatprep.subr.bf16.mxu0 0
    %1115 = vmatpush2.bf16.msra.mxu0 0
    %1116 = vmatprep.subr.bf16.mxu0 0
    %1117 = vmatpush2.bf16.msra.mxu0 0
    %1118 = vmatprep.subr.bf16.mxu0 0
    %1119 = vmatpush2.bf16.msra.mxu0 0
    %1120 = vmatprep.subr.bf16.mxu0 0
    %1121 = vmatpush2.bf16.msra.mxu0 0
    %1122 = vmatprep.subr.bf16.mxu0 0
    %1123 = vmatpush2.bf16.msra.mxu0 0
    %1124 = vmatprep.mubr.bf16.mxu0 0
    %1125 = vmatmul.mubr.bf16.gmra.mxu0 %v1036
    %v1126 = vpop.f32.mrf.mxu0
    %v1127 = vadd.f32 0.0, %v1126
    %v1128 = vpop.f32.mrf.mxu0
    %v1129 = vadd.f32 0.0, %v1128
    %v1130 = vpop.f32.mrf.mxu0
    %v1131 = vadd.f32 0.0, %v1130
    %v1132 = vpop.f32.mrf.mxu0
    %v1133 = vadd.f32 0.0, %v1132
    %1134 = vmatprep.mubr.bf16.mxu0 0
    %1135 = vmatmul.mubr.bf16.gmra.mxu0 %v1039
    %v1136 = vpop.f32.mrf.mxu0
    %v1137 = vadd.f32 0.0, %v1136
    %v1138 = vpop.f32.mrf.mxu0
    %v1139 = vadd.f32 0.0, %v1138
    %v1140 = vpop.f32.mrf.mxu0
    %v1141 = vpop.f32.mrf.mxu0
    %1142 = vdwg.mxu0
    %1143 = vmatprep.subr.bf16.mxu0 0
    %1144 = vmatpush1.bf16.msra.mxu0 0
    %1145 = vmatprep.subr.bf16.mxu0 0
    %1146 = vmatpush1.bf16.msra.mxu0 0
    %1147 = vmatprep.subr.bf16.mxu0 0
    %1148 = vmatpush1.bf16.msra.mxu0 0
    %1149 = vmatprep.subr.bf16.mxu0 0
    %1150 = vmatpush1.bf16.msra.mxu0 0
    %1151 = vmatprep.subr.bf16.mxu0 0
    %1152 = vmatpush1.bf16.msra.mxu0 0
    %1153 = vmatprep.subr.bf16.mxu0 0
    %1154 = vmatpush1.bf16.msra.mxu0 0
    %1155 = vmatprep.subr.bf16.mxu0 %v1015
    %1156 = vmatpush1.bf16.msra.mxu0 %v1014
    %1157 = vmatprep.subr.bf16.mxu0 %v1007
    %1158 = vmatpush1.bf16.msra.mxu0 %v1006
    %1159 = vmatprep.subr.bf16.mxu0 0
    %1160 = vmatpush2.bf16.msra.mxu0 0
    %1161 = vmatprep.subr.bf16.mxu0 0
    %1162 = vmatpush2.bf16.msra.mxu0 0
    %1163 = vmatprep.subr.bf16.mxu0 0
    %1164 = vmatpush2.bf16.msra.mxu0 0
    %1165 = vmatprep.subr.bf16.mxu0 0
    %1166 = vmatpush2.bf16.msra.mxu0 0
    %1167 = vmatprep.subr.bf16.mxu0 0
    %1168 = vmatpush2.bf16.msra.mxu0 0
    %1169 = vmatprep.subr.bf16.mxu0 0
    %1170 = vmatpush2.bf16.msra.mxu0 0
    %1171 = vmatprep.subr.bf16.mxu0 0
    %1172 = vmatpush2.bf16.msra.mxu0 0
    %1173 = vmatprep.subr.bf16.mxu0 0
    %1174 = vmatpush2.bf16.msra.mxu0 0
    %1175 = vmatprep.mubr.bf16.mxu0 0
    %1176 = vmatmul.mubr.bf16.gmra.mxu0 %v1036
    %v1177 = vpop.f32.mrf.mxu0
    %v1178 = vadd.f32 0.0, %v1177
    %v1179 = vpop.f32.mrf.mxu0
    %v1180 = vadd.f32 0.0, %v1179
    %v1181 = vpop.f32.mrf.mxu0
    %v1182 = vadd.f32 0.0, %v1181
    %v1183 = vpop.f32.mrf.mxu0
    %v1184 = vadd.f32 0.0, %v1183
    %1185 = vmatprep.mubr.bf16.mxu0 0
    %1186 = vmatmul.mubr.bf16.gmra.mxu0 %v1039
    %v1187 = vpop.f32.mrf.mxu0
    %v1188 = vadd.f32 0.0, %v1187
    %v1189 = vpop.f32.mrf.mxu0
    %v1190 = vadd.f32 0.0, %v1189
    %v1191 = vpop.f32.mrf.mxu0
    %v1192 = vpop.f32.mrf.mxu0
    %1193 = vdwg.mxu0
    %1194 = vmatprep.subr.bf16.mxu0 0
    %1195 = vmatpush1.bf16.msra.mxu0 0
    %1196 = vmatprep.subr.bf16.mxu0 0
    %1197 = vmatpush1.bf16.msra.mxu0 0
    %1198 = vmatprep.subr.bf16.mxu0 0
    %1199 = vmatpush1.bf16.msra.mxu0 0
    %1200 = vmatprep.subr.bf16.mxu0 0
    %1201 = vmatpush1.bf16.msra.mxu0 0
    %1202 = vmatprep.subr.bf16.mxu0 0
    %1203 = vmatpush1.bf16.msra.mxu0 0
    %1204 = vmatprep.subr.bf16.mxu0 0
    %1205 = vmatpush1.bf16.msra.mxu0 0
    %1206 = vmatprep.subr.bf16.mxu0 %v1017
    %1207 = vmatpush1.bf16.msra.mxu0 %v1016
    %1208 = vmatprep.subr.bf16.mxu0 %v1009
    %1209 = vmatpush1.bf16.msra.mxu0 %v1008
    %1210 = vmatprep.subr.bf16.mxu0 0
    %1211 = vmatpush2.bf16.msra.mxu0 0
    %1212 = vmatprep.subr.bf16.mxu0 0
    %1213 = vmatpush2.bf16.msra.mxu0 0
    %1214 = vmatprep.subr.bf16.mxu0 0
    %1215 = vmatpush2.bf16.msra.mxu0 0
    %1216 = vmatprep.subr.bf16.mxu0 0
    %1217 = vmatpush2.bf16.msra.mxu0 0
    %1218 = vmatprep.subr.bf16.mxu0 0
    %1219 = vmatpush2.bf16.msra.mxu0 0
    %1220 = vmatprep.subr.bf16.mxu0 0
    %1221 = vmatpush2.bf16.msra.mxu0 0
    %1222 = vmatprep.subr.bf16.mxu0 0
    %1223 = vmatpush2.bf16.msra.mxu0 0
    %1224 = vmatprep.subr.bf16.mxu0 0
    %1225 = vmatpush2.bf16.msra.mxu0 0
    %1226 = vmatprep.mubr.bf16.mxu0 0
    %1227 = vmatmul.mubr.bf16.gmra.mxu0 %v1036
    %v1228 = vpop.f32.mrf.mxu0
    %v1229 = vadd.f32 0.0, %v1228
    %v1230 = vpop.f32.mrf.mxu0
    %v1231 = vadd.f32 0.0, %v1230
    %v1232 = vpop.f32.mrf.mxu0
    %v1233 = vadd.f32 0.0, %v1232
    %v1234 = vpop.f32.mrf.mxu0
    %v1235 = vadd.f32 0.0, %v1234
    %1236 = vmatprep.mubr.bf16.mxu0 0
    %1237 = vmatmul.mubr.bf16.gmra.mxu0 %v1039
    %v1238 = vpop.f32.mrf.mxu0
    %v1239 = vadd.f32 0.0, %v1238
    %v1240 = vpop.f32.mrf.mxu0
    %v1241 = vadd.f32 0.0, %v1240
    %v1242 = vpop.f32.mrf.mxu0
    %v1243 = vpop.f32.mrf.mxu0
    %1244 = vdwg.mxu0
    %v1245 = vld [vmem:[#allocation2] sm:$0xff]
    %v1246 = vld [vmem:[#allocation2 + $0x8] sm:$0xff]
    %v1247 = vld [vmem:[#allocation2 + $0x10] sm:$0xff]
    %v1248 = vld [vmem:[#allocation2 + $0x18] sm:$0xff]
    %v1249 = vld [vmem:[#allocation2 + $0x20] sm:$0xff]
    %v1250 = vld [vmem:[#allocation2 + $0x28] sm:$0xff]
    %v1251 = vld [vmem:[#allocation2 + $0x30] sm:$0xff]
    %v1252 = vld [vmem:[#allocation2 + $0x38] sm:$0xff]
    %v1253 = vld [vmem:[#allocation2 + $0x40] sm:$0xff]
    %v1254 = vld [vmem:[#allocation2 + $0x48] sm:$0xff]
    %v1255 = vld [vmem:[#allocation2 + $0x50] sm:$0xff]
    %v1256 = vld [vmem:[#allocation2 + $0x58] sm:$0xff]
    %v1257 = vld [vmem:[#allocation2 + $0x60] sm:$0xff]
    %v1258 = vld [vmem:[#allocation2 + $0x68] sm:$0xff]
    %v1259 = vld [vmem:[#allocation2 + $0x70] sm:$0xff]
    %v1260 = vld [vmem:[#allocation2 + $0x78] sm:$0xff]
    %v1261 = vld [vmem:[#allocation2 + $0x80] sm:$0xf]
    %v1262 = vld [vmem:[#allocation2 + $0x88] sm:$0xf]
    %v1263 = vld [vmem:[#allocation2 + $0x90] sm:$0xf]
    %v1264 = vld [vmem:[#allocation2 + $0x98] sm:$0xf]
    %v1265 = vld [vmem:[#allocation2 + $0xa0] sm:$0xf]
    %v1266 = vld [vmem:[#allocation2 + $0xa8] sm:$0xf]
    %v1267 = vld [vmem:[#allocation2 + $0xb0] sm:$0xf]
    %v1268 = vld [vmem:[#allocation2 + $0xb8] sm:$0xf]
    %v1269 = vmul.f32 %v1076, %v1245
    %v1270 = vmul.f32 %v1078, %v1246
    %v1271 = vmul.f32 %v1127, %v1247
    %v1272 = vmul.f32 %v1129, %v1248
    %v1273 = vmul.f32 %v1178, %v1249
    %v1274 = vmul.f32 %v1180, %v1250
    %v1275 = vmul.f32 %v1229, %v1251
    %v1276 = vmul.f32 %v1231, %v1252
    %v1277 = vmul.f32 %v1080, %v1253
    %v1278 = vmul.f32 %v1082, %v1254
    %v1279 = vmul.f32 %v1131, %v1255
    %v1280 = vmul.f32 %v1133, %v1256
    %v1281 = vmul.f32 %v1182, %v1257
    %v1282 = vmul.f32 %v1184, %v1258
    %v1283 = vmul.f32 %v1233, %v1259
    %v1284 = vmul.f32 %v1235, %v1260
    %v1285 = vmul.f32 %v1086, %v1261
    %v1286 = vmul.f32 %v1088, %v1262
    %v1287 = vmul.f32 %v1137, %v1263
    %v1288 = vmul.f32 %v1139, %v1264
    %v1289 = vmul.f32 %v1188, %v1265
    %v1290 = vmul.f32 %v1190, %v1266
    %v1291 = vmul.f32 %v1239, %v1267
    %v1292 = vmul.f32 %v1241, %v1268
    %v1293 = vpack.c.bf16 %v1277, %v1269
    %v1294 = vpack.c.bf16 %v1278, %v1270
    %v1295 = vpack.c.bf16 %v1279, %v1271
    %v1296 = vpack.c.bf16 %v1280, %v1272
    %v1297 = vpack.c.bf16 %v1281, %v1273
    %v1298 = vpack.c.bf16 %v1282, %v1274
    %v1299 = vpack.c.bf16 %v1283, %v1275
    %v1300 = vpack.c.bf16 %v1284, %v1276
    %v1301 = vpack.c.bf16 %v1285, %v1285
    %v1302 = vpack.c.bf16 %v1286, %v1286
    %v1303 = vpack.c.bf16 %v1287, %v1287
    %v1304 = vpack.c.bf16 %v1288, %v1288
    %v1305 = vpack.c.bf16 %v1289, %v1289
    %v1306 = vpack.c.bf16 %v1290, %v1290
    %v1307 = vpack.c.bf16 %v1291, %v1291
    %v1308 = vpack.c.bf16 %v1292, %v1292
    %v1309 = vld [vmem:[#allocation3 + $0x80] sm:$0xff]
    %v1310 = vld [vmem:[#allocation3 + $0x88] sm:$0xff]
    %v1311 = vld [vmem:[#allocation3 + $0x90] sm:$0xff]
    %v1312 = vld [vmem:[#allocation3 + $0x98] sm:$0xff]
    %v1313 = vld [vmem:[#allocation3 + $0xa0] sm:$0xff]
    %v1314 = vld [vmem:[#allocation3 + $0xa8] sm:$0xff]
    %v1315 = vld [vmem:[#allocation3 + $0xb0] sm:$0xff]
    %v1316 = vld [vmem:[#allocation3 + $0xb8] sm:$0xff]
    %v1317 = vld [vmem:[#allocation3 + $0xc0] sm:$0xff]
    %v1318 = vld [vmem:[#allocation3 + $0xc8] sm:$0xff]
    %v1319 = vld [vmem:[#allocation3 + $0xd0] sm:$0xff]
    %v1320 = vld [vmem:[#allocation3 + $0xd8] sm:$0xff]
    %v1321 = vld [vmem:[#allocation3 + $0xe0] sm:$0xff]
    %v1322 = vld [vmem:[#allocation3 + $0xe8] sm:$0xff]
    %v1323 = vld [vmem:[#allocation3 + $0xf0] sm:$0xff]
    %v1324 = vld [vmem:[#allocation3 + $0xf8] sm:$0xff]
    %v1341 = vunpack.c.l.b16 %v1309
    %v1342 = vunpack.c.h.b16 %v1309
    %v1343 = vunpack.c.l.b16 %v1310
    %v1344 = vunpack.c.h.b16 %v1310
    %v1345 = vunpack.c.l.b16 %v1311
    %v1346 = vunpack.c.h.b16 %v1311
    %v1347 = vunpack.c.l.b16 %v1312
    %v1348 = vunpack.c.h.b16 %v1312
    %v1349 = vunpack.c.l.b16 %v1313
    %v1350 = vunpack.c.h.b16 %v1313
    %v1351 = vunpack.c.l.b16 %v1314
    %v1352 = vunpack.c.h.b16 %v1314
    %v1353 = vunpack.c.l.b16 %v1315
    %v1354 = vunpack.c.h.b16 %v1315
    %v1355 = vunpack.c.l.b16 %v1316
    %v1356 = vunpack.c.h.b16 %v1316
    %v1357 = vunpack.c.l.b16 %v1317
    %v1358 = vunpack.c.h.b16 %v1317
    %v1359 = vunpack.c.l.b16 %v1318
    %v1360 = vunpack.c.h.b16 %v1318
    %v1361 = vunpack.c.l.b16 %v1319
    %v1362 = vunpack.c.h.b16 %v1319
    %v1363 = vunpack.c.l.b16 %v1320
    %v1364 = vunpack.c.h.b16 %v1320
    %v1365 = vunpack.c.l.b16 %v1321
    %v1366 = vunpack.c.h.b16 %v1321
    %v1367 = vunpack.c.l.b16 %v1322
    %v1368 = vunpack.c.h.b16 %v1322
    %v1369 = vunpack.c.l.b16 %v1323
    %v1370 = vunpack.c.h.b16 %v1323
    %v1371 = vunpack.c.l.b16 %v1324
    %v1372 = vunpack.c.h.b16 %v1324
    %v1373 = vpack.c.b16 %v1349, %v1341
    %v1374 = vpack.c.b16 %v1350, %v1342
    %v1375 = vpack.c.b16 %v1351, %v1343
    %v1376 = vpack.c.b16 %v1352, %v1344
    %v1377 = vpack.c.b16 %v1353, %v1345
    %v1378 = vpack.c.b16 %v1354, %v1346
    %v1379 = vpack.c.b16 %v1355, %v1347
    %v1380 = vpack.c.b16 %v1356, %v1348
    %v1381 = vpack.c.b16 %v1365, %v1357
    %v1382 = vpack.c.b16 %v1366, %v1358
    %v1383 = vpack.c.b16 %v1367, %v1359
    %v1384 = vpack.c.b16 %v1368, %v1360
    %v1385 = vpack.c.b16 %v1369, %v1361
    %v1386 = vpack.c.b16 %v1370, %v1362
    %v1387 = vpack.c.b16 %v1371, %v1363
    %v1388 = vpack.c.b16 %v1372, %v1364
    %1405 = vmatprep.subr.bf16.mxu0 0
    %1406 = vmatpush1.bf16.xpose.msra.mxu0 0
    %1407 = vmatprep.subr.bf16.mxu0 0
    %1408 = vmatpush1.bf16.xpose.msra.mxu0 0
    %1409 = vmatprep.subr.bf16.mxu0 0
    %1410 = vmatpush1.bf16.xpose.msra.mxu0 0
    %1411 = vmatprep.subr.bf16.mxu0 0
    %1412 = vmatpush1.bf16.xpose.msra.mxu0 0
    %1413 = vmatprep.subr.bf16.mxu0 0
    %1414 = vmatpush1.bf16.xpose.msra.mxu0 0
    %1415 = vmatprep.subr.bf16.mxu0 0
    %1416 = vmatpush1.bf16.xpose.msra.mxu0 0
    %1417 = vmatprep.subr.bf16.mxu0 %v1382
    %1418 = vmatpush1.bf16.xpose.msra.mxu0 %v1381
    %1419 = vmatprep.subr.bf16.mxu0 %v1374
    %1420 = vmatpush1.bf16.xpose.msra.mxu0 %v1373
    %1421 = vmatprep.subr.bf16.mxu0 0
    %1422 = vmatpush2.bf16.xpose.msra.mxu0 0
    %1423 = vmatprep.subr.bf16.mxu0 0
    %1424 = vmatpush2.bf16.xpose.msra.mxu0 0
    %1425 = vmatprep.subr.bf16.mxu0 0
    %1426 = vmatpush2.bf16.xpose.msra.mxu0 0
    %1427 = vmatprep.subr.bf16.mxu0 0
    %1428 = vmatpush2.bf16.xpose.msra.mxu0 0
    %1429 = vmatprep.subr.bf16.mxu0 0
    %1430 = vmatpush2.bf16.xpose.msra.mxu0 0
    %1431 = vmatprep.subr.bf16.mxu0 0
    %1432 = vmatpush2.bf16.xpose.msra.mxu0 0
    %1433 = vmatprep.subr.bf16.mxu0 0
    %1434 = vmatpush2.bf16.xpose.msra.mxu0 0
    %1435 = vmatprep.subr.bf16.mxu0 0
    %1436 = vmatpush2.bf16.xpose.msra.mxu0 0
    %1437 = vmatprep.mubr.bf16.mxu0 %v1294
    %1438 = vmatmul.mubr.bf16.gmra.mxu0 %v1293
    %v1439 = vpop.f32.mrf.mxu0
    %v1440 = vadd.f32 0.0, %v1439
    %v1441 = vpop.f32.mrf.mxu0
    %v1442 = vpop.f32.mrf.mxu0
    %v1443 = vadd.f32 0.0, %v1442
    %v1444 = vpop.f32.mrf.mxu0
    %1445 = vmatprep.mubr.bf16.mxu0 %v1302
    %1446 = vmatmul.mubr.bf16.gmra.mxu0 %v1301
    %v1447 = vpop.f32.mrf.mxu0
    %v1448 = vadd.f32 0.0, %v1447
    %v1449 = vpop.f32.mrf.mxu0
    %v1450 = vpop.f32.mrf.mxu0
    %v1451 = vpop.f32.mrf.mxu0
    %1452 = vdwg.mxu0
    %1453 = vmatprep.subr.bf16.mxu0 0
    %1454 = vmatpush1.bf16.xpose.msra.mxu0 0
    %1455 = vmatprep.subr.bf16.mxu0 0
    %1456 = vmatpush1.bf16.xpose.msra.mxu0 0
    %1457 = vmatprep.subr.bf16.mxu0 0
    %1458 = vmatpush1.bf16.xpose.msra.mxu0 0
    %1459 = vmatprep.subr.bf16.mxu0 0
    %1460 = vmatpush1.bf16.xpose.msra.mxu0 0
    %1461 = vmatprep.subr.bf16.mxu0 0
    %1462 = vmatpush1.bf16.xpose.msra.mxu0 0
    %1463 = vmatprep.subr.bf16.mxu0 0
    %1464 = vmatpush1.bf16.xpose.msra.mxu0 0
    %1465 = vmatprep.subr.bf16.mxu0 %v1384
    %1466 = vmatpush1.bf16.xpose.msra.mxu0 %v1383
    %1467 = vmatprep.subr.bf16.mxu0 %v1376
    %1468 = vmatpush1.bf16.xpose.msra.mxu0 %v1375
    %1469 = vmatprep.subr.bf16.mxu0 0
    %1470 = vmatpush2.bf16.xpose.msra.mxu0 0
    %1471 = vmatprep.subr.bf16.mxu0 0
    %1472 = vmatpush2.bf16.xpose.msra.mxu0 0
    %1473 = vmatprep.subr.bf16.mxu0 0
    %1474 = vmatpush2.bf16.xpose.msra.mxu0 0
    %1475 = vmatprep.subr.bf16.mxu0 0
    %1476 = vmatpush2.bf16.xpose.msra.mxu0 0
    %1477 = vmatprep.subr.bf16.mxu0 0
    %1478 = vmatpush2.bf16.xpose.msra.mxu0 0
    %1479 = vmatprep.subr.bf16.mxu0 0
    %1480 = vmatpush2.bf16.xpose.msra.mxu0 0
    %1481 = vmatprep.subr.bf16.mxu0 0
    %1482 = vmatpush2.bf16.xpose.msra.mxu0 0
    %1483 = vmatprep.subr.bf16.mxu0 0
    %1484 = vmatpush2.bf16.xpose.msra.mxu0 0
    %1485 = vmatprep.mubr.bf16.mxu0 %v1296
    %1486 = vmatmul.mubr.bf16.gmra.mxu0 %v1295
    %v1487 = vpop.f32.mrf.mxu0
    %v1488 = vadd.f32 %v1440, %v1487
    %v1489 = vpop.f32.mrf.mxu0
    %v1490 = vpop.f32.mrf.mxu0
    %v1491 = vadd.f32 %v1443, %v1490
    %v1492 = vpop.f32.mrf.mxu0
    %1493 = vmatprep.mubr.bf16.mxu0 %v1304
    %1494 = vmatmul.mubr.bf16.gmra.mxu0 %v1303
    %v1495 = vpop.f32.mrf.mxu0
    %v1496 = vadd.f32 %v1448, %v1495
    %v1497 = vpop.f32.mrf.mxu0
    %v1498 = vpop.f32.mrf.mxu0
    %v1499 = vpop.f32.mrf.mxu0
    %1500 = vdwg.mxu0
    %1501 = vmatprep.subr.bf16.mxu0 0
    %1502 = vmatpush1.bf16.xpose.msra.mxu0 0
    %1503 = vmatprep.subr.bf16.mxu0 0
    %1504 = vmatpush1.bf16.xpose.msra.mxu0 0
    %1505 = vmatprep.subr.bf16.mxu0 0
    %1506 = vmatpush1.bf16.xpose.msra.mxu0 0
    %1507 = vmatprep.subr.bf16.mxu0 0
    %1508 = vmatpush1.bf16.xpose.msra.mxu0 0
    %1509 = vmatprep.subr.bf16.mxu0 0
    %1510 = vmatpush1.bf16.xpose.msra.mxu0 0
    %1511 = vmatprep.subr.bf16.mxu0 0
    %1512 = vmatpush1.bf16.xpose.msra.mxu0 0
    %1513 = vmatprep.subr.bf16.mxu0 %v1386
    %1514 = vmatpush1.bf16.xpose.msra.mxu0 %v1385
    %1515 = vmatprep.subr.bf16.mxu0 %v1378
    %1516 = vmatpush1.bf16.xpose.msra.mxu0 %v1377
    %1517 = vmatprep.subr.bf16.mxu0 0
    %1518 = vmatpush2.bf16.xpose.msra.mxu0 0
    %1519 = vmatprep.subr.bf16.mxu0 0
    %1520 = vmatpush2.bf16.xpose.msra.mxu0 0
    %1521 = vmatprep.subr.bf16.mxu0 0
    %1522 = vmatpush2.bf16.xpose.msra.mxu0 0
    %1523 = vmatprep.subr.bf16.mxu0 0
    %1524 = vmatpush2.bf16.xpose.msra.mxu0 0
    %1525 = vmatprep.subr.bf16.mxu0 0
    %1526 = vmatpush2.bf16.xpose.msra.mxu0 0
    %1527 = vmatprep.subr.bf16.mxu0 0
    %1528 = vmatpush2.bf16.xpose.msra.mxu0 0
    %1529 = vmatprep.subr.bf16.mxu0 0
    %1530 = vmatpush2.bf16.xpose.msra.mxu0 0
    %1531 = vmatprep.subr.bf16.mxu0 0
    %1532 = vmatpush2.bf16.xpose.msra.mxu0 0
    %1533 = vmatprep.mubr.bf16.mxu0 %v1298
    %1534 = vmatmul.mubr.bf16.gmra.mxu0 %v1297
    %v1535 = vpop.f32.mrf.mxu0
    %v1536 = vadd.f32 %v1488, %v1535
    %v1537 = vpop.f32.mrf.mxu0
    %v1538 = vpop.f32.mrf.mxu0
    %v1539 = vadd.f32 %v1491, %v1538
    %v1540 = vpop.f32.mrf.mxu0
    %1541 = vmatprep.mubr.bf16.mxu0 %v1306
    %1542 = vmatmul.mubr.bf16.gmra.mxu0 %v1305
    %v1543 = vpop.f32.mrf.mxu0
    %v1544 = vadd.f32 %v1496, %v1543
    %v1545 = vpop.f32.mrf.mxu0
    %v1546 = vpop.f32.mrf.mxu0
    %v1547 = vpop.f32.mrf.mxu0
    %1548 = vdwg.mxu0
    %1549 = vmatprep.subr.bf16.mxu0 0
    %1550 = vmatpush1.bf16.xpose.msra.mxu0 0
    %1551 = vmatprep.subr.bf16.mxu0 0
    %1552 = vmatpush1.bf16.xpose.msra.mxu0 0
    %1553 = vmatprep.subr.bf16.mxu0 0
    %1554 = vmatpush1.bf16.xpose.msra.mxu0 0
    %1555 = vmatprep.subr.bf16.mxu0 0
    %1556 = vmatpush1.bf16.xpose.msra.mxu0 0
    %1557 = vmatprep.subr.bf16.mxu0 0
    %1558 = vmatpush1.bf16.xpose.msra.mxu0 0
    %1559 = vmatprep.subr.bf16.mxu0 0
    %1560 = vmatpush1.bf16.xpose.msra.mxu0 0
    %1561 = vmatprep.subr.bf16.mxu0 %v1388
    %1562 = vmatpush1.bf16.xpose.msra.mxu0 %v1387
    %1563 = vmatprep.subr.bf16.mxu0 %v1380
    %1564 = vmatpush1.bf16.xpose.msra.mxu0 %v1379
    %1565 = vmatprep.subr.bf16.mxu0 0
    %1566 = vmatpush2.bf16.xpose.msra.mxu0 0
    %1567 = vmatprep.subr.bf16.mxu0 0
    %1568 = vmatpush2.bf16.xpose.msra.mxu0 0
    %1569 = vmatprep.subr.bf16.mxu0 0
    %1570 = vmatpush2.bf16.xpose.msra.mxu0 0
    %1571 = vmatprep.subr.bf16.mxu0 0
    %1572 = vmatpush2.bf16.xpose.msra.mxu0 0
    %1573 = vmatprep.subr.bf16.mxu0 0
    %1574 = vmatpush2.bf16.xpose.msra.mxu0 0
    %1575 = vmatprep.subr.bf16.mxu0 0
    %1576 = vmatpush2.bf16.xpose.msra.mxu0 0
    %1577 = vmatprep.subr.bf16.mxu0 0
    %1578 = vmatpush2.bf16.xpose.msra.mxu0 0
    %1579 = vmatprep.subr.bf16.mxu0 0
    %1580 = vmatpush2.bf16.xpose.msra.mxu0 0
    %1581 = vmatprep.mubr.bf16.mxu0 %v1300
    %1582 = vmatmul.mubr.bf16.gmra.mxu0 %v1299
    %v1583 = vpop.f32.mrf.mxu0
    %v1584 = vadd.f32 %v1536, %v1583
    %v1585 = vpop.f32.mrf.mxu0
    %v1586 = vpop.f32.mrf.mxu0
    %v1587 = vadd.f32 %v1539, %v1586
    %v1588 = vpop.f32.mrf.mxu0
    %1589 = vmatprep.mubr.bf16.mxu0 %v1308
    %1590 = vmatmul.mubr.bf16.gmra.mxu0 %v1307
    %v1591 = vpop.f32.mrf.mxu0
    %v1592 = vadd.f32 %v1544, %v1591
    %v1593 = vpop.f32.mrf.mxu0
    %v1594 = vpop.f32.mrf.mxu0
    %v1595 = vpop.f32.mrf.mxu0
    %1596 = vdwg.mxu0
    %v1597 = vpack.c.bf16 %v1587, %v1584
    %v1598 = vpack.c.bf16 %v1592, %v1592
    %v1600 = vsel %vm824, %v842, 0
    %vm1602 = vcmask 1041408
    %v1604 = vsel %vm1602, %v1598, 0
    %1606 = vmatprep.subr.bf16.mxu0 0
    %1607 = vmatpush1.bf16.msra.mxu0 0
    %1608 = vmatprep.subr.bf16.mxu0 0
    %1609 = vmatpush1.bf16.msra.mxu0 0
    %1610 = vmatprep.subr.bf16.mxu0 0
    %1611 = vmatpush1.bf16.msra.mxu0 0
    %1612 = vmatprep.subr.bf16.mxu0 0
    %1613 = vmatpush1.bf16.msra.mxu0 0
    %1614 = vmatprep.subr.bf16.mxu0 0
    %1615 = vmatpush1.bf16.msra.mxu0 0
    %1616 = vmatprep.subr.bf16.mxu0 0
    %1617 = vmatpush1.bf16.msra.mxu0 0
    %1618 = vmatprep.subr.bf16.mxu0 0
    %1619 = vmatpush1.bf16.msra.mxu0 %v1604
    %1620 = vmatprep.subr.bf16.mxu0 0
    %1621 = vmatpush1.bf16.msra.mxu0 %v1597
    %1622 = vmatprep.subr.bf16.mxu0 0
    %1623 = vmatpush2.bf16.msra.mxu0 0
    %1624 = vmatprep.subr.bf16.mxu0 0
    %1625 = vmatpush2.bf16.msra.mxu0 0
    %1626 = vmatprep.subr.bf16.mxu0 0
    %1627 = vmatpush2.bf16.msra.mxu0 0
    %1628 = vmatprep.subr.bf16.mxu0 0
    %1629 = vmatpush2.bf16.msra.mxu0 0
    %1630 = vmatprep.subr.bf16.mxu0 0
    %1631 = vmatpush2.bf16.msra.mxu0 0
    %1632 = vmatprep.subr.bf16.mxu0 0
    %1633 = vmatpush2.bf16.msra.mxu0 0
    %1634 = vmatprep.subr.bf16.mxu0 0
    %1635 = vmatpush2.bf16.msra.mxu0 0
    %1636 = vmatprep.subr.bf16.mxu0 0
    %1637 = vmatpush2.bf16.msra.mxu0 0
    %1638 = vmatprep.mubr.bf16.mxu0 0
    %1639 = vmatmul.mubr.bf16.gmra.mxu0 %v1600
    %v1640 = vpop.f32.mrf.mxu0
    %v1641 = vadd.f32 0.0, %v1640
    %v1642 = vpop.f32.mrf.mxu0
    %v1643 = vpop.f32.mrf.mxu0
    %v1644 = vadd.f32 0.0, %v1643
    %v1645 = vpop.f32.mrf.mxu0
    %1646 = vdwg.mxu0
    %v1647 = vmul.f32 %v1641, %v840
    %v1648 = vmul.f32 %v1644, %v841
    %v1650 = vsel %vm1034, %v159, 0
    %v1653 = vsel %vm1034, %v160, 0
    %1655 = vmatprep.subr.mxu0 0.0
    %1656 = vmatpush1.msra.mxu0 0.0
    %1657 = vmatprep.subr.mxu0 0.0
    %1658 = vmatpush1.msra.mxu0 0.0
    %1659 = vmatprep.subr.mxu0 0.0
    %1660 = vmatpush1.msra.mxu0 0.0
    %1661 = vmatprep.subr.mxu0 0.0
    %1662 = vmatpush1.msra.mxu0 0.0
    %1663 = vmatprep.subr.mxu0 0.0
    %1664 = vmatpush1.msra.mxu0 0.0
    %1665 = vmatprep.subr.mxu0 0.0
    %1666 = vmatpush1.msra.mxu0 0.0
    %1667 = vmatprep.subr.mxu0 0.0
    %1668 = vmatpush1.msra.mxu0 0.0
    %1669 = vmatprep.subr.mxu0 0.0
    %1670 = vmatpush1.msra.mxu0 0.0
    %1671 = vmatprep.subr.mxu0 0.0
    %1672 = vmatpush1.msra.mxu0 0.0
    %1673 = vmatprep.subr.mxu0 0.0
    %1674 = vmatpush1.msra.mxu0 0.0
    %1675 = vmatprep.subr.mxu0 0.0
    %1676 = vmatpush1.msra.mxu0 0.0
    %1677 = vmatprep.subr.mxu0 0.0
    %1678 = vmatpush1.msra.mxu0 0.0
    %1679 = vmatprep.subr.mxu0 0.0
    %1680 = vmatpush1.msra.mxu0 %v852
    %1681 = vmatprep.subr.mxu0 0.0
    %1682 = vmatpush1.msra.mxu0 %v851
    %1683 = vmatprep.subr.mxu0 0.0
    %1684 = vmatpush1.msra.mxu0 %v850
    %1685 = vmatprep.subr.mxu0 0.0
    %1686 = vmatpush1.msra.mxu0 %v849
    %1687 = vmatprep.subr.mxu0 0.0
    %1688 = vmatpush2.msra.mxu0 0.0
    %1689 = vmatprep.subr.mxu0 0.0
    %1690 = vmatpush2.msra.mxu0 0.0
    %1691 = vmatprep.subr.mxu0 0.0
    %1692 = vmatpush2.msra.mxu0 0.0
    %1693 = vmatprep.subr.mxu0 0.0
    %1694 = vmatpush2.msra.mxu0 0.0
    %1695 = vmatprep.subr.mxu0 0.0
    %1696 = vmatpush2.msra.mxu0 0.0
    %1697 = vmatprep.subr.mxu0 0.0
    %1698 = vmatpush2.msra.mxu0 0.0
    %1699 = vmatprep.subr.mxu0 0.0
    %1700 = vmatpush2.msra.mxu0 0.0
    %1701 = vmatprep.subr.mxu0 0.0
    %1702 = vmatpush2.msra.mxu0 0.0
    %1703 = vmatprep.subr.mxu0 0.0
    %1704 = vmatpush2.msra.mxu0 0.0
    %1705 = vmatprep.subr.mxu0 0.0
    %1706 = vmatpush2.msra.mxu0 0.0
    %1707 = vmatprep.subr.mxu0 0.0
    %1708 = vmatpush2.msra.mxu0 0.0
    %1709 = vmatprep.subr.mxu0 0.0
    %1710 = vmatpush2.msra.mxu0 0.0
    %1711 = vmatprep.subr.mxu0 0.0
    %1712 = vmatpush2.msra.mxu0 0.0
    %1713 = vmatprep.subr.mxu0 0.0
    %1714 = vmatpush2.msra.mxu0 0.0
    %1715 = vmatprep.subr.mxu0 0.0
    %1716 = vmatpush2.msra.mxu0 0.0
    %1717 = vmatprep.subr.mxu0 0.0
    %1718 = vmatpush2.msra.mxu0 0.0
    %1719 = vmatprep.mubr.f32.mxu0 0.0
    %1720 = vmatmul.mubr.f32.gmra.mxu0 %v1650
    %v1721 = vpop.f32.mrf.mxu0
    %v1722 = vadd.f32 0.0, %v1721
    %v1723 = vpop.f32.mrf.mxu0
    %1724 = vmatprep.mubr.f32.mxu0 0.0
    %1725 = vmatmul.mubr.f32.gmra.mxu0 %v1653
    %v1726 = vpop.f32.mrf.mxu0
    %v1727 = vadd.f32 0.0, %v1726
    %v1728 = vpop.f32.mrf.mxu0
    %1729 = vdwg.mxu0
    %v1730 = vadd.f32 %v1647, %v1722
    %v1731 = vadd.f32 %v1648, %v1727
    %v1732 = vadd.f32 %v1730, %v857
    %v1733 = vadd.f32 %v1731, %v857
    %v1734 = vmax.f32 %v1732, 0.0
    %v1735 = vmax.f32 %v1733, 0.0
    %v1737 = vsel %vm1034, %v1734, 0
    %v1740 = vsel %vm1034, %v1735, 0
    %1742 = vmatprep.subr.mxu0 0.0
    %1743 = vmatpush1.msra.mxu0 0.0
    %1744 = vmatprep.subr.mxu0 0.0
    %1745 = vmatpush1.msra.mxu0 0.0
    %1746 = vmatprep.subr.mxu0 0.0
    %1747 = vmatpush1.msra.mxu0 0.0
    %1748 = vmatprep.subr.mxu0 0.0
    %1749 = vmatpush1.msra.mxu0 0.0
    %1750 = vmatprep.subr.mxu0 0.0
    %1751 = vmatpush1.msra.mxu0 0.0
    %1752 = vmatprep.subr.mxu0 0.0
    %1753 = vmatpush1.msra.mxu0 0.0
    %1754 = vmatprep.subr.mxu0 0.0
    %1755 = vmatpush1.msra.mxu0 0.0
    %1756 = vmatprep.subr.mxu0 0.0
    %1757 = vmatpush1.msra.mxu0 0.0
    %1758 = vmatprep.subr.mxu0 0.0
    %1759 = vmatpush1.msra.mxu0 0.0
    %1760 = vmatprep.subr.mxu0 0.0
    %1761 = vmatpush1.msra.mxu0 0.0
    %1762 = vmatprep.subr.mxu0 0.0
    %1763 = vmatpush1.msra.mxu0 0.0
    %1764 = vmatprep.subr.mxu0 0.0
    %1765 = vmatpush1.msra.mxu0 0.0
    %1766 = vmatprep.subr.mxu0 0.0
    %1767 = vmatpush1.msra.mxu0 %v861
    %1768 = vmatprep.subr.mxu0 0.0
    %1769 = vmatpush1.msra.mxu0 %v860
    %1770 = vmatprep.subr.mxu0 0.0
    %1771 = vmatpush1.msra.mxu0 %v859
    %1772 = vmatprep.subr.mxu0 0.0
    %1773 = vmatpush1.msra.mxu0 %v858
    %1774 = vmatprep.subr.mxu0 0.0
    %1775 = vmatpush2.msra.mxu0 0.0
    %1776 = vmatprep.subr.mxu0 0.0
    %1777 = vmatpush2.msra.mxu0 0.0
    %1778 = vmatprep.subr.mxu0 0.0
    %1779 = vmatpush2.msra.mxu0 0.0
    %1780 = vmatprep.subr.mxu0 0.0
    %1781 = vmatpush2.msra.mxu0 0.0
    %1782 = vmatprep.subr.mxu0 0.0
    %1783 = vmatpush2.msra.mxu0 0.0
    %1784 = vmatprep.subr.mxu0 0.0
    %1785 = vmatpush2.msra.mxu0 0.0
    %1786 = vmatprep.subr.mxu0 0.0
    %1787 = vmatpush2.msra.mxu0 0.0
    %1788 = vmatprep.subr.mxu0 0.0
    %1789 = vmatpush2.msra.mxu0 0.0
    %1790 = vmatprep.subr.mxu0 0.0
    %1791 = vmatpush2.msra.mxu0 0.0
    %1792 = vmatprep.subr.mxu0 0.0
    %1793 = vmatpush2.msra.mxu0 0.0
    %1794 = vmatprep.subr.mxu0 0.0
    %1795 = vmatpush2.msra.mxu0 0.0
    %1796 = vmatprep.subr.mxu0 0.0
    %1797 = vmatpush2.msra.mxu0 0.0
    %1798 = vmatprep.subr.mxu0 0.0
    %1799 = vmatpush2.msra.mxu0 0.0
    %1800 = vmatprep.subr.mxu0 0.0
    %1801 = vmatpush2.msra.mxu0 0.0
    %1802 = vmatprep.subr.mxu0 0.0
    %1803 = vmatpush2.msra.mxu0 0.0
    %1804 = vmatprep.subr.mxu0 0.0
    %1805 = vmatpush2.msra.mxu0 0.0
    %1806 = vmatprep.mubr.f32.mxu0 0.0
    %1807 = vmatmul.mubr.f32.gmra.mxu0 %v1737
    %v1808 = vpop.f32.mrf.mxu0
    %v1809 = vadd.f32 %v871, %v1808
    %v1810 = vpop.f32.mrf.mxu0
    %1811 = vmatprep.mubr.f32.mxu0 0.0
    %1812 = vmatmul.mubr.f32.gmra.mxu0 %v1740
    %v1813 = vpop.f32.mrf.mxu0
    %v1814 = vadd.f32 %v871, %v1813
    %v1815 = vpop.f32.mrf.mxu0
    %1816 = vdwg.mxu0
    %1817 = vmatprep.subr.mxu0 0.0
    %1818 = vmatpush1.msra.mxu0 0.0
    %1819 = vmatprep.subr.mxu0 0.0
    %1820 = vmatpush1.msra.mxu0 0.0
    %1821 = vmatprep.subr.mxu0 0.0
    %1822 = vmatpush1.msra.mxu0 0.0
    %1823 = vmatprep.subr.mxu0 0.0
    %1824 = vmatpush1.msra.mxu0 0.0
    %1825 = vmatprep.subr.mxu0 0.0
    %1826 = vmatpush1.msra.mxu0 0.0
    %1827 = vmatprep.subr.mxu0 0.0
    %1828 = vmatpush1.msra.mxu0 0.0
    %1829 = vmatprep.subr.mxu0 0.0
    %1830 = vmatpush1.msra.mxu0 0.0
    %1831 = vmatprep.subr.mxu0 0.0
    %1832 = vmatpush1.msra.mxu0 0.0
    %1833 = vmatprep.subr.mxu0 0.0
    %1834 = vmatpush1.msra.mxu0 0.0
    %1835 = vmatprep.subr.mxu0 0.0
    %1836 = vmatpush1.msra.mxu0 0.0
    %1837 = vmatprep.subr.mxu0 0.0
    %1838 = vmatpush1.msra.mxu0 0.0
    %1839 = vmatprep.subr.mxu0 0.0
    %1840 = vmatpush1.msra.mxu0 0.0
    %1841 = vmatprep.subr.mxu0 0.0
    %1842 = vmatpush1.msra.mxu0 %v866
    %1843 = vmatprep.subr.mxu0 0.0
    %1844 = vmatpush1.msra.mxu0 %v865
    %1845 = vmatprep.subr.mxu0 0.0
    %1846 = vmatpush1.msra.mxu0 %v864
    %1847 = vmatprep.subr.mxu0 0.0
    %1848 = vmatpush1.msra.mxu0 %v863
    %1849 = vmatprep.subr.mxu0 0.0
    %1850 = vmatpush2.msra.mxu0 0.0
    %1851 = vmatprep.subr.mxu0 0.0
    %1852 = vmatpush2.msra.mxu0 0.0
    %1853 = vmatprep.subr.mxu0 0.0
    %1854 = vmatpush2.msra.mxu0 0.0
    %1855 = vmatprep.subr.mxu0 0.0
    %1856 = vmatpush2.msra.mxu0 0.0
    %1857 = vmatprep.subr.mxu0 0.0
    %1858 = vmatpush2.msra.mxu0 0.0
    %1859 = vmatprep.subr.mxu0 0.0
    %1860 = vmatpush2.msra.mxu0 0.0
    %1861 = vmatprep.subr.mxu0 0.0
    %1862 = vmatpush2.msra.mxu0 0.0
    %1863 = vmatprep.subr.mxu0 0.0
    %1864 = vmatpush2.msra.mxu0 0.0
    %1865 = vmatprep.subr.mxu0 0.0
    %1866 = vmatpush2.msra.mxu0 0.0
    %1867 = vmatprep.subr.mxu0 0.0
    %1868 = vmatpush2.msra.mxu0 0.0
    %1869 = vmatprep.subr.mxu0 0.0
    %1870 = vmatpush2.msra.mxu0 0.0
    %1871 = vmatprep.subr.mxu0 0.0
    %1872 = vmatpush2.msra.mxu0 0.0
    %1873 = vmatprep.subr.mxu0 0.0
    %1874 = vmatpush2.msra.mxu0 0.0
    %1875 = vmatprep.subr.mxu0 0.0
    %1876 = vmatpush2.msra.mxu0 0.0
    %1877 = vmatprep.subr.mxu0 0.0
    %1878 = vmatpush2.msra.mxu0 0.0
    %1879 = vmatprep.subr.mxu0 0.0
    %1880 = vmatpush2.msra.mxu0 0.0
    %1881 = vmatprep.mubr.f32.mxu0 0.0
    %1882 = vmatmul.mubr.f32.gmra.mxu0 %v1650
    %v1883 = vpop.f32.mrf.mxu0
    %v1884 = vadd.f32 %v875, %v1883
    %v1885 = vpop.f32.mrf.mxu0
    %1886 = vmatprep.mubr.f32.mxu0 0.0
    %1887 = vmatmul.mubr.f32.gmra.mxu0 %v1653
    %v1888 = vpop.f32.mrf.mxu0
    %v1889 = vadd.f32 %v875, %v1888
    %v1890 = vpop.f32.mrf.mxu0
    %1891 = vdwg.mxu0
    %v1892 = vadd.f32 %v1809, %v1884
    %v1893 = vadd.f32 %v1814, %v1889
    %v1894 = vxor.u32 %v1892, 2147483648
    %v1895 = vxor.u32 %v1893, 2147483648
    %v1896 = vmul.f32 %v1894, 1.442695
    %v1897 = vpow.pop %v1896
    %v1898 = vmul.f32 %v1895, 1.442695
    %v1899 = vpow.pop %v1898
    %v1900 = vadd.f32 %v1897, 1.0
    %v1901 = vadd.f32 %v1899, 1.0
    %v1902 = vrcp.pop %v1900
    %v1903 = vmul.f32 1.0, %v1902
    %v1904 = vrcp.pop %v1901
    %v1905 = vmul.f32 1.0, %v1904
    %1908 = vrot.lane.b32.xlu0 %v1884, 64
    %v1909 = vpop.permute.xlu0 %1908
    %1910 = vrot.lane.b32.xlu0 %v1889, 64
    %v1911 = vpop.permute.xlu0 %1910
    %v1914 = vmul.f32 %v1903, %v1909
    %v1915 = vmul.f32 %v1905, %v1911
    %1918 = vrot.lane.b32.xlu0 %v1914, 64
    %v1919 = vpop.permute.xlu0 %1918
    %1920 = vrot.lane.b32.xlu0 %v1915, 64
    %v1921 = vpop.permute.xlu0 %1920
    %v1924 = vadd.f32 %v1809, %v1919
    %v1925 = vadd.f32 %v1814, %v1921
    %v1926 = vtanh.pop %v1924
    %v1927 = vtanh.pop %v1925
    %v1928 = vsub.f32 1.0, %v1903
    %v1929 = vsub.f32 1.0, %v1905
    %1932 = vrot.lane.b32.xlu0 %v1926, 96
    %v1933 = vpop.permute.xlu0 %1932
    %1934 = vrot.lane.b32.xlu0 %v1927, 96
    %v1935 = vpop.permute.xlu0 %1934
    %v1938 = vmul.f32 %v1928, %v1933
    %v1939 = vmul.f32 %v1929, %v1935
    %1940 = vrot.lane.b32.xlu0 %v159, 32
    %v1941 = vpop.permute.xlu0 %1940
    %1942 = vrot.lane.b32.xlu0 %v160, 32
    %v1943 = vpop.permute.xlu0 %1942
    %v1946 = vmul.f32 %v1903, %v1941
    %v1947 = vmul.f32 %v1905, %v1943
    %v1948 = vadd.f32 %v1938, %v1946
    %v1949 = vadd.f32 %v1939, %v1947
    %v1950 = vpack.c.bf16 %v1949, %v1948
    %1952 = vrot.lane.b32.xlu0 %v1950, 96
    %v1953 = vpop.permute.xlu0 %1952
    %v1955 = vsel %vm884, %v1953, 0
    %1957 = vmatprep.subr.bf16.mxu0 0
    %1958 = vmatpush1.bf16.msra.mxu0 0
    %1959 = vmatprep.subr.bf16.mxu0 0
    %1960 = vmatpush1.bf16.msra.mxu0 0
    %1961 = vmatprep.subr.bf16.mxu0 0
    %1962 = vmatpush1.bf16.msra.mxu0 0
    %1963 = vmatprep.subr.bf16.mxu0 0
    %1964 = vmatpush1.bf16.msra.mxu0 0
    %1965 = vmatprep.subr.bf16.mxu0 0
    %1966 = vmatpush1.bf16.msra.mxu0 0
    %1967 = vmatprep.subr.bf16.mxu0 0
    %1968 = vmatpush1.bf16.msra.mxu0 0
    %1969 = vmatprep.subr.bf16.mxu0 0
    %1970 = vmatpush1.bf16.msra.mxu0 0
    %1971 = vmatprep.subr.bf16.mxu0 0
    %1972 = vmatpush1.bf16.msra.mxu0 %v1955
    %1973 = vmatprep.subr.bf16.mxu0 0
    %1974 = vmatpush2.bf16.msra.mxu0 0
    %1975 = vmatprep.subr.bf16.mxu0 0
    %1976 = vmatpush2.bf16.msra.mxu0 0
    %1977 = vmatprep.subr.bf16.mxu0 0
    %1978 = vmatpush2.bf16.msra.mxu0 0
    %1979 = vmatprep.subr.bf16.mxu0 0
    %1980 = vmatpush2.bf16.msra.mxu0 0
    %1981 = vmatprep.subr.bf16.mxu0 0
    %1982 = vmatpush2.bf16.msra.mxu0 0
    %1983 = vmatprep.subr.bf16.mxu0 0
    %1984 = vmatpush2.bf16.msra.mxu0 0
    %1985 = vmatprep.subr.bf16.mxu0 0
    %1986 = vmatpush2.bf16.msra.mxu0 0
    %1987 = vmatprep.subr.bf16.mxu0 0
    %1988 = vmatpush2.bf16.msra.mxu0 0
    %1989 = vmatprep.mubr.bf16.mxu0 0
    %1990 = vmatmul.mubr.bf16.gmra.mxu0 %v879
    %v1991 = vpop.f32.mrf.mxu0
    %v1992 = vadd.f32 0.0, %v1991
    %v1993 = vpop.f32.mrf.mxu0
    %v1994 = vpop.f32.mrf.mxu0
    %v1995 = vadd.f32 0.0, %v1994
    %v1996 = vpop.f32.mrf.mxu0
    %1997 = vmatprep.mubr.bf16.mxu0 0
    %1998 = vmatmul.mubr.bf16.gmra.mxu0 %v882
    %v1999 = vpop.f32.mrf.mxu0
    %v2000 = vadd.f32 0.0, %v1999
    %v2001 = vpop.f32.mrf.mxu0
    %v2002 = vpop.f32.mrf.mxu0
    %v2003 = vpop.f32.mrf.mxu0
    %2004 = vdwg.mxu0
    %v2005 = vpack.c.bf16 %v1995, %v1992
    %v2006 = vpack.c.bf16 %v2000, %v2000
    %v2008 = vsel %vm1034, %v2005, 0
    %v2011 = vsel %vm1034, %v2006, 0
    %2013 = vmatprep.subr.bf16.mxu0 0
    %2014 = vmatpush1.bf16.msra.mxu0 0
    %2015 = vmatprep.subr.bf16.mxu0 0
    %2016 = vmatpush1.bf16.msra.mxu0 0
    %2017 = vmatprep.subr.bf16.mxu0 0
    %2018 = vmatpush1.bf16.msra.mxu0 0
    %2019 = vmatprep.subr.bf16.mxu0 0
    %2020 = vmatpush1.bf16.msra.mxu0 0
    %2021 = vmatprep.subr.bf16.mxu0 0
    %2022 = vmatpush1.bf16.msra.mxu0 0
    %2023 = vmatprep.subr.bf16.mxu0 0
    %2024 = vmatpush1.bf16.msra.mxu0 0
    %2025 = vmatprep.subr.bf16.mxu0 %v1011
    %2026 = vmatpush1.bf16.msra.mxu0 %v1010
    %2027 = vmatprep.subr.bf16.mxu0 %v1003
    %2028 = vmatpush1.bf16.msra.mxu0 %v1002
    %2029 = vmatprep.subr.bf16.mxu0 0
    %2030 = vmatpush2.bf16.msra.mxu0 0
    %2031 = vmatprep.subr.bf16.mxu0 0
    %2032 = vmatpush2.bf16.msra.mxu0 0
    %2033 = vmatprep.subr.bf16.mxu0 0
    %2034 = vmatpush2.bf16.msra.mxu0 0
    %2035 = vmatprep.subr.bf16.mxu0 0
    %2036 = vmatpush2.bf16.msra.mxu0 0
    %2037 = vmatprep.subr.bf16.mxu0 0
    %2038 = vmatpush2.bf16.msra.mxu0 0
    %2039 = vmatprep.subr.bf16.mxu0 0
    %2040 = vmatpush2.bf16.msra.mxu0 0
    %2041 = vmatprep.subr.bf16.mxu0 0
    %2042 = vmatpush2.bf16.msra.mxu0 0
    %2043 = vmatprep.subr.bf16.mxu0 0
    %2044 = vmatpush2.bf16.msra.mxu0 0
    %2045 = vmatprep.mubr.bf16.mxu0 0
    %2046 = vmatmul.mubr.bf16.gmra.mxu0 %v2008
    %v2047 = vpop.f32.mrf.mxu0
    %v2048 = vadd.f32 0.0, %v2047
    %v2049 = vpop.f32.mrf.mxu0
    %v2050 = vadd.f32 0.0, %v2049
    %v2051 = vpop.f32.mrf.mxu0
    %v2052 = vadd.f32 0.0, %v2051
    %v2053 = vpop.f32.mrf.mxu0
    %v2054 = vadd.f32 0.0, %v2053
    %2055 = vmatprep.mubr.bf16.mxu0 0
    %2056 = vmatmul.mubr.bf16.gmra.mxu0 %v2011
    %v2057 = vpop.f32.mrf.mxu0
    %v2058 = vadd.f32 0.0, %v2057
    %v2059 = vpop.f32.mrf.mxu0
    %v2060 = vadd.f32 0.0, %v2059
    %v2061 = vpop.f32.mrf.mxu0
    %v2062 = vpop.f32.mrf.mxu0
    %2063 = vdwg.mxu0
    %2064 = vmatprep.subr.bf16.mxu0 0
    %2065 = vmatpush1.bf16.msra.mxu0 0
    %2066 = vmatprep.subr.bf16.mxu0 0
    %2067 = vmatpush1.bf16.msra.mxu0 0
    %2068 = vmatprep.subr.bf16.mxu0 0
    %2069 = vmatpush1.bf16.msra.mxu0 0
    %2070 = vmatprep.subr.bf16.mxu0 0
    %2071 = vmatpush1.bf16.msra.mxu0 0
    %2072 = vmatprep.subr.bf16.mxu0 0
    %2073 = vmatpush1.bf16.msra.mxu0 0
    %2074 = vmatprep.subr.bf16.mxu0 0
    %2075 = vmatpush1.bf16.msra.mxu0 0
    %2076 = vmatprep.subr.bf16.mxu0 %v1013
    %2077 = vmatpush1.bf16.msra.mxu0 %v1012
    %2078 = vmatprep.subr.bf16.mxu0 %v1005
    %2079 = vmatpush1.bf16.msra.mxu0 %v1004
    %2080 = vmatprep.subr.bf16.mxu0 0
    %2081 = vmatpush2.bf16.msra.mxu0 0
    %2082 = vmatprep.subr.bf16.mxu0 0
    %2083 = vmatpush2.bf16.msra.mxu0 0
    %2084 = vmatprep.subr.bf16.mxu0 0
    %2085 = vmatpush2.bf16.msra.mxu0 0
    %2086 = vmatprep.subr.bf16.mxu0 0
    %2087 = vmatpush2.bf16.msra.mxu0 0
    %2088 = vmatprep.subr.bf16.mxu0 0
    %2089 = vmatpush2.bf16.msra.mxu0 0
    %2090 = vmatprep.subr.bf16.mxu0 0
    %2091 = vmatpush2.bf16.msra.mxu0 0
    %2092 = vmatprep.subr.bf16.mxu0 0
    %2093 = vmatpush2.bf16.msra.mxu0 0
    %2094 = vmatprep.subr.bf16.mxu0 0
    %2095 = vmatpush2.bf16.msra.mxu0 0
    %2096 = vmatprep.mubr.bf16.mxu0 0
    %2097 = vmatmul.mubr.bf16.gmra.mxu0 %v2008
    %v2098 = vpop.f32.mrf.mxu0
    %v2099 = vadd.f32 0.0, %v2098
    %v2100 = vpop.f32.mrf.mxu0
    %v2101 = vadd.f32 0.0, %v2100
    %v2102 = vpop.f32.mrf.mxu0
    %v2103 = vadd.f32 0.0, %v2102
    %v2104 = vpop.f32.mrf.mxu0
    %v2105 = vadd.f32 0.0, %v2104
    %2106 = vmatprep.mubr.bf16.mxu0 0
    %2107 = vmatmul.mubr.bf16.gmra.mxu0 %v2011
    %v2108 = vpop.f32.mrf.mxu0
    %v2109 = vadd.f32 0.0, %v2108
    %v2110 = vpop.f32.mrf.mxu0
    %v2111 = vadd.f32 0.0, %v2110
    %v2112 = vpop.f32.mrf.mxu0
    %v2113 = vpop.f32.mrf.mxu0
    %2114 = vdwg.mxu0
    %2115 = vmatprep.subr.bf16.mxu0 0
    %2116 = vmatpush1.bf16.msra.mxu0 0
    %2117 = vmatprep.subr.bf16.mxu0 0
    %2118 = vmatpush1.bf16.msra.mxu0 0
    %2119 = vmatprep.subr.bf16.mxu0 0
    %2120 = vmatpush1.bf16.msra.mxu0 0
    %2121 = vmatprep.subr.bf16.mxu0 0
    %2122 = vmatpush1.bf16.msra.mxu0 0
    %2123 = vmatprep.subr.bf16.mxu0 0
    %2124 = vmatpush1.bf16.msra.mxu0 0
    %2125 = vmatprep.subr.bf16.mxu0 0
    %2126 = vmatpush1.bf16.msra.mxu0 0
    %2127 = vmatprep.subr.bf16.mxu0 %v1015
    %2128 = vmatpush1.bf16.msra.mxu0 %v1014
    %2129 = vmatprep.subr.bf16.mxu0 %v1007
    %2130 = vmatpush1.bf16.msra.mxu0 %v1006
    %2131 = vmatprep.subr.bf16.mxu0 0
    %2132 = vmatpush2.bf16.msra.mxu0 0
    %2133 = vmatprep.subr.bf16.mxu0 0
    %2134 = vmatpush2.bf16.msra.mxu0 0
    %2135 = vmatprep.subr.bf16.mxu0 0
    %2136 = vmatpush2.bf16.msra.mxu0 0
    %2137 = vmatprep.subr.bf16.mxu0 0
    %2138 = vmatpush2.bf16.msra.mxu0 0
    %2139 = vmatprep.subr.bf16.mxu0 0
    %2140 = vmatpush2.bf16.msra.mxu0 0
    %2141 = vmatprep.subr.bf16.mxu0 0
    %2142 = vmatpush2.bf16.msra.mxu0 0
    %2143 = vmatprep.subr.bf16.mxu0 0
    %2144 = vmatpush2.bf16.msra.mxu0 0
    %2145 = vmatprep.subr.bf16.mxu0 0
    %2146 = vmatpush2.bf16.msra.mxu0 0
    %2147 = vmatprep.mubr.bf16.mxu0 0
    %2148 = vmatmul.mubr.bf16.gmra.mxu0 %v2008
    %v2149 = vpop.f32.mrf.mxu0
    %v2150 = vadd.f32 0.0, %v2149
    %v2151 = vpop.f32.mrf.mxu0
    %v2152 = vadd.f32 0.0, %v2151
    %v2153 = vpop.f32.mrf.mxu0
    %v2154 = vadd.f32 0.0, %v2153
    %v2155 = vpop.f32.mrf.mxu0
    %v2156 = vadd.f32 0.0, %v2155
    %2157 = vmatprep.mubr.bf16.mxu0 0
    %2158 = vmatmul.mubr.bf16.gmra.mxu0 %v2011
    %v2159 = vpop.f32.mrf.mxu0
    %v2160 = vadd.f32 0.0, %v2159
    %v2161 = vpop.f32.mrf.mxu0
    %v2162 = vadd.f32 0.0, %v2161
    %v2163 = vpop.f32.mrf.mxu0
    %v2164 = vpop.f32.mrf.mxu0
    %2165 = vdwg.mxu0
    %2166 = vmatprep.subr.bf16.mxu0 0
    %2167 = vmatpush1.bf16.msra.mxu0 0
    %2168 = vmatprep.subr.bf16.mxu0 0
    %2169 = vmatpush1.bf16.msra.mxu0 0
    %2170 = vmatprep.subr.bf16.mxu0 0
    %2171 = vmatpush1.bf16.msra.mxu0 0
    %2172 = vmatprep.subr.bf16.mxu0 0
    %2173 = vmatpush1.bf16.msra.mxu0 0
    %2174 = vmatprep.subr.bf16.mxu0 0
    %2175 = vmatpush1.bf16.msra.mxu0 0
    %2176 = vmatprep.subr.bf16.mxu0 0
    %2177 = vmatpush1.bf16.msra.mxu0 0
    %2178 = vmatprep.subr.bf16.mxu0 %v1017
    %2179 = vmatpush1.bf16.msra.mxu0 %v1016
    %2180 = vmatprep.subr.bf16.mxu0 %v1009
    %2181 = vmatpush1.bf16.msra.mxu0 %v1008
    %2182 = vmatprep.subr.bf16.mxu0 0
    %2183 = vmatpush2.bf16.msra.mxu0 0
    %2184 = vmatprep.subr.bf16.mxu0 0
    %2185 = vmatpush2.bf16.msra.mxu0 0
    %2186 = vmatprep.subr.bf16.mxu0 0
    %2187 = vmatpush2.bf16.msra.mxu0 0
    %2188 = vmatprep.subr.bf16.mxu0 0
    %2189 = vmatpush2.bf16.msra.mxu0 0
    %2190 = vmatprep.subr.bf16.mxu0 0
    %2191 = vmatpush2.bf16.msra.mxu0 0
    %2192 = vmatprep.subr.bf16.mxu0 0
    %2193 = vmatpush2.bf16.msra.mxu0 0
    %2194 = vmatprep.subr.bf16.mxu0 0
    %2195 = vmatpush2.bf16.msra.mxu0 0
    %2196 = vmatprep.subr.bf16.mxu0 0
    %2197 = vmatpush2.bf16.msra.mxu0 0
    %2198 = vmatprep.mubr.bf16.mxu0 0
    %2199 = vmatmul.mubr.bf16.gmra.mxu0 %v2008
    %v2200 = vpop.f32.mrf.mxu0
    %v2201 = vadd.f32 0.0, %v2200
    %v2202 = vpop.f32.mrf.mxu0
    %v2203 = vadd.f32 0.0, %v2202
    %v2204 = vpop.f32.mrf.mxu0
    %v2205 = vadd.f32 0.0, %v2204
    %v2206 = vpop.f32.mrf.mxu0
    %v2207 = vadd.f32 0.0, %v2206
    %2208 = vmatprep.mubr.bf16.mxu0 0
    %2209 = vmatmul.mubr.bf16.gmra.mxu0 %v2011
    %v2210 = vpop.f32.mrf.mxu0
    %v2211 = vadd.f32 0.0, %v2210
    %v2212 = vpop.f32.mrf.mxu0
    %v2213 = vadd.f32 0.0, %v2212
    %v2214 = vpop.f32.mrf.mxu0
    %v2215 = vpop.f32.mrf.mxu0
    %2216 = vdwg.mxu0
    %v2217 = vmul.f32 %v2048, %v1245
    %v2218 = vmul.f32 %v2050, %v1246
    %v2219 = vmul.f32 %v2099, %v1247
    %v2220 = vmul.f32 %v2101, %v1248
    %v2221 = vmul.f32 %v2150, %v1249
    %v2222 = vmul.f32 %v2152, %v1250
    %v2223 = vmul.f32 %v2201, %v1251
    %v2224 = vmul.f32 %v2203, %v1252
    %v2225 = vmul.f32 %v2052, %v1253
    %v2226 = vmul.f32 %v2054, %v1254
    %v2227 = vmul.f32 %v2103, %v1255
    %v2228 = vmul.f32 %v2105, %v1256
    %v2229 = vmul.f32 %v2154, %v1257
    %v2230 = vmul.f32 %v2156, %v1258
    %v2231 = vmul.f32 %v2205, %v1259
    %v2232 = vmul.f32 %v2207, %v1260
    %v2233 = vmul.f32 %v2058, %v1261
    %v2234 = vmul.f32 %v2060, %v1262
    %v2235 = vmul.f32 %v2109, %v1263
    %v2236 = vmul.f32 %v2111, %v1264
    %v2237 = vmul.f32 %v2160, %v1265
    %v2238 = vmul.f32 %v2162, %v1266
    %v2239 = vmul.f32 %v2211, %v1267
    %v2240 = vmul.f32 %v2213, %v1268
    %v2241 = vpack.c.bf16 %v2225, %v2217
    %v2242 = vpack.c.bf16 %v2226, %v2218
    %v2243 = vpack.c.bf16 %v2227, %v2219
    %v2244 = vpack.c.bf16 %v2228, %v2220
    %v2245 = vpack.c.bf16 %v2229, %v2221
    %v2246 = vpack.c.bf16 %v2230, %v2222
    %v2247 = vpack.c.bf16 %v2231, %v2223
    %v2248 = vpack.c.bf16 %v2232, %v2224
    %v2249 = vpack.c.bf16 %v2233, %v2233
    %v2250 = vpack.c.bf16 %v2234, %v2234
    %v2251 = vpack.c.bf16 %v2235, %v2235
    %v2252 = vpack.c.bf16 %v2236, %v2236
    %v2253 = vpack.c.bf16 %v2237, %v2237
    %v2254 = vpack.c.bf16 %v2238, %v2238
    %v2255 = vpack.c.bf16 %v2239, %v2239
    %v2256 = vpack.c.bf16 %v2240, %v2240
    %2257 = vmatprep.subr.bf16.mxu0 0
    %2258 = vmatpush1.bf16.xpose.msra.mxu0 0
    %2259 = vmatprep.subr.bf16.mxu0 0
    %2260 = vmatpush1.bf16.xpose.msra.mxu0 0
    %2261 = vmatprep.subr.bf16.mxu0 0
    %2262 = vmatpush1.bf16.xpose.msra.mxu0 0
    %2263 = vmatprep.subr.bf16.mxu0 0
    %2264 = vmatpush1.bf16.xpose.msra.mxu0 0
    %2265 = vmatprep.subr.bf16.mxu0 0
    %2266 = vmatpush1.bf16.xpose.msra.mxu0 0
    %2267 = vmatprep.subr.bf16.mxu0 0
    %2268 = vmatpush1.bf16.xpose.msra.mxu0 0
    %2269 = vmatprep.subr.bf16.mxu0 %v1382
    %2270 = vmatpush1.bf16.xpose.msra.mxu0 %v1381
    %2271 = vmatprep.subr.bf16.mxu0 %v1374
    %2272 = vmatpush1.bf16.xpose.msra.mxu0 %v1373
    %2273 = vmatprep.subr.bf16.mxu0 0
    %2274 = vmatpush2.bf16.xpose.msra.mxu0 0
    %2275 = vmatprep.subr.bf16.mxu0 0
    %2276 = vmatpush2.bf16.xpose.msra.mxu0 0
    %2277 = vmatprep.subr.bf16.mxu0 0
    %2278 = vmatpush2.bf16.xpose.msra.mxu0 0
    %2279 = vmatprep.subr.bf16.mxu0 0
    %2280 = vmatpush2.bf16.xpose.msra.mxu0 0
    %2281 = vmatprep.subr.bf16.mxu0 0
    %2282 = vmatpush2.bf16.xpose.msra.mxu0 0
    %2283 = vmatprep.subr.bf16.mxu0 0
    %2284 = vmatpush2.bf16.xpose.msra.mxu0 0
    %2285 = vmatprep.subr.bf16.mxu0 0
    %2286 = vmatpush2.bf16.xpose.msra.mxu0 0
    %2287 = vmatprep.subr.bf16.mxu0 0
    %2288 = vmatpush2.bf16.xpose.msra.mxu0 0
    %2289 = vmatprep.mubr.bf16.mxu0 %v2242
    %2290 = vmatmul.mubr.bf16.gmra.mxu0 %v2241
    %v2291 = vpop.f32.mrf.mxu0
    %v2292 = vadd.f32 0.0, %v2291
    %v2293 = vpop.f32.mrf.mxu0
    %v2294 = vpop.f32.mrf.mxu0
    %v2295 = vadd.f32 0.0, %v2294
    %v2296 = vpop.f32.mrf.mxu0
    %2297 = vmatprep.mubr.bf16.mxu0 %v2250
    %2298 = vmatmul.mubr.bf16.gmra.mxu0 %v2249
    %v2299 = vpop.f32.mrf.mxu0
    %v2300 = vadd.f32 0.0, %v2299
    %v2301 = vpop.f32.mrf.mxu0
    %v2302 = vpop.f32.mrf.mxu0
    %v2303 = vpop.f32.mrf.mxu0
    %2304 = vdwg.mxu0
    %2305 = vmatprep.subr.bf16.mxu0 0
    %2306 = vmatpush1.bf16.xpose.msra.mxu0 0
    %2307 = vmatprep.subr.bf16.mxu0 0
    %2308 = vmatpush1.bf16.xpose.msra.mxu0 0
    %2309 = vmatprep.subr.bf16.mxu0 0
    %2310 = vmatpush1.bf16.xpose.msra.mxu0 0
    %2311 = vmatprep.subr.bf16.mxu0 0
    %2312 = vmatpush1.bf16.xpose.msra.mxu0 0
    %2313 = vmatprep.subr.bf16.mxu0 0
    %2314 = vmatpush1.bf16.xpose.msra.mxu0 0
    %2315 = vmatprep.subr.bf16.mxu0 0
    %2316 = vmatpush1.bf16.xpose.msra.mxu0 0
    %2317 = vmatprep.subr.bf16.mxu0 %v1384
    %2318 = vmatpush1.bf16.xpose.msra.mxu0 %v1383
    %2319 = vmatprep.subr.bf16.mxu0 %v1376
    %2320 = vmatpush1.bf16.xpose.msra.mxu0 %v1375
    %2321 = vmatprep.subr.bf16.mxu0 0
    %2322 = vmatpush2.bf16.xpose.msra.mxu0 0
    %2323 = vmatprep.subr.bf16.mxu0 0
    %2324 = vmatpush2.bf16.xpose.msra.mxu0 0
    %2325 = vmatprep.subr.bf16.mxu0 0
    %2326 = vmatpush2.bf16.xpose.msra.mxu0 0
    %2327 = vmatprep.subr.bf16.mxu0 0
    %2328 = vmatpush2.bf16.xpose.msra.mxu0 0
    %2329 = vmatprep.subr.bf16.mxu0 0
    %2330 = vmatpush2.bf16.xpose.msra.mxu0 0
    %2331 = vmatprep.subr.bf16.mxu0 0
    %2332 = vmatpush2.bf16.xpose.msra.mxu0 0
    %2333 = vmatprep.subr.bf16.mxu0 0
    %2334 = vmatpush2.bf16.xpose.msra.mxu0 0
    %2335 = vmatprep.subr.bf16.mxu0 0
    %2336 = vmatpush2.bf16.xpose.msra.mxu0 0
    %2337 = vmatprep.mubr.bf16.mxu0 %v2244
    %2338 = vmatmul.mubr.bf16.gmra.mxu0 %v2243
    %v2339 = vpop.f32.mrf.mxu0
    %v2340 = vadd.f32 %v2292, %v2339
    %v2341 = vpop.f32.mrf.mxu0
    %v2342 = vpop.f32.mrf.mxu0
    %v2343 = vadd.f32 %v2295, %v2342
    %v2344 = vpop.f32.mrf.mxu0
    %2345 = vmatprep.mubr.bf16.mxu0 %v2252
    %2346 = vmatmul.mubr.bf16.gmra.mxu0 %v2251
    %v2347 = vpop.f32.mrf.mxu0
    %v2348 = vadd.f32 %v2300, %v2347
    %v2349 = vpop.f32.mrf.mxu0
    %v2350 = vpop.f32.mrf.mxu0
    %v2351 = vpop.f32.mrf.mxu0
    %2352 = vdwg.mxu0
    %2353 = vmatprep.subr.bf16.mxu0 0
    %2354 = vmatpush1.bf16.xpose.msra.mxu0 0
    %2355 = vmatprep.subr.bf16.mxu0 0
    %2356 = vmatpush1.bf16.xpose.msra.mxu0 0
    %2357 = vmatprep.subr.bf16.mxu0 0
    %2358 = vmatpush1.bf16.xpose.msra.mxu0 0
    %2359 = vmatprep.subr.bf16.mxu0 0
    %2360 = vmatpush1.bf16.xpose.msra.mxu0 0
    %2361 = vmatprep.subr.bf16.mxu0 0
    %2362 = vmatpush1.bf16.xpose.msra.mxu0 0
    %2363 = vmatprep.subr.bf16.mxu0 0
    %2364 = vmatpush1.bf16.xpose.msra.mxu0 0
    %2365 = vmatprep.subr.bf16.mxu0 %v1386
    %2366 = vmatpush1.bf16.xpose.msra.mxu0 %v1385
    %2367 = vmatprep.subr.bf16.mxu0 %v1378
    %2368 = vmatpush1.bf16.xpose.msra.mxu0 %v1377
    %2369 = vmatprep.subr.bf16.mxu0 0
    %2370 = vmatpush2.bf16.xpose.msra.mxu0 0
    %2371 = vmatprep.subr.bf16.mxu0 0
    %2372 = vmatpush2.bf16.xpose.msra.mxu0 0
    %2373 = vmatprep.subr.bf16.mxu0 0
    %2374 = vmatpush2.bf16.xpose.msra.mxu0 0
    %2375 = vmatprep.subr.bf16.mxu0 0
    %2376 = vmatpush2.bf16.xpose.msra.mxu0 0
    %2377 = vmatprep.subr.bf16.mxu0 0
    %2378 = vmatpush2.bf16.xpose.msra.mxu0 0
    %2379 = vmatprep.subr.bf16.mxu0 0
    %2380 = vmatpush2.bf16.xpose.msra.mxu0 0
    %2381 = vmatprep.subr.bf16.mxu0 0
    %2382 = vmatpush2.bf16.xpose.msra.mxu0 0
    %2383 = vmatprep.subr.bf16.mxu0 0
    %2384 = vmatpush2.bf16.xpose.msra.mxu0 0
    %2385 = vmatprep.mubr.bf16.mxu0 %v2246
    %2386 = vmatmul.mubr.bf16.gmra.mxu0 %v2245
    %v2387 = vpop.f32.mrf.mxu0
    %v2388 = vadd.f32 %v2340, %v2387
    %v2389 = vpop.f32.mrf.mxu0
    %v2390 = vpop.f32.mrf.mxu0
    %v2391 = vadd.f32 %v2343, %v2390
    %v2392 = vpop.f32.mrf.mxu0
    %2393 = vmatprep.mubr.bf16.mxu0 %v2254
    %2394 = vmatmul.mubr.bf16.gmra.mxu0 %v2253
    %v2395 = vpop.f32.mrf.mxu0
    %v2396 = vadd.f32 %v2348, %v2395
    %v2397 = vpop.f32.mrf.mxu0
    %v2398 = vpop.f32.mrf.mxu0
    %v2399 = vpop.f32.mrf.mxu0
    %2400 = vdwg.mxu0
    %2401 = vmatprep.subr.bf16.mxu0 0
    %2402 = vmatpush1.bf16.xpose.msra.mxu0 0
    %2403 = vmatprep.subr.bf16.mxu0 0
    %2404 = vmatpush1.bf16.xpose.msra.mxu0 0
    %2405 = vmatprep.subr.bf16.mxu0 0
    %2406 = vmatpush1.bf16.xpose.msra.mxu0 0
    %2407 = vmatprep.subr.bf16.mxu0 0
    %2408 = vmatpush1.bf16.xpose.msra.mxu0 0
    %2409 = vmatprep.subr.bf16.mxu0 0
    %2410 = vmatpush1.bf16.xpose.msra.mxu0 0
    %2411 = vmatprep.subr.bf16.mxu0 0
    %2412 = vmatpush1.bf16.xpose.msra.mxu0 0
    %2413 = vmatprep.subr.bf16.mxu0 %v1388
    %2414 = vmatpush1.bf16.xpose.msra.mxu0 %v1387
    %2415 = vmatprep.subr.bf16.mxu0 %v1380
    %2416 = vmatpush1.bf16.xpose.msra.mxu0 %v1379
    %2417 = vmatprep.subr.bf16.mxu0 0
    %2418 = vmatpush2.bf16.xpose.msra.mxu0 0
    %2419 = vmatprep.subr.bf16.mxu0 0
    %2420 = vmatpush2.bf16.xpose.msra.mxu0 0
    %2421 = vmatprep.subr.bf16.mxu0 0
    %2422 = vmatpush2.bf16.xpose.msra.mxu0 0
    %2423 = vmatprep.subr.bf16.mxu0 0
    %2424 = vmatpush2.bf16.xpose.msra.mxu0 0
    %2425 = vmatprep.subr.bf16.mxu0 0
    %2426 = vmatpush2.bf16.xpose.msra.mxu0 0
    %2427 = vmatprep.subr.bf16.mxu0 0
    %2428 = vmatpush2.bf16.xpose.msra.mxu0 0
    %2429 = vmatprep.subr.bf16.mxu0 0
    %2430 = vmatpush2.bf16.xpose.msra.mxu0 0
    %2431 = vmatprep.subr.bf16.mxu0 0
    %2432 = vmatpush2.bf16.xpose.msra.mxu0 0
    %2433 = vmatprep.mubr.bf16.mxu0 %v2248
    %2434 = vmatmul.mubr.bf16.gmra.mxu0 %v2247
    %v2435 = vpop.f32.mrf.mxu0
    %v2436 = vadd.f32 %v2388, %v2435
    %v2437 = vpop.f32.mrf.mxu0
    %v2438 = vpop.f32.mrf.mxu0
    %v2439 = vadd.f32 %v2391, %v2438
    %v2440 = vpop.f32.mrf.mxu0
    %2441 = vmatprep.mubr.bf16.mxu0 %v2256
    %2442 = vmatmul.mubr.bf16.gmra.mxu0 %v2255
    %v2443 = vpop.f32.mrf.mxu0
    %v2444 = vadd.f32 %v2396, %v2443
    %v2445 = vpop.f32.mrf.mxu0
    %v2446 = vpop.f32.mrf.mxu0
    %v2447 = vpop.f32.mrf.mxu0
    %2448 = vdwg.mxu0
    %v2449 = vpack.c.bf16 %v2439, %v2436
    %v2450 = vpack.c.bf16 %v2444, %v2444
    %v2452 = vsel %vm1602, %v2450, 0
    %2454 = vmatprep.subr.bf16.mxu0 0
    %2455 = vmatpush1.bf16.msra.mxu0 0
    %2456 = vmatprep.subr.bf16.mxu0 0
    %2457 = vmatpush1.bf16.msra.mxu0 0
    %2458 = vmatprep.subr.bf16.mxu0 0
    %2459 = vmatpush1.bf16.msra.mxu0 0
    %2460 = vmatprep.subr.bf16.mxu0 0
    %2461 = vmatpush1.bf16.msra.mxu0 0
    %2462 = vmatprep.subr.bf16.mxu0 0
    %2463 = vmatpush1.bf16.msra.mxu0 0
    %2464 = vmatprep.subr.bf16.mxu0 0
    %2465 = vmatpush1.bf16.msra.mxu0 0
    %2466 = vmatprep.subr.bf16.mxu0 0
    %2467 = vmatpush1.bf16.msra.mxu0 %v2452
    %2468 = vmatprep.subr.bf16.mxu0 0
    %2469 = vmatpush1.bf16.msra.mxu0 %v2449
    %2470 = vmatprep.subr.bf16.mxu0 0
    %2471 = vmatpush2.bf16.msra.mxu0 0
    %2472 = vmatprep.subr.bf16.mxu0 0
    %2473 = vmatpush2.bf16.msra.mxu0 0
    %2474 = vmatprep.subr.bf16.mxu0 0
    %2475 = vmatpush2.bf16.msra.mxu0 0
    %2476 = vmatprep.subr.bf16.mxu0 0
    %2477 = vmatpush2.bf16.msra.mxu0 0
    %2478 = vmatprep.subr.bf16.mxu0 0
    %2479 = vmatpush2.bf16.msra.mxu0 0
    %2480 = vmatprep.subr.bf16.mxu0 0
    %2481 = vmatpush2.bf16.msra.mxu0 0
    %2482 = vmatprep.subr.bf16.mxu0 0
    %2483 = vmatpush2.bf16.msra.mxu0 0
    %2484 = vmatprep.subr.bf16.mxu0 0
    %2485 = vmatpush2.bf16.msra.mxu0 0
    %2486 = vmatprep.mubr.bf16.mxu0 0
    %2487 = vmatmul.mubr.bf16.gmra.mxu0 %v1600
    %v2488 = vpop.f32.mrf.mxu0
    %v2489 = vadd.f32 0.0, %v2488
    %v2490 = vpop.f32.mrf.mxu0
    %v2491 = vpop.f32.mrf.mxu0
    %v2492 = vadd.f32 0.0, %v2491
    %v2493 = vpop.f32.mrf.mxu0
    %2494 = vdwg.mxu0
    %v2495 = vmul.f32 %v2489, %v840
    %v2496 = vmul.f32 %v2492, %v841
    %2499 = vrot.lane.b32.xlu0 %v1948, 96
    %v2500 = vpop.permute.xlu0 %2499
    %2501 = vrot.lane.b32.xlu0 %v1949, 96
    %v2502 = vpop.permute.xlu0 %2501
    %v2503 = vsel %vm1034, %v2500, 0
    %v2505 = vsel %vm1034, %v2502, 0
    %2507 = vmatprep.subr.mxu0 0.0
    %2508 = vmatpush1.msra.mxu0 0.0
    %2509 = vmatprep.subr.mxu0 0.0
    %2510 = vmatpush1.msra.mxu0 0.0
    %2511 = vmatprep.subr.mxu0 0.0
    %2512 = vmatpush1.msra.mxu0 0.0
    %2513 = vmatprep.subr.mxu0 0.0
    %2514 = vmatpush1.msra.mxu0 0.0
    %2515 = vmatprep.subr.mxu0 0.0
    %2516 = vmatpush1.msra.mxu0 0.0
    %2517 = vmatprep.subr.mxu0 0.0
    %2518 = vmatpush1.msra.mxu0 0.0
    %2519 = vmatprep.subr.mxu0 0.0
    %2520 = vmatpush1.msra.mxu0 0.0
    %2521 = vmatprep.subr.mxu0 0.0
    %2522 = vmatpush1.msra.mxu0 0.0
    %2523 = vmatprep.subr.mxu0 0.0
    %2524 = vmatpush1.msra.mxu0 0.0
    %2525 = vmatprep.subr.mxu0 0.0
    %2526 = vmatpush1.msra.mxu0 0.0
    %2527 = vmatprep.subr.mxu0 0.0
    %2528 = vmatpush1.msra.mxu0 0.0
    %2529 = vmatprep.subr.mxu0 0.0
    %2530 = vmatpush1.msra.mxu0 0.0
    %2531 = vmatprep.subr.mxu0 0.0
    %2532 = vmatpush1.msra.mxu0 %v852
    %2533 = vmatprep.subr.mxu0 0.0
    %2534 = vmatpush1.msra.mxu0 %v851
    %2535 = vmatprep.subr.mxu0 0.0
    %2536 = vmatpush1.msra.mxu0 %v850
    %2537 = vmatprep.subr.mxu0 0.0
    %2538 = vmatpush1.msra.mxu0 %v849
    %2539 = vmatprep.subr.mxu0 0.0
    %2540 = vmatpush2.msra.mxu0 0.0
    %2541 = vmatprep.subr.mxu0 0.0
    %2542 = vmatpush2.msra.mxu0 0.0
    %2543 = vmatprep.subr.mxu0 0.0
    %2544 = vmatpush2.msra.mxu0 0.0
    %2545 = vmatprep.subr.mxu0 0.0
    %2546 = vmatpush2.msra.mxu0 0.0
    %2547 = vmatprep.subr.mxu0 0.0
    %2548 = vmatpush2.msra.mxu0 0.0
    %2549 = vmatprep.subr.mxu0 0.0
    %2550 = vmatpush2.msra.mxu0 0.0
    %2551 = vmatprep.subr.mxu0 0.0
    %2552 = vmatpush2.msra.mxu0 0.0
    %2553 = vmatprep.subr.mxu0 0.0
    %2554 = vmatpush2.msra.mxu0 0.0
    %2555 = vmatprep.subr.mxu0 0.0
    %2556 = vmatpush2.msra.mxu0 0.0
    %2557 = vmatprep.subr.mxu0 0.0
    %2558 = vmatpush2.msra.mxu0 0.0
    %2559 = vmatprep.subr.mxu0 0.0
    %2560 = vmatpush2.msra.mxu0 0.0
    %2561 = vmatprep.subr.mxu0 0.0
    %2562 = vmatpush2.msra.mxu0 0.0
    %2563 = vmatprep.subr.mxu0 0.0
    %2564 = vmatpush2.msra.mxu0 0.0
    %2565 = vmatprep.subr.mxu0 0.0
    %2566 = vmatpush2.msra.mxu0 0.0
    %2567 = vmatprep.subr.mxu0 0.0
    %2568 = vmatpush2.msra.mxu0 0.0
    %2569 = vmatprep.subr.mxu0 0.0
    %2570 = vmatpush2.msra.mxu0 0.0
    %2571 = vmatprep.mubr.f32.mxu0 0.0
    %2572 = vmatmul.mubr.f32.gmra.mxu0 %v2503
    %v2573 = vpop.f32.mrf.mxu0
    %v2574 = vadd.f32 0.0, %v2573
    %v2575 = vpop.f32.mrf.mxu0
    %2576 = vmatprep.mubr.f32.mxu0 0.0
    %2577 = vmatmul.mubr.f32.gmra.mxu0 %v2505
    %v2578 = vpop.f32.mrf.mxu0
    %v2579 = vadd.f32 0.0, %v2578
    %v2580 = vpop.f32.mrf.mxu0
    %2581 = vdwg.mxu0
    %v2582 = vadd.f32 %v2495, %v2574
    %v2583 = vadd.f32 %v2496, %v2579
    %v2584 = vadd.f32 %v2582, %v857
    %v2585 = vadd.f32 %v2583, %v857
    %v2586 = vmax.f32 %v2584, 0.0
    %v2587 = vmax.f32 %v2585, 0.0
    %v2589 = vsel %vm1034, %v2586, 0
    %v2592 = vsel %vm1034, %v2587, 0
    %2594 = vmatprep.subr.mxu0 0.0
    %2595 = vmatpush1.msra.mxu0 0.0
    %2596 = vmatprep.subr.mxu0 0.0
    %2597 = vmatpush1.msra.mxu0 0.0
    %2598 = vmatprep.subr.mxu0 0.0
    %2599 = vmatpush1.msra.mxu0 0.0
    %2600 = vmatprep.subr.mxu0 0.0
    %2601 = vmatpush1.msra.mxu0 0.0
    %2602 = vmatprep.subr.mxu0 0.0
    %2603 = vmatpush1.msra.mxu0 0.0
    %2604 = vmatprep.subr.mxu0 0.0
    %2605 = vmatpush1.msra.mxu0 0.0
    %2606 = vmatprep.subr.mxu0 0.0
    %2607 = vmatpush1.msra.mxu0 0.0
    %2608 = vmatprep.subr.mxu0 0.0
    %2609 = vmatpush1.msra.mxu0 0.0
    %2610 = vmatprep.subr.mxu0 0.0
    %2611 = vmatpush1.msra.mxu0 0.0
    %2612 = vmatprep.subr.mxu0 0.0
    %2613 = vmatpush1.msra.mxu0 0.0
    %2614 = vmatprep.subr.mxu0 0.0
    %2615 = vmatpush1.msra.mxu0 0.0
    %2616 = vmatprep.subr.mxu0 0.0
    %2617 = vmatpush1.msra.mxu0 0.0
    %2618 = vmatprep.subr.mxu0 0.0
    %2619 = vmatpush1.msra.mxu0 %v861
    %2620 = vmatprep.subr.mxu0 0.0
    %2621 = vmatpush1.msra.mxu0 %v860
    %2622 = vmatprep.subr.mxu0 0.0
    %2623 = vmatpush1.msra.mxu0 %v859
    %2624 = vmatprep.subr.mxu0 0.0
    %2625 = vmatpush1.msra.mxu0 %v858
    %2626 = vmatprep.subr.mxu0 0.0
    %2627 = vmatpush2.msra.mxu0 0.0
    %2628 = vmatprep.subr.mxu0 0.0
    %2629 = vmatpush2.msra.mxu0 0.0
    %2630 = vmatprep.subr.mxu0 0.0
    %2631 = vmatpush2.msra.mxu0 0.0
    %2632 = vmatprep.subr.mxu0 0.0
    %2633 = vmatpush2.msra.mxu0 0.0
    %2634 = vmatprep.subr.mxu0 0.0
    %2635 = vmatpush2.msra.mxu0 0.0
    %2636 = vmatprep.subr.mxu0 0.0
    %2637 = vmatpush2.msra.mxu0 0.0
    %2638 = vmatprep.subr.mxu0 0.0
    %2639 = vmatpush2.msra.mxu0 0.0
    %2640 = vmatprep.subr.mxu0 0.0
    %2641 = vmatpush2.msra.mxu0 0.0
    %2642 = vmatprep.subr.mxu0 0.0
    %2643 = vmatpush2.msra.mxu0 0.0
    %2644 = vmatprep.subr.mxu0 0.0
    %2645 = vmatpush2.msra.mxu0 0.0
    %2646 = vmatprep.subr.mxu0 0.0
    %2647 = vmatpush2.msra.mxu0 0.0
    %2648 = vmatprep.subr.mxu0 0.0
    %2649 = vmatpush2.msra.mxu0 0.0
    %2650 = vmatprep.subr.mxu0 0.0
    %2651 = vmatpush2.msra.mxu0 0.0
    %2652 = vmatprep.subr.mxu0 0.0
    %2653 = vmatpush2.msra.mxu0 0.0
    %2654 = vmatprep.subr.mxu0 0.0
    %2655 = vmatpush2.msra.mxu0 0.0
    %2656 = vmatprep.subr.mxu0 0.0
    %2657 = vmatpush2.msra.mxu0 0.0
    %2658 = vmatprep.mubr.f32.mxu0 0.0
    %2659 = vmatmul.mubr.f32.gmra.mxu0 %v2589
    %v2660 = vpop.f32.mrf.mxu0
    %v2661 = vadd.f32 %v871, %v2660
    %v2662 = vpop.f32.mrf.mxu0
    %2663 = vmatprep.mubr.f32.mxu0 0.0
    %2664 = vmatmul.mubr.f32.gmra.mxu0 %v2592
    %v2665 = vpop.f32.mrf.mxu0
    %v2666 = vadd.f32 %v871, %v2665
    %v2667 = vpop.f32.mrf.mxu0
    %2668 = vdwg.mxu0
    %2669 = vmatprep.subr.mxu0 0.0
    %2670 = vmatpush1.msra.mxu0 0.0
    %2671 = vmatprep.subr.mxu0 0.0
    %2672 = vmatpush1.msra.mxu0 0.0
    %2673 = vmatprep.subr.mxu0 0.0
    %2674 = vmatpush1.msra.mxu0 0.0
    %2675 = vmatprep.subr.mxu0 0.0
    %2676 = vmatpush1.msra.mxu0 0.0
    %2677 = vmatprep.subr.mxu0 0.0
    %2678 = vmatpush1.msra.mxu0 0.0
    %2679 = vmatprep.subr.mxu0 0.0
    %2680 = vmatpush1.msra.mxu0 0.0
    %2681 = vmatprep.subr.mxu0 0.0
    %2682 = vmatpush1.msra.mxu0 0.0
    %2683 = vmatprep.subr.mxu0 0.0
    %2684 = vmatpush1.msra.mxu0 0.0
    %2685 = vmatprep.subr.mxu0 0.0
    %2686 = vmatpush1.msra.mxu0 0.0
    %2687 = vmatprep.subr.mxu0 0.0
    %2688 = vmatpush1.msra.mxu0 0.0
    %2689 = vmatprep.subr.mxu0 0.0
    %2690 = vmatpush1.msra.mxu0 0.0
    %2691 = vmatprep.subr.mxu0 0.0
    %2692 = vmatpush1.msra.mxu0 0.0
    %2693 = vmatprep.subr.mxu0 0.0
    %2694 = vmatpush1.msra.mxu0 %v866
    %2695 = vmatprep.subr.mxu0 0.0
    %2696 = vmatpush1.msra.mxu0 %v865
    %2697 = vmatprep.subr.mxu0 0.0
    %2698 = vmatpush1.msra.mxu0 %v864
    %2699 = vmatprep.subr.mxu0 0.0
    %2700 = vmatpush1.msra.mxu0 %v863
    %2701 = vmatprep.subr.mxu0 0.0
    %2702 = vmatpush2.msra.mxu0 0.0
    %2703 = vmatprep.subr.mxu0 0.0
    %2704 = vmatpush2.msra.mxu0 0.0
    %2705 = vmatprep.subr.mxu0 0.0
    %2706 = vmatpush2.msra.mxu0 0.0
    %2707 = vmatprep.subr.mxu0 0.0
    %2708 = vmatpush2.msra.mxu0 0.0
    %2709 = vmatprep.subr.mxu0 0.0
    %2710 = vmatpush2.msra.mxu0 0.0
    %2711 = vmatprep.subr.mxu0 0.0
    %2712 = vmatpush2.msra.mxu0 0.0
    %2713 = vmatprep.subr.mxu0 0.0
    %2714 = vmatpush2.msra.mxu0 0.0
    %2715 = vmatprep.subr.mxu0 0.0
    %2716 = vmatpush2.msra.mxu0 0.0
    %2717 = vmatprep.subr.mxu0 0.0
    %2718 = vmatpush2.msra.mxu0 0.0
    %2719 = vmatprep.subr.mxu0 0.0
    %2720 = vmatpush2.msra.mxu0 0.0
    %2721 = vmatprep.subr.mxu0 0.0
    %2722 = vmatpush2.msra.mxu0 0.0
    %2723 = vmatprep.subr.mxu0 0.0
    %2724 = vmatpush2.msra.mxu0 0.0
    %2725 = vmatprep.subr.mxu0 0.0
    %2726 = vmatpush2.msra.mxu0 0.0
    %2727 = vmatprep.subr.mxu0 0.0
    %2728 = vmatpush2.msra.mxu0 0.0
    %2729 = vmatprep.subr.mxu0 0.0
    %2730 = vmatpush2.msra.mxu0 0.0
    %2731 = vmatprep.subr.mxu0 0.0
    %2732 = vmatpush2.msra.mxu0 0.0
    %2733 = vmatprep.mubr.f32.mxu0 0.0
    %2734 = vmatmul.mubr.f32.gmra.mxu0 %v2503
    %v2735 = vpop.f32.mrf.mxu0
    %v2736 = vadd.f32 %v875, %v2735
    %v2737 = vpop.f32.mrf.mxu0
    %2738 = vmatprep.mubr.f32.mxu0 0.0
    %2739 = vmatmul.mubr.f32.gmra.mxu0 %v2505
    %v2740 = vpop.f32.mrf.mxu0
    %v2741 = vadd.f32 %v875, %v2740
    %v2742 = vpop.f32.mrf.mxu0
    %2743 = vdwg.mxu0
    %v2744 = vadd.f32 %v2661, %v2736
    %v2745 = vadd.f32 %v2666, %v2741
    %v2746 = vxor.u32 %v2744, 2147483648
    %v2747 = vxor.u32 %v2745, 2147483648
    %v2748 = vmul.f32 %v2746, 1.442695
    %v2749 = vpow.pop %v2748
    %v2750 = vmul.f32 %v2747, 1.442695
    %v2751 = vpow.pop %v2750
    %v2752 = vadd.f32 %v2749, 1.0
    %v2753 = vadd.f32 %v2751, 1.0
    %v2754 = vrcp.pop %v2752
    %v2755 = vmul.f32 1.0, %v2754
    %v2756 = vrcp.pop %v2753
    %v2757 = vmul.f32 1.0, %v2756
    %2760 = vrot.lane.b32.xlu0 %v2736, 64
    %v2761 = vpop.permute.xlu0 %2760
    %2762 = vrot.lane.b32.xlu0 %v2741, 64
    %v2763 = vpop.permute.xlu0 %2762
    %v2766 = vmul.f32 %v2755, %v2761
    %v2767 = vmul.f32 %v2757, %v2763
    %2770 = vrot.lane.b32.xlu0 %v2766, 64
    %v2771 = vpop.permute.xlu0 %2770
    %2772 = vrot.lane.b32.xlu0 %v2767, 64
    %v2773 = vpop.permute.xlu0 %2772
    %v2776 = vadd.f32 %v2661, %v2771
    %v2777 = vadd.f32 %v2666, %v2773
    %v2778 = vtanh.pop %v2776
    %v2779 = vtanh.pop %v2777
    %v2780 = vsub.f32 1.0, %v2755
    %v2781 = vsub.f32 1.0, %v2757
    %2784 = vrot.lane.b32.xlu0 %v2778, 96
    %v2785 = vpop.permute.xlu0 %2784
    %2786 = vrot.lane.b32.xlu0 %v2779, 96
    %v2787 = vpop.permute.xlu0 %2786
    %v2790 = vmul.f32 %v2780, %v2785
    %v2791 = vmul.f32 %v2781, %v2787
    %v2792 = vmul.f32 %v2755, %v1948
    %v2793 = vmul.f32 %v2757, %v1949
    %v2794 = vadd.f32 %v2790, %v2792
    %v2795 = vadd.f32 %v2791, %v2793
    %v2796 = vpack.c.bf16 %v2795, %v2794
    %2798 = vrot.lane.b32.xlu0 %v2796, 96
    %v2799 = vpop.permute.xlu0 %2798
    %v2801 = vsel %vm884, %v2799, 0
    %2803 = vmatprep.subr.bf16.mxu0 0
    %2804 = vmatpush1.bf16.msra.mxu0 0
    %2805 = vmatprep.subr.bf16.mxu0 0
    %2806 = vmatpush1.bf16.msra.mxu0 0
    %2807 = vmatprep.subr.bf16.mxu0 0
    %2808 = vmatpush1.bf16.msra.mxu0 0
    %2809 = vmatprep.subr.bf16.mxu0 0
    %2810 = vmatpush1.bf16.msra.mxu0 0
    %2811 = vmatprep.subr.bf16.mxu0 0
    %2812 = vmatpush1.bf16.msra.mxu0 0
    %2813 = vmatprep.subr.bf16.mxu0 0
    %2814 = vmatpush1.bf16.msra.mxu0 0
    %2815 = vmatprep.subr.bf16.mxu0 0
    %2816 = vmatpush1.bf16.msra.mxu0 0
    %2817 = vmatprep.subr.bf16.mxu0 0
    %2818 = vmatpush1.bf16.msra.mxu0 %v2801
    %2819 = vmatprep.subr.bf16.mxu0 0
    %2820 = vmatpush2.bf16.msra.mxu0 0
    %2821 = vmatprep.subr.bf16.mxu0 0
    %2822 = vmatpush2.bf16.msra.mxu0 0
    %2823 = vmatprep.subr.bf16.mxu0 0
    %2824 = vmatpush2.bf16.msra.mxu0 0
    %2825 = vmatprep.subr.bf16.mxu0 0
    %2826 = vmatpush2.bf16.msra.mxu0 0
    %2827 = vmatprep.subr.bf16.mxu0 0
    %2828 = vmatpush2.bf16.msra.mxu0 0
    %2829 = vmatprep.subr.bf16.mxu0 0
    %2830 = vmatpush2.bf16.msra.mxu0 0
    %2831 = vmatprep.subr.bf16.mxu0 0
    %2832 = vmatpush2.bf16.msra.mxu0 0
    %2833 = vmatprep.subr.bf16.mxu0 0
    %2834 = vmatpush2.bf16.msra.mxu0 0
    %2835 = vmatprep.mubr.bf16.mxu0 0
    %2836 = vmatmul.mubr.bf16.gmra.mxu0 %v879
    %v2837 = vpop.f32.mrf.mxu0
    %v2838 = vadd.f32 0.0, %v2837
    %v2839 = vpop.f32.mrf.mxu0
    %v2840 = vpop.f32.mrf.mxu0
    %v2841 = vadd.f32 0.0, %v2840
    %v2842 = vpop.f32.mrf.mxu0
    %2843 = vmatprep.mubr.bf16.mxu0 0
    %2844 = vmatmul.mubr.bf16.gmra.mxu0 %v882
    %v2845 = vpop.f32.mrf.mxu0
    %v2846 = vadd.f32 0.0, %v2845
    %v2847 = vpop.f32.mrf.mxu0
    %v2848 = vpop.f32.mrf.mxu0
    %v2849 = vpop.f32.mrf.mxu0
    %2850 = vdwg.mxu0
    %v2851 = vpack.c.bf16 %v2841, %v2838
    %v2852 = vpack.c.bf16 %v2846, %v2846
    %v2854 = vsel %vm1034, %v2851, 0
    %v2857 = vsel %vm1034, %v2852, 0
    %2859 = vmatprep.subr.bf16.mxu0 0
    %2860 = vmatpush1.bf16.msra.mxu0 0
    %2861 = vmatprep.subr.bf16.mxu0 0
    %2862 = vmatpush1.bf16.msra.mxu0 0
    %2863 = vmatprep.subr.bf16.mxu0 0
    %2864 = vmatpush1.bf16.msra.mxu0 0
    %2865 = vmatprep.subr.bf16.mxu0 0
    %2866 = vmatpush1.bf16.msra.mxu0 0
    %2867 = vmatprep.subr.bf16.mxu0 0
    %2868 = vmatpush1.bf16.msra.mxu0 0
    %2869 = vmatprep.subr.bf16.mxu0 0
    %2870 = vmatpush1.bf16.msra.mxu0 0
    %2871 = vmatprep.subr.bf16.mxu0 %v1011
    %2872 = vmatpush1.bf16.msra.mxu0 %v1010
    %2873 = vmatprep.subr.bf16.mxu0 %v1003
    %2874 = vmatpush1.bf16.msra.mxu0 %v1002
    %2875 = vmatprep.subr.bf16.mxu0 0
    %2876 = vmatpush2.bf16.msra.mxu0 0
    %2877 = vmatprep.subr.bf16.mxu0 0
    %2878 = vmatpush2.bf16.msra.mxu0 0
    %2879 = vmatprep.subr.bf16.mxu0 0
    %2880 = vmatpush2.bf16.msra.mxu0 0
    %2881 = vmatprep.subr.bf16.mxu0 0
    %2882 = vmatpush2.bf16.msra.mxu0 0
    %2883 = vmatprep.subr.bf16.mxu0 0
    %2884 = vmatpush2.bf16.msra.mxu0 0
    %2885 = vmatprep.subr.bf16.mxu0 0
    %2886 = vmatpush2.bf16.msra.mxu0 0
    %2887 = vmatprep.subr.bf16.mxu0 0
    %2888 = vmatpush2.bf16.msra.mxu0 0
    %2889 = vmatprep.subr.bf16.mxu0 0
    %2890 = vmatpush2.bf16.msra.mxu0 0
    %2891 = vmatprep.mubr.bf16.mxu0 0
    %2892 = vmatmul.mubr.bf16.gmra.mxu0 %v2854
    %v2893 = vpop.f32.mrf.mxu0
    %v2894 = vadd.f32 0.0, %v2893
    %v2895 = vpop.f32.mrf.mxu0
    %v2896 = vadd.f32 0.0, %v2895
    %v2897 = vpop.f32.mrf.mxu0
    %v2898 = vadd.f32 0.0, %v2897
    %v2899 = vpop.f32.mrf.mxu0
    %v2900 = vadd.f32 0.0, %v2899
    %2901 = vmatprep.mubr.bf16.mxu0 0
    %2902 = vmatmul.mubr.bf16.gmra.mxu0 %v2857
    %v2903 = vpop.f32.mrf.mxu0
    %v2904 = vadd.f32 0.0, %v2903
    %v2905 = vpop.f32.mrf.mxu0
    %v2906 = vadd.f32 0.0, %v2905
    %v2907 = vpop.f32.mrf.mxu0
    %v2908 = vpop.f32.mrf.mxu0
    %2909 = vdwg.mxu0
    %2910 = vmatprep.subr.bf16.mxu0 0
    %2911 = vmatpush1.bf16.msra.mxu0 0
    %2912 = vmatprep.subr.bf16.mxu0 0
    %2913 = vmatpush1.bf16.msra.mxu0 0
    %2914 = vmatprep.subr.bf16.mxu0 0
    %2915 = vmatpush1.bf16.msra.mxu0 0
    %2916 = vmatprep.subr.bf16.mxu0 0
    %2917 = vmatpush1.bf16.msra.mxu0 0
    %2918 = vmatprep.subr.bf16.mxu0 0
    %2919 = vmatpush1.bf16.msra.mxu0 0
    %2920 = vmatprep.subr.bf16.mxu0 0
    %2921 = vmatpush1.bf16.msra.mxu0 0
    %2922 = vmatprep.subr.bf16.mxu0 %v1013
    %2923 = vmatpush1.bf16.msra.mxu0 %v1012
    %2924 = vmatprep.subr.bf16.mxu0 %v1005
    %2925 = vmatpush1.bf16.msra.mxu0 %v1004
    %2926 = vmatprep.subr.bf16.mxu0 0
    %2927 = vmatpush2.bf16.msra.mxu0 0
    %2928 = vmatprep.subr.bf16.mxu0 0
    %2929 = vmatpush2.bf16.msra.mxu0 0
    %2930 = vmatprep.subr.bf16.mxu0 0
    %2931 = vmatpush2.bf16.msra.mxu0 0
    %2932 = vmatprep.subr.bf16.mxu0 0
    %2933 = vmatpush2.bf16.msra.mxu0 0
    %2934 = vmatprep.subr.bf16.mxu0 0
    %2935 = vmatpush2.bf16.msra.mxu0 0
    %2936 = vmatprep.subr.bf16.mxu0 0
    %2937 = vmatpush2.bf16.msra.mxu0 0
    %2938 = vmatprep.subr.bf16.mxu0 0
    %2939 = vmatpush2.bf16.msra.mxu0 0
    %2940 = vmatprep.subr.bf16.mxu0 0
    %2941 = vmatpush2.bf16.msra.mxu0 0
    %2942 = vmatprep.mubr.bf16.mxu0 0
    %2943 = vmatmul.mubr.bf16.gmra.mxu0 %v2854
    %v2944 = vpop.f32.mrf.mxu0
    %v2945 = vadd.f32 0.0, %v2944
    %v2946 = vpop.f32.mrf.mxu0
    %v2947 = vadd.f32 0.0, %v2946
    %v2948 = vpop.f32.mrf.mxu0
    %v2949 = vadd.f32 0.0, %v2948
    %v2950 = vpop.f32.mrf.mxu0
    %v2951 = vadd.f32 0.0, %v2950
    %2952 = vmatprep.mubr.bf16.mxu0 0
    %2953 = vmatmul.mubr.bf16.gmra.mxu0 %v2857
    %v2954 = vpop.f32.mrf.mxu0
    %v2955 = vadd.f32 0.0, %v2954
    %v2956 = vpop.f32.mrf.mxu0
    %v2957 = vadd.f32 0.0, %v2956
    %v2958 = vpop.f32.mrf.mxu0
    %v2959 = vpop.f32.mrf.mxu0
    %2960 = vdwg.mxu0
    %2961 = vmatprep.subr.bf16.mxu0 0
    %2962 = vmatpush1.bf16.msra.mxu0 0
    %2963 = vmatprep.subr.bf16.mxu0 0
    %2964 = vmatpush1.bf16.msra.mxu0 0
    %2965 = vmatprep.subr.bf16.mxu0 0
    %2966 = vmatpush1.bf16.msra.mxu0 0
    %2967 = vmatprep.subr.bf16.mxu0 0
    %2968 = vmatpush1.bf16.msra.mxu0 0
    %2969 = vmatprep.subr.bf16.mxu0 0
    %2970 = vmatpush1.bf16.msra.mxu0 0
    %2971 = vmatprep.subr.bf16.mxu0 0
    %2972 = vmatpush1.bf16.msra.mxu0 0
    %2973 = vmatprep.subr.bf16.mxu0 %v1015
    %2974 = vmatpush1.bf16.msra.mxu0 %v1014
    %2975 = vmatprep.subr.bf16.mxu0 %v1007
    %2976 = vmatpush1.bf16.msra.mxu0 %v1006
    %2977 = vmatprep.subr.bf16.mxu0 0
    %2978 = vmatpush2.bf16.msra.mxu0 0
    %2979 = vmatprep.subr.bf16.mxu0 0
    %2980 = vmatpush2.bf16.msra.mxu0 0
    %2981 = vmatprep.subr.bf16.mxu0 0
    %2982 = vmatpush2.bf16.msra.mxu0 0
    %2983 = vmatprep.subr.bf16.mxu0 0
    %2984 = vmatpush2.bf16.msra.mxu0 0
    %2985 = vmatprep.subr.bf16.mxu0 0
    %2986 = vmatpush2.bf16.msra.mxu0 0
    %2987 = vmatprep.subr.bf16.mxu0 0
    %2988 = vmatpush2.bf16.msra.mxu0 0
    %2989 = vmatprep.subr.bf16.mxu0 0
    %2990 = vmatpush2.bf16.msra.mxu0 0
    %2991 = vmatprep.subr.bf16.mxu0 0
    %2992 = vmatpush2.bf16.msra.mxu0 0
    %2993 = vmatprep.mubr.bf16.mxu0 0
    %2994 = vmatmul.mubr.bf16.gmra.mxu0 %v2854
    %v2995 = vpop.f32.mrf.mxu0
    %v2996 = vadd.f32 0.0, %v2995
    %v2997 = vpop.f32.mrf.mxu0
    %v2998 = vadd.f32 0.0, %v2997
    %v2999 = vpop.f32.mrf.mxu0
    %v3000 = vadd.f32 0.0, %v2999
    %v3001 = vpop.f32.mrf.mxu0
    %v3002 = vadd.f32 0.0, %v3001
    %3003 = vmatprep.mubr.bf16.mxu0 0
    %3004 = vmatmul.mubr.bf16.gmra.mxu0 %v2857
    %v3005 = vpop.f32.mrf.mxu0
    %v3006 = vadd.f32 0.0, %v3005
    %v3007 = vpop.f32.mrf.mxu0
    %v3008 = vadd.f32 0.0, %v3007
    %v3009 = vpop.f32.mrf.mxu0
    %v3010 = vpop.f32.mrf.mxu0
    %3011 = vdwg.mxu0
    %3012 = vmatprep.subr.bf16.mxu0 0
    %3013 = vmatpush1.bf16.msra.mxu0 0
    %3014 = vmatprep.subr.bf16.mxu0 0
    %3015 = vmatpush1.bf16.msra.mxu0 0
    %3016 = vmatprep.subr.bf16.mxu0 0
    %3017 = vmatpush1.bf16.msra.mxu0 0
    %3018 = vmatprep.subr.bf16.mxu0 0
    %3019 = vmatpush1.bf16.msra.mxu0 0
    %3020 = vmatprep.subr.bf16.mxu0 0
    %3021 = vmatpush1.bf16.msra.mxu0 0
    %3022 = vmatprep.subr.bf16.mxu0 0
    %3023 = vmatpush1.bf16.msra.mxu0 0
    %3024 = vmatprep.subr.bf16.mxu0 %v1017
    %3025 = vmatpush1.bf16.msra.mxu0 %v1016
    %3026 = vmatprep.subr.bf16.mxu0 %v1009
    %3027 = vmatpush1.bf16.msra.mxu0 %v1008
    %3028 = vmatprep.subr.bf16.mxu0 0
    %3029 = vmatpush2.bf16.msra.mxu0 0
    %3030 = vmatprep.subr.bf16.mxu0 0
    %3031 = vmatpush2.bf16.msra.mxu0 0
    %3032 = vmatprep.subr.bf16.mxu0 0
    %3033 = vmatpush2.bf16.msra.mxu0 0
    %3034 = vmatprep.subr.bf16.mxu0 0
    %3035 = vmatpush2.bf16.msra.mxu0 0
    %3036 = vmatprep.subr.bf16.mxu0 0
    %3037 = vmatpush2.bf16.msra.mxu0 0
    %3038 = vmatprep.subr.bf16.mxu0 0
    %3039 = vmatpush2.bf16.msra.mxu0 0
    %3040 = vmatprep.subr.bf16.mxu0 0
    %3041 = vmatpush2.bf16.msra.mxu0 0
    %3042 = vmatprep.subr.bf16.mxu0 0
    %3043 = vmatpush2.bf16.msra.mxu0 0
    %3044 = vmatprep.mubr.bf16.mxu0 0
    %3045 = vmatmul.mubr.bf16.gmra.mxu0 %v2854
    %v3046 = vpop.f32.mrf.mxu0
    %v3047 = vadd.f32 0.0, %v3046
    %v3048 = vpop.f32.mrf.mxu0
    %v3049 = vadd.f32 0.0, %v3048
    %v3050 = vpop.f32.mrf.mxu0
    %v3051 = vadd.f32 0.0, %v3050
    %v3052 = vpop.f32.mrf.mxu0
    %v3053 = vadd.f32 0.0, %v3052
    %3054 = vmatprep.mubr.bf16.mxu0 0
    %3055 = vmatmul.mubr.bf16.gmra.mxu0 %v2857
    %v3056 = vpop.f32.mrf.mxu0
    %v3057 = vadd.f32 0.0, %v3056
    %v3058 = vpop.f32.mrf.mxu0
    %v3059 = vadd.f32 0.0, %v3058
    %v3060 = vpop.f32.mrf.mxu0
    %v3061 = vpop.f32.mrf.mxu0
    %3062 = vdwg.mxu0
    %v3063 = vmul.f32 %v2894, %v1245
    %v3064 = vmul.f32 %v2896, %v1246
    %v3065 = vmul.f32 %v2945, %v1247
    %v3066 = vmul.f32 %v2947, %v1248
    %v3067 = vmul.f32 %v2996, %v1249
    %v3068 = vmul.f32 %v2998, %v1250
    %v3069 = vmul.f32 %v3047, %v1251
    %v3070 = vmul.f32 %v3049, %v1252
    %v3071 = vmul.f32 %v2898, %v1253
    %v3072 = vmul.f32 %v2900, %v1254
    %v3073 = vmul.f32 %v2949, %v1255
    %v3074 = vmul.f32 %v2951, %v1256
    %v3075 = vmul.f32 %v3000, %v1257
    %v3076 = vmul.f32 %v3002, %v1258
    %v3077 = vmul.f32 %v3051, %v1259
    %v3078 = vmul.f32 %v3053, %v1260
    %v3079 = vmul.f32 %v2904, %v1261
    %v3080 = vmul.f32 %v2906, %v1262
    %v3081 = vmul.f32 %v2955, %v1263
    %v3082 = vmul.f32 %v2957, %v1264
    %v3083 = vmul.f32 %v3006, %v1265
    %v3084 = vmul.f32 %v3008, %v1266
    %v3085 = vmul.f32 %v3057, %v1267
    %v3086 = vmul.f32 %v3059, %v1268
    %v3087 = vpack.c.bf16 %v3071, %v3063
    %v3088 = vpack.c.bf16 %v3072, %v3064
    %v3089 = vpack.c.bf16 %v3073, %v3065
    %v3090 = vpack.c.bf16 %v3074, %v3066
    %v3091 = vpack.c.bf16 %v3075, %v3067
    %v3092 = vpack.c.bf16 %v3076, %v3068
    %v3093 = vpack.c.bf16 %v3077, %v3069
    %v3094 = vpack.c.bf16 %v3078, %v3070
    %v3095 = vpack.c.bf16 %v3079, %v3079
    %v3096 = vpack.c.bf16 %v3080, %v3080
    %v3097 = vpack.c.bf16 %v3081, %v3081
    %v3098 = vpack.c.bf16 %v3082, %v3082
    %v3099 = vpack.c.bf16 %v3083, %v3083
    %v3100 = vpack.c.bf16 %v3084, %v3084
    %v3101 = vpack.c.bf16 %v3085, %v3085
    %v3102 = vpack.c.bf16 %v3086, %v3086
    %3103 = vmatprep.subr.bf16.mxu0 0
    %3104 = vmatpush1.bf16.xpose.msra.mxu0 0
    %3105 = vmatprep.subr.bf16.mxu0 0
    %3106 = vmatpush1.bf16.xpose.msra.mxu0 0
    %3107 = vmatprep.subr.bf16.mxu0 0
    %3108 = vmatpush1.bf16.xpose.msra.mxu0 0
    %3109 = vmatprep.subr.bf16.mxu0 0
    %3110 = vmatpush1.bf16.xpose.msra.mxu0 0
    %3111 = vmatprep.subr.bf16.mxu0 0
    %3112 = vmatpush1.bf16.xpose.msra.mxu0 0
    %3113 = vmatprep.subr.bf16.mxu0 0
    %3114 = vmatpush1.bf16.xpose.msra.mxu0 0
    %3115 = vmatprep.subr.bf16.mxu0 %v1382
    %3116 = vmatpush1.bf16.xpose.msra.mxu0 %v1381
    %3117 = vmatprep.subr.bf16.mxu0 %v1374
    %3118 = vmatpush1.bf16.xpose.msra.mxu0 %v1373
    %3119 = vmatprep.subr.bf16.mxu0 0
    %3120 = vmatpush2.bf16.xpose.msra.mxu0 0
    %3121 = vmatprep.subr.bf16.mxu0 0
    %3122 = vmatpush2.bf16.xpose.msra.mxu0 0
    %3123 = vmatprep.subr.bf16.mxu0 0
    %3124 = vmatpush2.bf16.xpose.msra.mxu0 0
    %3125 = vmatprep.subr.bf16.mxu0 0
    %3126 = vmatpush2.bf16.xpose.msra.mxu0 0
    %3127 = vmatprep.subr.bf16.mxu0 0
    %3128 = vmatpush2.bf16.xpose.msra.mxu0 0
    %3129 = vmatprep.subr.bf16.mxu0 0
    %3130 = vmatpush2.bf16.xpose.msra.mxu0 0
    %3131 = vmatprep.subr.bf16.mxu0 0
    %3132 = vmatpush2.bf16.xpose.msra.mxu0 0
    %3133 = vmatprep.subr.bf16.mxu0 0
    %3134 = vmatpush2.bf16.xpose.msra.mxu0 0
    %3135 = vmatprep.mubr.bf16.mxu0 %v3088
    %3136 = vmatmul.mubr.bf16.gmra.mxu0 %v3087
    %v3137 = vpop.f32.mrf.mxu0
    %v3138 = vadd.f32 0.0, %v3137
    %v3139 = vpop.f32.mrf.mxu0
    %v3140 = vpop.f32.mrf.mxu0
    %v3141 = vadd.f32 0.0, %v3140
    %v3142 = vpop.f32.mrf.mxu0
    %3143 = vmatprep.mubr.bf16.mxu0 %v3096
    %3144 = vmatmul.mubr.bf16.gmra.mxu0 %v3095
    %v3145 = vpop.f32.mrf.mxu0
    %v3146 = vadd.f32 0.0, %v3145
    %v3147 = vpop.f32.mrf.mxu0
    %v3148 = vpop.f32.mrf.mxu0
    %v3149 = vpop.f32.mrf.mxu0
    %3150 = vdwg.mxu0
    %3151 = vmatprep.subr.bf16.mxu0 0
    %3152 = vmatpush1.bf16.xpose.msra.mxu0 0
    %3153 = vmatprep.subr.bf16.mxu0 0
    %3154 = vmatpush1.bf16.xpose.msra.mxu0 0
    %3155 = vmatprep.subr.bf16.mxu0 0
    %3156 = vmatpush1.bf16.xpose.msra.mxu0 0
    %3157 = vmatprep.subr.bf16.mxu0 0
    %3158 = vmatpush1.bf16.xpose.msra.mxu0 0
    %3159 = vmatprep.subr.bf16.mxu0 0
    %3160 = vmatpush1.bf16.xpose.msra.mxu0 0
    %3161 = vmatprep.subr.bf16.mxu0 0
    %3162 = vmatpush1.bf16.xpose.msra.mxu0 0
    %3163 = vmatprep.subr.bf16.mxu0 %v1384
    %3164 = vmatpush1.bf16.xpose.msra.mxu0 %v1383
    %3165 = vmatprep.subr.bf16.mxu0 %v1376
    %3166 = vmatpush1.bf16.xpose.msra.mxu0 %v1375
    %3167 = vmatprep.subr.bf16.mxu0 0
    %3168 = vmatpush2.bf16.xpose.msra.mxu0 0
    %3169 = vmatprep.subr.bf16.mxu0 0
    %3170 = vmatpush2.bf16.xpose.msra.mxu0 0
    %3171 = vmatprep.subr.bf16.mxu0 0
    %3172 = vmatpush2.bf16.xpose.msra.mxu0 0
    %3173 = vmatprep.subr.bf16.mxu0 0
    %3174 = vmatpush2.bf16.xpose.msra.mxu0 0
    %3175 = vmatprep.subr.bf16.mxu0 0
    %3176 = vmatpush2.bf16.xpose.msra.mxu0 0
    %3177 = vmatprep.subr.bf16.mxu0 0
    %3178 = vmatpush2.bf16.xpose.msra.mxu0 0
    %3179 = vmatprep.subr.bf16.mxu0 0
    %3180 = vmatpush2.bf16.xpose.msra.mxu0 0
    %3181 = vmatprep.subr.bf16.mxu0 0
    %3182 = vmatpush2.bf16.xpose.msra.mxu0 0
    %3183 = vmatprep.mubr.bf16.mxu0 %v3090
    %3184 = vmatmul.mubr.bf16.gmra.mxu0 %v3089
    %v3185 = vpop.f32.mrf.mxu0
    %v3186 = vadd.f32 %v3138, %v3185
    %v3187 = vpop.f32.mrf.mxu0
    %v3188 = vpop.f32.mrf.mxu0
    %v3189 = vadd.f32 %v3141, %v3188
    %v3190 = vpop.f32.mrf.mxu0
    %3191 = vmatprep.mubr.bf16.mxu0 %v3098
    %3192 = vmatmul.mubr.bf16.gmra.mxu0 %v3097
    %v3193 = vpop.f32.mrf.mxu0
    %v3194 = vadd.f32 %v3146, %v3193
    %v3195 = vpop.f32.mrf.mxu0
    %v3196 = vpop.f32.mrf.mxu0
    %v3197 = vpop.f32.mrf.mxu0
    %3198 = vdwg.mxu0
    %3199 = vmatprep.subr.bf16.mxu0 0
    %3200 = vmatpush1.bf16.xpose.msra.mxu0 0
    %3201 = vmatprep.subr.bf16.mxu0 0
    %3202 = vmatpush1.bf16.xpose.msra.mxu0 0
    %3203 = vmatprep.subr.bf16.mxu0 0
    %3204 = vmatpush1.bf16.xpose.msra.mxu0 0
    %3205 = vmatprep.subr.bf16.mxu0 0
    %3206 = vmatpush1.bf16.xpose.msra.mxu0 0
    %3207 = vmatprep.subr.bf16.mxu0 0
    %3208 = vmatpush1.bf16.xpose.msra.mxu0 0
    %3209 = vmatprep.subr.bf16.mxu0 0
    %3210 = vmatpush1.bf16.xpose.msra.mxu0 0
    %3211 = vmatprep.subr.bf16.mxu0 %v1386
    %3212 = vmatpush1.bf16.xpose.msra.mxu0 %v1385
    %3213 = vmatprep.subr.bf16.mxu0 %v1378
    %3214 = vmatpush1.bf16.xpose.msra.mxu0 %v1377
    %3215 = vmatprep.subr.bf16.mxu0 0
    %3216 = vmatpush2.bf16.xpose.msra.mxu0 0
    %3217 = vmatprep.subr.bf16.mxu0 0
    %3218 = vmatpush2.bf16.xpose.msra.mxu0 0
    %3219 = vmatprep.subr.bf16.mxu0 0
    %3220 = vmatpush2.bf16.xpose.msra.mxu0 0
    %3221 = vmatprep.subr.bf16.mxu0 0
    %3222 = vmatpush2.bf16.xpose.msra.mxu0 0
    %3223 = vmatprep.subr.bf16.mxu0 0
    %3224 = vmatpush2.bf16.xpose.msra.mxu0 0
    %3225 = vmatprep.subr.bf16.mxu0 0
    %3226 = vmatpush2.bf16.xpose.msra.mxu0 0
    %3227 = vmatprep.subr.bf16.mxu0 0
    %3228 = vmatpush2.bf16.xpose.msra.mxu0 0
    %3229 = vmatprep.subr.bf16.mxu0 0
    %3230 = vmatpush2.bf16.xpose.msra.mxu0 0
    %3231 = vmatprep.mubr.bf16.mxu0 %v3092
    %3232 = vmatmul.mubr.bf16.gmra.mxu0 %v3091
    %v3233 = vpop.f32.mrf.mxu0
    %v3234 = vadd.f32 %v3186, %v3233
    %v3235 = vpop.f32.mrf.mxu0
    %v3236 = vpop.f32.mrf.mxu0
    %v3237 = vadd.f32 %v3189, %v3236
    %v3238 = vpop.f32.mrf.mxu0
    %3239 = vmatprep.mubr.bf16.mxu0 %v3100
    %3240 = vmatmul.mubr.bf16.gmra.mxu0 %v3099
    %v3241 = vpop.f32.mrf.mxu0
    %v3242 = vadd.f32 %v3194, %v3241
    %v3243 = vpop.f32.mrf.mxu0
    %v3244 = vpop.f32.mrf.mxu0
    %v3245 = vpop.f32.mrf.mxu0
    %3246 = vdwg.mxu0
    %3247 = vmatprep.subr.bf16.mxu0 0
    %3248 = vmatpush1.bf16.xpose.msra.mxu0 0
    %3249 = vmatprep.subr.bf16.mxu0 0
    %3250 = vmatpush1.bf16.xpose.msra.mxu0 0
    %3251 = vmatprep.subr.bf16.mxu0 0
    %3252 = vmatpush1.bf16.xpose.msra.mxu0 0
    %3253 = vmatprep.subr.bf16.mxu0 0
    %3254 = vmatpush1.bf16.xpose.msra.mxu0 0
    %3255 = vmatprep.subr.bf16.mxu0 0
    %3256 = vmatpush1.bf16.xpose.msra.mxu0 0
    %3257 = vmatprep.subr.bf16.mxu0 0
    %3258 = vmatpush1.bf16.xpose.msra.mxu0 0
    %3259 = vmatprep.subr.bf16.mxu0 %v1388
    %3260 = vmatpush1.bf16.xpose.msra.mxu0 %v1387
    %3261 = vmatprep.subr.bf16.mxu0 %v1380
    %3262 = vmatpush1.bf16.xpose.msra.mxu0 %v1379
    %3263 = vmatprep.subr.bf16.mxu0 0
    %3264 = vmatpush2.bf16.xpose.msra.mxu0 0
    %3265 = vmatprep.subr.bf16.mxu0 0
    %3266 = vmatpush2.bf16.xpose.msra.mxu0 0
    %3267 = vmatprep.subr.bf16.mxu0 0
    %3268 = vmatpush2.bf16.xpose.msra.mxu0 0
    %3269 = vmatprep.subr.bf16.mxu0 0
    %3270 = vmatpush2.bf16.xpose.msra.mxu0 0
    %3271 = vmatprep.subr.bf16.mxu0 0
    %3272 = vmatpush2.bf16.xpose.msra.mxu0 0
    %3273 = vmatprep.subr.bf16.mxu0 0
    %3274 = vmatpush2.bf16.xpose.msra.mxu0 0
    %3275 = vmatprep.subr.bf16.mxu0 0
    %3276 = vmatpush2.bf16.xpose.msra.mxu0 0
    %3277 = vmatprep.subr.bf16.mxu0 0
    %3278 = vmatpush2.bf16.xpose.msra.mxu0 0
    %3279 = vmatprep.mubr.bf16.mxu0 %v3094
    %3280 = vmatmul.mubr.bf16.gmra.mxu0 %v3093
    %v3281 = vpop.f32.mrf.mxu0
    %v3282 = vadd.f32 %v3234, %v3281
    %v3283 = vpop.f32.mrf.mxu0
    %v3284 = vpop.f32.mrf.mxu0
    %v3285 = vadd.f32 %v3237, %v3284
    %v3286 = vpop.f32.mrf.mxu0
    %3287 = vmatprep.mubr.bf16.mxu0 %v3102
    %3288 = vmatmul.mubr.bf16.gmra.mxu0 %v3101
    %v3289 = vpop.f32.mrf.mxu0
    %v3290 = vadd.f32 %v3242, %v3289
    %v3291 = vpop.f32.mrf.mxu0
    %v3292 = vpop.f32.mrf.mxu0
    %v3293 = vpop.f32.mrf.mxu0
    %3294 = vdwg.mxu0
    %v3295 = vpack.c.bf16 %v3285, %v3282
    %v3296 = vpack.c.bf16 %v3290, %v3290
    %v3298 = vsel %vm1602, %v3296, 0
    %3300 = vmatprep.subr.bf16.mxu0 0
    %3301 = vmatpush1.bf16.msra.mxu0 0
    %3302 = vmatprep.subr.bf16.mxu0 0
    %3303 = vmatpush1.bf16.msra.mxu0 0
    %3304 = vmatprep.subr.bf16.mxu0 0
    %3305 = vmatpush1.bf16.msra.mxu0 0
    %3306 = vmatprep.subr.bf16.mxu0 0
    %3307 = vmatpush1.bf16.msra.mxu0 0
    %3308 = vmatprep.subr.bf16.mxu0 0
    %3309 = vmatpush1.bf16.msra.mxu0 0
    %3310 = vmatprep.subr.bf16.mxu0 0
    %3311 = vmatpush1.bf16.msra.mxu0 0
    %3312 = vmatprep.subr.bf16.mxu0 0
    %3313 = vmatpush1.bf16.msra.mxu0 %v3298
    %3314 = vmatprep.subr.bf16.mxu0 0
    %3315 = vmatpush1.bf16.msra.mxu0 %v3295
    %3316 = vmatprep.subr.bf16.mxu0 0
    %3317 = vmatpush2.bf16.msra.mxu0 0
    %3318 = vmatprep.subr.bf16.mxu0 0
    %3319 = vmatpush2.bf16.msra.mxu0 0
    %3320 = vmatprep.subr.bf16.mxu0 0
    %3321 = vmatpush2.bf16.msra.mxu0 0
    %3322 = vmatprep.subr.bf16.mxu0 0
    %3323 = vmatpush2.bf16.msra.mxu0 0
    %3324 = vmatprep.subr.bf16.mxu0 0
    %3325 = vmatpush2.bf16.msra.mxu0 0
    %3326 = vmatprep.subr.bf16.mxu0 0
    %3327 = vmatpush2.bf16.msra.mxu0 0
    %3328 = vmatprep.subr.bf16.mxu0 0
    %3329 = vmatpush2.bf16.msra.mxu0 0
    %3330 = vmatprep.subr.bf16.mxu0 0
    %3331 = vmatpush2.bf16.msra.mxu0 0
    %3332 = vmatprep.mubr.bf16.mxu0 0
    %3333 = vmatmul.mubr.bf16.gmra.mxu0 %v1600
    %v3334 = vpop.f32.mrf.mxu0
    %v3335 = vadd.f32 0.0, %v3334
    %v3336 = vpop.f32.mrf.mxu0
    %v3337 = vpop.f32.mrf.mxu0
    %v3338 = vadd.f32 0.0, %v3337
    %v3339 = vpop.f32.mrf.mxu0
    %3340 = vdwg.mxu0
    %v3341 = vmul.f32 %v3335, %v840
    %v3342 = vmul.f32 %v3338, %v841
    %3345 = vrot.lane.b32.xlu0 %v2794, 96
    %v3346 = vpop.permute.xlu0 %3345
    %3347 = vrot.lane.b32.xlu0 %v2795, 96
    %v3348 = vpop.permute.xlu0 %3347
    %v3349 = vsel %vm1034, %v3346, 0
    %v3351 = vsel %vm1034, %v3348, 0
    %3353 = vmatprep.subr.mxu0 0.0
    %3354 = vmatpush1.msra.mxu0 0.0
    %3355 = vmatprep.subr.mxu0 0.0
    %3356 = vmatpush1.msra.mxu0 0.0
    %3357 = vmatprep.subr.mxu0 0.0
    %3358 = vmatpush1.msra.mxu0 0.0
    %3359 = vmatprep.subr.mxu0 0.0
    %3360 = vmatpush1.msra.mxu0 0.0
    %3361 = vmatprep.subr.mxu0 0.0
    %3362 = vmatpush1.msra.mxu0 0.0
    %3363 = vmatprep.subr.mxu0 0.0
    %3364 = vmatpush1.msra.mxu0 0.0
    %3365 = vmatprep.subr.mxu0 0.0
    %3366 = vmatpush1.msra.mxu0 0.0
    %3367 = vmatprep.subr.mxu0 0.0
    %3368 = vmatpush1.msra.mxu0 0.0
    %3369 = vmatprep.subr.mxu0 0.0
    %3370 = vmatpush1.msra.mxu0 0.0
    %3371 = vmatprep.subr.mxu0 0.0
    %3372 = vmatpush1.msra.mxu0 0.0
    %3373 = vmatprep.subr.mxu0 0.0
    %3374 = vmatpush1.msra.mxu0 0.0
    %3375 = vmatprep.subr.mxu0 0.0
    %3376 = vmatpush1.msra.mxu0 0.0
    %3377 = vmatprep.subr.mxu0 0.0
    %3378 = vmatpush1.msra.mxu0 %v852
    %3379 = vmatprep.subr.mxu0 0.0
    %3380 = vmatpush1.msra.mxu0 %v851
    %3381 = vmatprep.subr.mxu0 0.0
    %3382 = vmatpush1.msra.mxu0 %v850
    %3383 = vmatprep.subr.mxu0 0.0
    %3384 = vmatpush1.msra.mxu0 %v849
    %3385 = vmatprep.subr.mxu0 0.0
    %3386 = vmatpush2.msra.mxu0 0.0
    %3387 = vmatprep.subr.mxu0 0.0
    %3388 = vmatpush2.msra.mxu0 0.0
    %3389 = vmatprep.subr.mxu0 0.0
    %3390 = vmatpush2.msra.mxu0 0.0
    %3391 = vmatprep.subr.mxu0 0.0
    %3392 = vmatpush2.msra.mxu0 0.0
    %3393 = vmatprep.subr.mxu0 0.0
    %3394 = vmatpush2.msra.mxu0 0.0
    %3395 = vmatprep.subr.mxu0 0.0
    %3396 = vmatpush2.msra.mxu0 0.0
    %3397 = vmatprep.subr.mxu0 0.0
    %3398 = vmatpush2.msra.mxu0 0.0
    %3399 = vmatprep.subr.mxu0 0.0
    %3400 = vmatpush2.msra.mxu0 0.0
    %3401 = vmatprep.subr.mxu0 0.0
    %3402 = vmatpush2.msra.mxu0 0.0
    %3403 = vmatprep.subr.mxu0 0.0
    %3404 = vmatpush2.msra.mxu0 0.0
    %3405 = vmatprep.subr.mxu0 0.0
    %3406 = vmatpush2.msra.mxu0 0.0
    %3407 = vmatprep.subr.mxu0 0.0
    %3408 = vmatpush2.msra.mxu0 0.0
    %3409 = vmatprep.subr.mxu0 0.0
    %3410 = vmatpush2.msra.mxu0 0.0
    %3411 = vmatprep.subr.mxu0 0.0
    %3412 = vmatpush2.msra.mxu0 0.0
    %3413 = vmatprep.subr.mxu0 0.0
    %3414 = vmatpush2.msra.mxu0 0.0
    %3415 = vmatprep.subr.mxu0 0.0
    %3416 = vmatpush2.msra.mxu0 0.0
    %3417 = vmatprep.mubr.f32.mxu0 0.0
    %3418 = vmatmul.mubr.f32.gmra.mxu0 %v3349
    %v3419 = vpop.f32.mrf.mxu0
    %v3420 = vadd.f32 0.0, %v3419
    %v3421 = vpop.f32.mrf.mxu0
    %3422 = vmatprep.mubr.f32.mxu0 0.0
    %3423 = vmatmul.mubr.f32.gmra.mxu0 %v3351
    %v3424 = vpop.f32.mrf.mxu0
    %v3425 = vadd.f32 0.0, %v3424
    %v3426 = vpop.f32.mrf.mxu0
    %3427 = vdwg.mxu0
    %v3428 = vadd.f32 %v3341, %v3420
    %v3429 = vadd.f32 %v3342, %v3425
    %v3430 = vadd.f32 %v3428, %v857
    %v3431 = vadd.f32 %v3429, %v857
    %v3432 = vmax.f32 %v3430, 0.0
    %v3433 = vmax.f32 %v3431, 0.0
    %v3435 = vsel %vm1034, %v3432, 0
    %v3438 = vsel %vm1034, %v3433, 0
    %3440 = vmatprep.subr.mxu0 0.0
    %3441 = vmatpush1.msra.mxu0 0.0
    %3442 = vmatprep.subr.mxu0 0.0
    %3443 = vmatpush1.msra.mxu0 0.0
    %3444 = vmatprep.subr.mxu0 0.0
    %3445 = vmatpush1.msra.mxu0 0.0
    %3446 = vmatprep.subr.mxu0 0.0
    %3447 = vmatpush1.msra.mxu0 0.0
    %3448 = vmatprep.subr.mxu0 0.0
    %3449 = vmatpush1.msra.mxu0 0.0
    %3450 = vmatprep.subr.mxu0 0.0
    %3451 = vmatpush1.msra.mxu0 0.0
    %3452 = vmatprep.subr.mxu0 0.0
    %3453 = vmatpush1.msra.mxu0 0.0
    %3454 = vmatprep.subr.mxu0 0.0
    %3455 = vmatpush1.msra.mxu0 0.0
    %3456 = vmatprep.subr.mxu0 0.0
    %3457 = vmatpush1.msra.mxu0 0.0
    %3458 = vmatprep.subr.mxu0 0.0
    %3459 = vmatpush1.msra.mxu0 0.0
    %3460 = vmatprep.subr.mxu0 0.0
    %3461 = vmatpush1.msra.mxu0 0.0
    %3462 = vmatprep.subr.mxu0 0.0
    %3463 = vmatpush1.msra.mxu0 0.0
    %3464 = vmatprep.subr.mxu0 0.0
    %3465 = vmatpush1.msra.mxu0 %v861
    %3466 = vmatprep.subr.mxu0 0.0
    %3467 = vmatpush1.msra.mxu0 %v860
    %3468 = vmatprep.subr.mxu0 0.0
    %3469 = vmatpush1.msra.mxu0 %v859
    %3470 = vmatprep.subr.mxu0 0.0
    %3471 = vmatpush1.msra.mxu0 %v858
    %3472 = vmatprep.subr.mxu0 0.0
    %3473 = vmatpush2.msra.mxu0 0.0
    %3474 = vmatprep.subr.mxu0 0.0
    %3475 = vmatpush2.msra.mxu0 0.0
    %3476 = vmatprep.subr.mxu0 0.0
    %3477 = vmatpush2.msra.mxu0 0.0
    %3478 = vmatprep.subr.mxu0 0.0
    %3479 = vmatpush2.msra.mxu0 0.0
    %3480 = vmatprep.subr.mxu0 0.0
    %3481 = vmatpush2.msra.mxu0 0.0
    %3482 = vmatprep.subr.mxu0 0.0
    %3483 = vmatpush2.msra.mxu0 0.0
    %3484 = vmatprep.subr.mxu0 0.0
    %3485 = vmatpush2.msra.mxu0 0.0
    %3486 = vmatprep.subr.mxu0 0.0
    %3487 = vmatpush2.msra.mxu0 0.0
    %3488 = vmatprep.subr.mxu0 0.0
    %3489 = vmatpush2.msra.mxu0 0.0
    %3490 = vmatprep.subr.mxu0 0.0
    %3491 = vmatpush2.msra.mxu0 0.0
    %3492 = vmatprep.subr.mxu0 0.0
    %3493 = vmatpush2.msra.mxu0 0.0
    %3494 = vmatprep.subr.mxu0 0.0
    %3495 = vmatpush2.msra.mxu0 0.0
    %3496 = vmatprep.subr.mxu0 0.0
    %3497 = vmatpush2.msra.mxu0 0.0
    %3498 = vmatprep.subr.mxu0 0.0
    %3499 = vmatpush2.msra.mxu0 0.0
    %3500 = vmatprep.subr.mxu0 0.0
    %3501 = vmatpush2.msra.mxu0 0.0
    %3502 = vmatprep.subr.mxu0 0.0
    %3503 = vmatpush2.msra.mxu0 0.0
    %3504 = vmatprep.mubr.f32.mxu0 0.0
    %3505 = vmatmul.mubr.f32.gmra.mxu0 %v3435
    %v3506 = vpop.f32.mrf.mxu0
    %v3507 = vadd.f32 %v871, %v3506
    %v3508 = vpop.f32.mrf.mxu0
    %3509 = vmatprep.mubr.f32.mxu0 0.0
    %3510 = vmatmul.mubr.f32.gmra.mxu0 %v3438
    %v3511 = vpop.f32.mrf.mxu0
    %v3512 = vadd.f32 %v871, %v3511
    %v3513 = vpop.f32.mrf.mxu0
    %3514 = vdwg.mxu0
    %3515 = vmatprep.subr.mxu0 0.0
    %3516 = vmatpush1.msra.mxu0 0.0
    %3517 = vmatprep.subr.mxu0 0.0
    %3518 = vmatpush1.msra.mxu0 0.0
    %3519 = vmatprep.subr.mxu0 0.0
    %3520 = vmatpush1.msra.mxu0 0.0
    %3521 = vmatprep.subr.mxu0 0.0
    %3522 = vmatpush1.msra.mxu0 0.0
    %3523 = vmatprep.subr.mxu0 0.0
    %3524 = vmatpush1.msra.mxu0 0.0
    %3525 = vmatprep.subr.mxu0 0.0
    %3526 = vmatpush1.msra.mxu0 0.0
    %3527 = vmatprep.subr.mxu0 0.0
    %3528 = vmatpush1.msra.mxu0 0.0
    %3529 = vmatprep.subr.mxu0 0.0
    %3530 = vmatpush1.msra.mxu0 0.0
    %3531 = vmatprep.subr.mxu0 0.0
    %3532 = vmatpush1.msra.mxu0 0.0
    %3533 = vmatprep.subr.mxu0 0.0
    %3534 = vmatpush1.msra.mxu0 0.0
    %3535 = vmatprep.subr.mxu0 0.0
    %3536 = vmatpush1.msra.mxu0 0.0
    %3537 = vmatprep.subr.mxu0 0.0
    %3538 = vmatpush1.msra.mxu0 0.0
    %3539 = vmatprep.subr.mxu0 0.0
    %3540 = vmatpush1.msra.mxu0 %v866
    %3541 = vmatprep.subr.mxu0 0.0
    %3542 = vmatpush1.msra.mxu0 %v865
    %3543 = vmatprep.subr.mxu0 0.0
    %3544 = vmatpush1.msra.mxu0 %v864
    %3545 = vmatprep.subr.mxu0 0.0
    %3546 = vmatpush1.msra.mxu0 %v863
    %3547 = vmatprep.subr.mxu0 0.0
    %3548 = vmatpush2.msra.mxu0 0.0
    %3549 = vmatprep.subr.mxu0 0.0
    %3550 = vmatpush2.msra.mxu0 0.0
    %3551 = vmatprep.subr.mxu0 0.0
    %3552 = vmatpush2.msra.mxu0 0.0
    %3553 = vmatprep.subr.mxu0 0.0
    %3554 = vmatpush2.msra.mxu0 0.0
    %3555 = vmatprep.subr.mxu0 0.0
    %3556 = vmatpush2.msra.mxu0 0.0
    %3557 = vmatprep.subr.mxu0 0.0
    %3558 = vmatpush2.msra.mxu0 0.0
    %3559 = vmatprep.subr.mxu0 0.0
    %3560 = vmatpush2.msra.mxu0 0.0
    %3561 = vmatprep.subr.mxu0 0.0
    %3562 = vmatpush2.msra.mxu0 0.0
    %3563 = vmatprep.subr.mxu0 0.0
    %3564 = vmatpush2.msra.mxu0 0.0
    %3565 = vmatprep.subr.mxu0 0.0
    %3566 = vmatpush2.msra.mxu0 0.0
    %3567 = vmatprep.subr.mxu0 0.0
    %3568 = vmatpush2.msra.mxu0 0.0
    %3569 = vmatprep.subr.mxu0 0.0
    %3570 = vmatpush2.msra.mxu0 0.0
    %3571 = vmatprep.subr.mxu0 0.0
    %3572 = vmatpush2.msra.mxu0 0.0
    %3573 = vmatprep.subr.mxu0 0.0
    %3574 = vmatpush2.msra.mxu0 0.0
    %3575 = vmatprep.subr.mxu0 0.0
    %3576 = vmatpush2.msra.mxu0 0.0
    %3577 = vmatprep.subr.mxu0 0.0
    %3578 = vmatpush2.msra.mxu0 0.0
    %3579 = vmatprep.mubr.f32.mxu0 0.0
    %3580 = vmatmul.mubr.f32.gmra.mxu0 %v3349
    %v3581 = vpop.f32.mrf.mxu0
    %v3582 = vadd.f32 %v875, %v3581
    %v3583 = vpop.f32.mrf.mxu0
    %3584 = vmatprep.mubr.f32.mxu0 0.0
    %3585 = vmatmul.mubr.f32.gmra.mxu0 %v3351
    %v3586 = vpop.f32.mrf.mxu0
    %v3587 = vadd.f32 %v875, %v3586
    %v3588 = vpop.f32.mrf.mxu0
    %3589 = vdwg.mxu0
    %v3590 = vadd.f32 %v3507, %v3582
    %v3591 = vadd.f32 %v3512, %v3587
    %v3592 = vxor.u32 %v3590, 2147483648
    %v3593 = vxor.u32 %v3591, 2147483648
    %v3594 = vmul.f32 %v3592, 1.442695
    %v3595 = vpow.pop %v3594
    %v3596 = vmul.f32 %v3593, 1.442695
    %v3597 = vpow.pop %v3596
    %v3598 = vadd.f32 %v3595, 1.0
    %v3599 = vadd.f32 %v3597, 1.0
    %v3600 = vrcp.pop %v3598
    %v3601 = vmul.f32 1.0, %v3600
    %v3602 = vrcp.pop %v3599
    %v3603 = vmul.f32 1.0, %v3602
    %3606 = vrot.lane.b32.xlu0 %v3582, 64
    %v3607 = vpop.permute.xlu0 %3606
    %3608 = vrot.lane.b32.xlu0 %v3587, 64
    %v3609 = vpop.permute.xlu0 %3608
    %v3612 = vmul.f32 %v3601, %v3607
    %v3613 = vmul.f32 %v3603, %v3609
    %3616 = vrot.lane.b32.xlu0 %v3612, 64
    %v3617 = vpop.permute.xlu0 %3616
    %3618 = vrot.lane.b32.xlu0 %v3613, 64
    %v3619 = vpop.permute.xlu0 %3618
    %v3622 = vadd.f32 %v3507, %v3617
    %v3623 = vadd.f32 %v3512, %v3619
    %v3624 = vtanh.pop %v3622
    %v3625 = vtanh.pop %v3623
    %v3626 = vsub.f32 1.0, %v3601
    %v3627 = vsub.f32 1.0, %v3603
    %3630 = vrot.lane.b32.xlu0 %v3624, 96
    %v3631 = vpop.permute.xlu0 %3630
    %3632 = vrot.lane.b32.xlu0 %v3625, 96
    %v3633 = vpop.permute.xlu0 %3632
    %v3636 = vmul.f32 %v3626, %v3631
    %v3637 = vmul.f32 %v3627, %v3633
    %v3638 = vmul.f32 %v3601, %v2794
    %v3639 = vmul.f32 %v3603, %v2795
    %v3640 = vadd.f32 %v3636, %v3638
    %v3641 = vadd.f32 %v3637, %v3639
    %v3642 = vld [vmem:[#allocation8 + $0x88] sm:$0xff]
    %v3643 = vld [vmem:[#allocation8 + $0x90] sm:$0xff]
    %v3644 = vld [vmem:[#allocation8 + $0x98] sm:$0xff]
    %v3645 = vld [vmem:[#allocation8 + $0xa0] sm:$0xff]
    %v3646 = vld [vmem:[#allocation8 + $0xa8] sm:$0xff]
    %v3647 = vld [vmem:[#allocation8 + $0xb0] sm:$0xff]
    %v3648 = vld [vmem:[#allocation8 + $0xb8] sm:$0xff]
    %v3649 = vld [vmem:[#allocation8 + $0xc0] sm:$0xff]
    %v3650 = vld [vmem:[#allocation8 + $0xc8] sm:$0xff]
    %v3651 = vld [vmem:[#allocation8 + $0xd0] sm:$0xff]
    %v3652 = vld [vmem:[#allocation8 + $0xd8] sm:$0xff]
    %v3653 = vld [vmem:[#allocation8 + $0xe0] sm:$0xff]
    %v3654 = vld [vmem:[#allocation8 + $0xe8] sm:$0xff]
    %v3655 = vlaneseq
    %v3656 = vshrl.u32 %v3655, 7
    %v3657 = vsub.s32 0, %v3656
    %v3658 = vrot.slane %v3654, %v3657
    %vm3659 = vcmask 785408
    %v3661 = vsel %vm3659, 0.0, 0
    %3663 = vmatprep.subr.mxu0 0.0
    %3664 = vmatpush1.msra.mxu0 0.0
    %3665 = vmatprep.subr.mxu0 0.0
    %3666 = vmatpush1.msra.mxu0 0.0
    %3667 = vmatprep.subr.mxu0 0.0
    %3668 = vmatpush1.msra.mxu0 0.0
    %3669 = vmatprep.subr.mxu0 0.0
    %3670 = vmatpush1.msra.mxu0 0.0
    %3671 = vmatprep.subr.mxu0 0.0
    %3672 = vmatpush1.msra.mxu0 %v3653
    %3673 = vmatprep.subr.mxu0 0.0
    %3674 = vmatpush1.msra.mxu0 %v3652
    %3675 = vmatprep.subr.mxu0 0.0
    %3676 = vmatpush1.msra.mxu0 %v3651
    %3677 = vmatprep.subr.mxu0 0.0
    %3678 = vmatpush1.msra.mxu0 %v3650
    %3679 = vmatprep.subr.mxu0 0.0
    %3680 = vmatpush1.msra.mxu0 %v3649
    %3681 = vmatprep.subr.mxu0 0.0
    %3682 = vmatpush1.msra.mxu0 %v3648
    %3683 = vmatprep.subr.mxu0 0.0
    %3684 = vmatpush1.msra.mxu0 %v3647
    %3685 = vmatprep.subr.mxu0 0.0
    %3686 = vmatpush1.msra.mxu0 %v3646
    %3687 = vmatprep.subr.mxu0 0.0
    %3688 = vmatpush1.msra.mxu0 %v3645
    %3689 = vmatprep.subr.mxu0 0.0
    %3690 = vmatpush1.msra.mxu0 %v3644
    %3691 = vmatprep.subr.mxu0 0.0
    %3692 = vmatpush1.msra.mxu0 %v3643
    %3693 = vmatprep.subr.mxu0 0.0
    %3694 = vmatpush1.msra.mxu0 %v3642
    %3695 = vmatprep.subr.mxu0 0.0
    %3696 = vmatpush2.msra.mxu0 0.0
    %3697 = vmatprep.subr.mxu0 0.0
    %3698 = vmatpush2.msra.mxu0 0.0
    %3699 = vmatprep.subr.mxu0 0.0
    %3700 = vmatpush2.msra.mxu0 0.0
    %3701 = vmatprep.subr.mxu0 0.0
    %3702 = vmatpush2.msra.mxu0 0.0
    %3703 = vmatprep.subr.mxu0 0.0
    %3704 = vmatpush2.msra.mxu0 0.0
    %3705 = vmatprep.subr.mxu0 0.0
    %3706 = vmatpush2.msra.mxu0 0.0
    %3707 = vmatprep.subr.mxu0 0.0
    %3708 = vmatpush2.msra.mxu0 0.0
    %3709 = vmatprep.subr.mxu0 0.0
    %3710 = vmatpush2.msra.mxu0 0.0
    %3711 = vmatprep.subr.mxu0 0.0
    %3712 = vmatpush2.msra.mxu0 0.0
    %3713 = vmatprep.subr.mxu0 0.0
    %3714 = vmatpush2.msra.mxu0 0.0
    %3715 = vmatprep.subr.mxu0 0.0
    %3716 = vmatpush2.msra.mxu0 0.0
    %3717 = vmatprep.subr.mxu0 0.0
    %3718 = vmatpush2.msra.mxu0 0.0
    %3719 = vmatprep.subr.mxu0 0.0
    %3720 = vmatpush2.msra.mxu0 0.0
    %3721 = vmatprep.subr.mxu0 0.0
    %3722 = vmatpush2.msra.mxu0 0.0
    %3723 = vmatprep.subr.mxu0 0.0
    %3724 = vmatpush2.msra.mxu0 0.0
    %3725 = vmatprep.subr.mxu0 0.0
    %3726 = vmatpush2.msra.mxu0 0.0
    %3727 = vmatprep.mubr.f32.mxu0 0.0
    %3728 = vmatmul.mubr.f32.gmra.mxu0 %v3661
    %v3729 = vpop.f32.mrf.mxu0
    %v3730 = vadd.f32 %v3658, %v3729
    %v3731 = vpop.f32.mrf.mxu0
    %3732 = vdwg.mxu0
    %v3733 = vxor.u32 %v3730, 2147483648
    %v3734 = vmul.f32 %v3733, 1.442695
    %v3735 = vpow.pop %v3734
    %v3736 = vadd.f32 %v3735, 1.0
    %v3737 = vrcp.pop %v3736
    %v3738 = vmul.f32 1.0, %v3737
    %v3739 = vtanh.pop %v3730
    %v3740 = vmul.f32 %v3738, 0.0
    %3742 = vrot.lane.b32.xlu0 %v3739, 32
    %v3743 = vpop.permute.xlu0 %3742
    %v3745 = vmul.f32 %v3738, %v3743
    %3747 = vrot.lane.b32.xlu0 %v3745, 32
    %v3748 = vpop.permute.xlu0 %3747
    %v3750 = vadd.f32 %v3740, %v3748
    %v3751 = vtanh.pop %v3750
    %3753 = vrot.lane.b32.xlu0 %v3751, 32
    %v3754 = vpop.permute.xlu0 %3753
    %v3756 = vmul.f32 %v3738, %v3754
    %3758 = vrot.lane.b32.xlu0 %v3756, 64
    %v3759 = vpop.permute.xlu0 %3758
    %3762 = vrot.lane.b32.xlu0 %v3640, 96
    %v3763 = vpop.permute.xlu0 %3762
    %3764 = vrot.lane.b32.xlu0 %v3641, 96
    %v3765 = vpop.permute.xlu0 %3764
    %v3766 = vsel %vm1034, %v3759, 0
    %v3768 = vsel %vm1034, %v3763, 0
    %v3770 = vsel %vm1034, %v3765, 0
    %3772 = vmatprep.subr.mxu0 0.0
    %3773 = vmatpush1.xpose.msra.mxu0 0.0
    %3774 = vmatprep.subr.mxu0 0.0
    %3775 = vmatpush1.xpose.msra.mxu0 0.0
    %3776 = vmatprep.subr.mxu0 0.0
    %3777 = vmatpush1.xpose.msra.mxu0 0.0
    %3778 = vmatprep.subr.mxu0 0.0
    %3779 = vmatpush1.xpose.msra.mxu0 0.0
    %3780 = vmatprep.subr.mxu0 0.0
    %3781 = vmatpush1.xpose.msra.mxu0 0.0
    %3782 = vmatprep.subr.mxu0 0.0
    %3783 = vmatpush1.xpose.msra.mxu0 0.0
    %3784 = vmatprep.subr.mxu0 0.0
    %3785 = vmatpush1.xpose.msra.mxu0 0.0
    %3786 = vmatprep.subr.mxu0 0.0
    %3787 = vmatpush1.xpose.msra.mxu0 0.0
    %3788 = vmatprep.subr.mxu0 0.0
    %3789 = vmatpush1.xpose.msra.mxu0 0.0
    %3790 = vmatprep.subr.mxu0 0.0
    %3791 = vmatpush1.xpose.msra.mxu0 0.0
    %3792 = vmatprep.subr.mxu0 0.0
    %3793 = vmatpush1.xpose.msra.mxu0 0.0
    %3794 = vmatprep.subr.mxu0 0.0
    %3795 = vmatpush1.xpose.msra.mxu0 0.0
    %3796 = vmatprep.subr.mxu0 0.0
    %3797 = vmatpush1.xpose.msra.mxu0 0.0
    %3798 = vmatprep.subr.mxu0 0.0
    %3799 = vmatpush1.xpose.msra.mxu0 0.0
    %3800 = vmatprep.subr.mxu0 0.0
    %3801 = vmatpush1.xpose.msra.mxu0 %v3770
    %3802 = vmatprep.subr.mxu0 0.0
    %3803 = vmatpush1.xpose.msra.mxu0 %v3768
    %3804 = vmatprep.subr.mxu0 0.0
    %3805 = vmatpush2.xpose.msra.mxu0 0.0
    %3806 = vmatprep.subr.mxu0 0.0
    %3807 = vmatpush2.xpose.msra.mxu0 0.0
    %3808 = vmatprep.subr.mxu0 0.0
    %3809 = vmatpush2.xpose.msra.mxu0 0.0
    %3810 = vmatprep.subr.mxu0 0.0
    %3811 = vmatpush2.xpose.msra.mxu0 0.0
    %3812 = vmatprep.subr.mxu0 0.0
    %3813 = vmatpush2.xpose.msra.mxu0 0.0
    %3814 = vmatprep.subr.mxu0 0.0
    %3815 = vmatpush2.xpose.msra.mxu0 0.0
    %3816 = vmatprep.subr.mxu0 0.0
    %3817 = vmatpush2.xpose.msra.mxu0 0.0
    %3818 = vmatprep.subr.mxu0 0.0
    %3819 = vmatpush2.xpose.msra.mxu0 0.0
    %3820 = vmatprep.subr.mxu0 0.0
    %3821 = vmatpush2.xpose.msra.mxu0 0.0
    %3822 = vmatprep.subr.mxu0 0.0
    %3823 = vmatpush2.xpose.msra.mxu0 0.0
    %3824 = vmatprep.subr.mxu0 0.0
    %3825 = vmatpush2.xpose.msra.mxu0 0.0
    %3826 = vmatprep.subr.mxu0 0.0
    %3827 = vmatpush2.xpose.msra.mxu0 0.0
    %3828 = vmatprep.subr.mxu0 0.0
    %3829 = vmatpush2.xpose.msra.mxu0 0.0
    %3830 = vmatprep.subr.mxu0 0.0
    %3831 = vmatpush2.xpose.msra.mxu0 0.0
    %3832 = vmatprep.subr.mxu0 0.0
    %3833 = vmatpush2.xpose.msra.mxu0 0.0
    %3834 = vmatprep.subr.mxu0 0.0
    %3835 = vmatpush2.xpose.msra.mxu0 0.0
    %3836 = vmatprep.mubr.f32.mxu0 0.0
    %3837 = vmatmul.mubr.f32.gmra.mxu0 %v3766
    %v3838 = vpop.f32.mrf.mxu0
    %v3839 = vadd.f32 0.0, %v3838
    %v3840 = vpop.f32.mrf.mxu0
    %3841 = vdwg.mxu0
    %v3842 = vsel %vm848, %v3839, -1e+30
    %vm3843 = vcmask 74752
    %v3844 = vsel %vm3843, %v3842, -inf
    %3845 = vmax.xlane.f32.xlu0 %v3844
    %v3846 = vpop.xlane.xlu0 %3845
    %v3847 = vsub.f32 %v3839, %v3846
    %v3848 = vmul.f32 %v3847, 1.442695
    %v3849 = vpow.pop %v3848
    %v3850 = vsel %vm848, %v3849, 0.0
    %v3851 = vsel %vm3843, %v3850, 0.0
    %3852 = vadd.xlane.f32.xlu0 %v3851
    %v3853 = vpop.xlane.xlu0 %3852
    %v3854 = vmax.f32 %v3853, 1e-30
    %v3855 = vrcp.pop %v3854
    %v3856 = vmul.f32 %v3850, %v3855
    %v3859 = vsel %vm877, %v3856, 0
    %v3861 = vsel %vm1602, %v3765, 0
    %3863 = vmatprep.subr.mxu0 0.0
    %3864 = vmatpush1.msra.mxu0 0.0
    %3865 = vmatprep.subr.mxu0 0.0
    %3866 = vmatpush1.msra.mxu0 0.0
    %3867 = vmatprep.subr.mxu0 0.0
    %3868 = vmatpush1.msra.mxu0 0.0
    %3869 = vmatprep.subr.mxu0 0.0
    %3870 = vmatpush1.msra.mxu0 0.0
    %3871 = vmatprep.subr.mxu0 0.0
    %3872 = vmatpush1.msra.mxu0 0.0
    %3873 = vmatprep.subr.mxu0 0.0
    %3874 = vmatpush1.msra.mxu0 0.0
    %3875 = vmatprep.subr.mxu0 0.0
    %3876 = vmatpush1.msra.mxu0 0.0
    %3877 = vmatprep.subr.mxu0 0.0
    %3878 = vmatpush1.msra.mxu0 0.0
    %3879 = vmatprep.subr.mxu0 0.0
    %3880 = vmatpush1.msra.mxu0 0.0
    %3881 = vmatprep.subr.mxu0 0.0
    %3882 = vmatpush1.msra.mxu0 0.0
    %3883 = vmatprep.subr.mxu0 0.0
    %3884 = vmatpush1.msra.mxu0 0.0
    %3885 = vmatprep.subr.mxu0 0.0
    %3886 = vmatpush1.msra.mxu0 0.0
    %3887 = vmatprep.subr.mxu0 0.0
    %3888 = vmatpush1.msra.mxu0 0.0
    %3889 = vmatprep.subr.mxu0 0.0
    %3890 = vmatpush1.msra.mxu0 0.0
    %3891 = vmatprep.subr.mxu0 0.0
    %3892 = vmatpush1.msra.mxu0 %v3861
    %3893 = vmatprep.subr.mxu0 0.0
    %3894 = vmatpush1.msra.mxu0 %v3763
    %3895 = vmatprep.subr.mxu0 0.0
    %3896 = vmatpush2.msra.mxu0 0.0
    %3897 = vmatprep.subr.mxu0 0.0
    %3898 = vmatpush2.msra.mxu0 0.0
    %3899 = vmatprep.subr.mxu0 0.0
    %3900 = vmatpush2.msra.mxu0 0.0
    %3901 = vmatprep.subr.mxu0 0.0
    %3902 = vmatpush2.msra.mxu0 0.0
    %3903 = vmatprep.subr.mxu0 0.0
    %3904 = vmatpush2.msra.mxu0 0.0
    %3905 = vmatprep.subr.mxu0 0.0
    %3906 = vmatpush2.msra.mxu0 0.0
    %3907 = vmatprep.subr.mxu0 0.0
    %3908 = vmatpush2.msra.mxu0 0.0
    %3909 = vmatprep.subr.mxu0 0.0
    %3910 = vmatpush2.msra.mxu0 0.0
    %3911 = vmatprep.subr.mxu0 0.0
    %3912 = vmatpush2.msra.mxu0 0.0
    %3913 = vmatprep.subr.mxu0 0.0
    %3914 = vmatpush2.msra.mxu0 0.0
    %3915 = vmatprep.subr.mxu0 0.0
    %3916 = vmatpush2.msra.mxu0 0.0
    %3917 = vmatprep.subr.mxu0 0.0
    %3918 = vmatpush2.msra.mxu0 0.0
    %3919 = vmatprep.subr.mxu0 0.0
    %3920 = vmatpush2.msra.mxu0 0.0
    %3921 = vmatprep.subr.mxu0 0.0
    %3922 = vmatpush2.msra.mxu0 0.0
    %3923 = vmatprep.subr.mxu0 0.0
    %3924 = vmatpush2.msra.mxu0 0.0
    %3925 = vmatprep.subr.mxu0 0.0
    %3926 = vmatpush2.msra.mxu0 0.0
    %3927 = vmatprep.mubr.f32.mxu0 0.0
    %3928 = vmatmul.mubr.f32.gmra.mxu0 %v3859
    %v3929 = vpop.f32.mrf.mxu0
    %v3930 = vadd.f32 0.0, %v3929
    %v3931 = vpop.f32.mrf.mxu0
    %3932 = vdwg.mxu0
    %3935 = vrot.lane.b32.xlu0 %v3930, 32
    %v3936 = vpop.permute.xlu0 %3935
    %v3938 = vsel %vm1034, %v3759, %v3936
    %vm3939 = vcmask 523264
    %v3940 = vsel %vm3939, %v3938, %v3756
    %v3942 = vsel %vm3659, %v3940, 0
    %3944 = vmatprep.subr.mxu0 0.0
    %3945 = vmatpush1.msra.mxu0 0.0
    %3946 = vmatprep.subr.mxu0 0.0
    %3947 = vmatpush1.msra.mxu0 0.0
    %3948 = vmatprep.subr.mxu0 0.0
    %3949 = vmatpush1.msra.mxu0 0.0
    %3950 = vmatprep.subr.mxu0 0.0
    %3951 = vmatpush1.msra.mxu0 0.0
    %3952 = vmatprep.subr.mxu0 0.0
    %3953 = vmatpush1.msra.mxu0 %v3653
    %3954 = vmatprep.subr.mxu0 0.0
    %3955 = vmatpush1.msra.mxu0 %v3652
    %3956 = vmatprep.subr.mxu0 0.0
    %3957 = vmatpush1.msra.mxu0 %v3651
    %3958 = vmatprep.subr.mxu0 0.0
    %3959 = vmatpush1.msra.mxu0 %v3650
    %3960 = vmatprep.subr.mxu0 0.0
    %3961 = vmatpush1.msra.mxu0 %v3649
    %3962 = vmatprep.subr.mxu0 0.0
    %3963 = vmatpush1.msra.mxu0 %v3648
    %3964 = vmatprep.subr.mxu0 0.0
    %3965 = vmatpush1.msra.mxu0 %v3647
    %3966 = vmatprep.subr.mxu0 0.0
    %3967 = vmatpush1.msra.mxu0 %v3646
    %3968 = vmatprep.subr.mxu0 0.0
    %3969 = vmatpush1.msra.mxu0 %v3645
    %3970 = vmatprep.subr.mxu0 0.0
    %3971 = vmatpush1.msra.mxu0 %v3644
    %3972 = vmatprep.subr.mxu0 0.0
    %3973 = vmatpush1.msra.mxu0 %v3643
    %3974 = vmatprep.subr.mxu0 0.0
    %3975 = vmatpush1.msra.mxu0 %v3642
    %3976 = vmatprep.subr.mxu0 0.0
    %3977 = vmatpush2.msra.mxu0 0.0
    %3978 = vmatprep.subr.mxu0 0.0
    %3979 = vmatpush2.msra.mxu0 0.0
    %3980 = vmatprep.subr.mxu0 0.0
    %3981 = vmatpush2.msra.mxu0 0.0
    %3982 = vmatprep.subr.mxu0 0.0
    %3983 = vmatpush2.msra.mxu0 0.0
    %3984 = vmatprep.subr.mxu0 0.0
    %3985 = vmatpush2.msra.mxu0 0.0
    %3986 = vmatprep.subr.mxu0 0.0
    %3987 = vmatpush2.msra.mxu0 0.0
    %3988 = vmatprep.subr.mxu0 0.0
    %3989 = vmatpush2.msra.mxu0 0.0
    %3990 = vmatprep.subr.mxu0 0.0
    %3991 = vmatpush2.msra.mxu0 0.0
    %3992 = vmatprep.subr.mxu0 0.0
    %3993 = vmatpush2.msra.mxu0 0.0
    %3994 = vmatprep.subr.mxu0 0.0
    %3995 = vmatpush2.msra.mxu0 0.0
    %3996 = vmatprep.subr.mxu0 0.0
    %3997 = vmatpush2.msra.mxu0 0.0
    %3998 = vmatprep.subr.mxu0 0.0
    %3999 = vmatpush2.msra.mxu0 0.0
    %4000 = vmatprep.subr.mxu0 0.0
    %4001 = vmatpush2.msra.mxu0 0.0
    %4002 = vmatprep.subr.mxu0 0.0
    %4003 = vmatpush2.msra.mxu0 0.0
    %4004 = vmatprep.subr.mxu0 0.0
    %4005 = vmatpush2.msra.mxu0 0.0
    %4006 = vmatprep.subr.mxu0 0.0
    %4007 = vmatpush2.msra.mxu0 0.0
    %4008 = vmatprep.mubr.f32.mxu0 0.0
    %4009 = vmatmul.mubr.f32.gmra.mxu0 %v3942
    %v4010 = vpop.f32.mrf.mxu0
    %v4011 = vadd.f32 %v3658, %v4010
    %v4012 = vpop.f32.mrf.mxu0
    %4013 = vdwg.mxu0
    %v4014 = vxor.u32 %v4011, 2147483648
    %v4015 = vmul.f32 %v4014, 1.442695
    %v4016 = vpow.pop %v4015
    %v4017 = vadd.f32 %v4016, 1.0
    %v4018 = vrcp.pop %v4017
    %v4019 = vmul.f32 1.0, %v4018
    %v4020 = vtanh.pop %v4011
    %v4021 = vmul.f32 %v4019, %v3750
    %4023 = vrot.lane.b32.xlu0 %v4020, 32
    %v4024 = vpop.permute.xlu0 %4023
    %v4026 = vmul.f32 %v4019, %v4024
    %4028 = vrot.lane.b32.xlu0 %v4026, 32
    %v4029 = vpop.permute.xlu0 %4028
    %v4031 = vadd.f32 %v4021, %v4029
    %v4032 = vtanh.pop %v4031
    %4034 = vrot.lane.b32.xlu0 %v4032, 32
    %v4035 = vpop.permute.xlu0 %4034
    %v4037 = vmul.f32 %v4019, %v4035
    %4039 = vrot.lane.b32.xlu0 %v4037, 64
    %v4040 = vpop.permute.xlu0 %4039
    %v4041 = vsel %vm1034, %v4040, 0
    %4043 = vmatprep.subr.mxu0 0.0
    %4044 = vmatpush1.xpose.msra.mxu0 0.0
    %4045 = vmatprep.subr.mxu0 0.0
    %4046 = vmatpush1.xpose.msra.mxu0 0.0
    %4047 = vmatprep.subr.mxu0 0.0
    %4048 = vmatpush1.xpose.msra.mxu0 0.0
    %4049 = vmatprep.subr.mxu0 0.0
    %4050 = vmatpush1.xpose.msra.mxu0 0.0
    %4051 = vmatprep.subr.mxu0 0.0
    %4052 = vmatpush1.xpose.msra.mxu0 0.0
    %4053 = vmatprep.subr.mxu0 0.0
    %4054 = vmatpush1.xpose.msra.mxu0 0.0
    %4055 = vmatprep.subr.mxu0 0.0
    %4056 = vmatpush1.xpose.msra.mxu0 0.0
    %4057 = vmatprep.subr.mxu0 0.0
    %4058 = vmatpush1.xpose.msra.mxu0 0.0
    %4059 = vmatprep.subr.mxu0 0.0
    %4060 = vmatpush1.xpose.msra.mxu0 0.0
    %4061 = vmatprep.subr.mxu0 0.0
    %4062 = vmatpush1.xpose.msra.mxu0 0.0
    %4063 = vmatprep.subr.mxu0 0.0
    %4064 = vmatpush1.xpose.msra.mxu0 0.0
    %4065 = vmatprep.subr.mxu0 0.0
    %4066 = vmatpush1.xpose.msra.mxu0 0.0
    %4067 = vmatprep.subr.mxu0 0.0
    %4068 = vmatpush1.xpose.msra.mxu0 0.0
    %4069 = vmatprep.subr.mxu0 0.0
    %4070 = vmatpush1.xpose.msra.mxu0 0.0
    %4071 = vmatprep.subr.mxu0 0.0
    %4072 = vmatpush1.xpose.msra.mxu0 %v3770
    %4073 = vmatprep.subr.mxu0 0.0
    %4074 = vmatpush1.xpose.msra.mxu0 %v3768
    %4075 = vmatprep.subr.mxu0 0.0
    %4076 = vmatpush2.xpose.msra.mxu0 0.0
    %4077 = vmatprep.subr.mxu0 0.0
    %4078 = vmatpush2.xpose.msra.mxu0 0.0
    %4079 = vmatprep.subr.mxu0 0.0
    %4080 = vmatpush2.xpose.msra.mxu0 0.0
    %4081 = vmatprep.subr.mxu0 0.0
    %4082 = vmatpush2.xpose.msra.mxu0 0.0
    %4083 = vmatprep.subr.mxu0 0.0
    %4084 = vmatpush2.xpose.msra.mxu0 0.0
    %4085 = vmatprep.subr.mxu0 0.0
    %4086 = vmatpush2.xpose.msra.mxu0 0.0
    %4087 = vmatprep.subr.mxu0 0.0
    %4088 = vmatpush2.xpose.msra.mxu0 0.0
    %4089 = vmatprep.subr.mxu0 0.0
    %4090 = vmatpush2.xpose.msra.mxu0 0.0
    %4091 = vmatprep.subr.mxu0 0.0
    %4092 = vmatpush2.xpose.msra.mxu0 0.0
    %4093 = vmatprep.subr.mxu0 0.0
    %4094 = vmatpush2.xpose.msra.mxu0 0.0
    %4095 = vmatprep.subr.mxu0 0.0
    %4096 = vmatpush2.xpose.msra.mxu0 0.0
    %4097 = vmatprep.subr.mxu0 0.0
    %4098 = vmatpush2.xpose.msra.mxu0 0.0
    %4099 = vmatprep.subr.mxu0 0.0
    %4100 = vmatpush2.xpose.msra.mxu0 0.0
    %4101 = vmatprep.subr.mxu0 0.0
    %4102 = vmatpush2.xpose.msra.mxu0 0.0
    %4103 = vmatprep.subr.mxu0 0.0
    %4104 = vmatpush2.xpose.msra.mxu0 0.0
    %4105 = vmatprep.subr.mxu0 0.0
    %4106 = vmatpush2.xpose.msra.mxu0 0.0
    %4107 = vmatprep.mubr.f32.mxu0 0.0
    %4108 = vmatmul.mubr.f32.gmra.mxu0 %v4041
    %v4109 = vpop.f32.mrf.mxu0
    %v4110 = vadd.f32 0.0, %v4109
    %v4111 = vpop.f32.mrf.mxu0
    %4112 = vdwg.mxu0
    %v4113 = vsel %vm848, %v4110, -1e+30
    %v4114 = vsel %vm3843, %v4113, -inf
    %4115 = vmax.xlane.f32.xlu0 %v4114
    %v4116 = vpop.xlane.xlu0 %4115
    %v4117 = vsub.f32 %v4110, %v4116
    %v4118 = vmul.f32 %v4117, 1.442695
    %v4119 = vpow.pop %v4118
    %v4120 = vsel %vm848, %v4119, 0.0
    %v4121 = vsel %vm3843, %v4120, 0.0
    %4122 = vadd.xlane.f32.xlu0 %v4121
    %v4123 = vpop.xlane.xlu0 %4122
    %v4124 = vmax.f32 %v4123, 1e-30
    %v4125 = vrcp.pop %v4124
    %v4126 = vmul.f32 %v4120, %v4125
    %v4128 = vsel %vm877, %v4126, 0
    %4130 = vmatprep.subr.mxu0 0.0
    %4131 = vmatpush1.msra.mxu0 0.0
    %4132 = vmatprep.subr.mxu0 0.0
    %4133 = vmatpush1.msra.mxu0 0.0
    %4134 = vmatprep.subr.mxu0 0.0
    %4135 = vmatpush1.msra.mxu0 0.0
    %4136 = vmatprep.subr.mxu0 0.0
    %4137 = vmatpush1.msra.mxu0 0.0
    %4138 = vmatprep.subr.mxu0 0.0
    %4139 = vmatpush1.msra.mxu0 0.0
    %4140 = vmatprep.subr.mxu0 0.0
    %4141 = vmatpush1.msra.mxu0 0.0
    %4142 = vmatprep.subr.mxu0 0.0
    %4143 = vmatpush1.msra.mxu0 0.0
    %4144 = vmatprep.subr.mxu0 0.0
    %4145 = vmatpush1.msra.mxu0 0.0
    %4146 = vmatprep.subr.mxu0 0.0
    %4147 = vmatpush1.msra.mxu0 0.0
    %4148 = vmatprep.subr.mxu0 0.0
    %4149 = vmatpush1.msra.mxu0 0.0
    %4150 = vmatprep.subr.mxu0 0.0
    %4151 = vmatpush1.msra.mxu0 0.0
    %4152 = vmatprep.subr.mxu0 0.0
    %4153 = vmatpush1.msra.mxu0 0.0
    %4154 = vmatprep.subr.mxu0 0.0
    %4155 = vmatpush1.msra.mxu0 0.0
    %4156 = vmatprep.subr.mxu0 0.0
    %4157 = vmatpush1.msra.mxu0 0.0
    %4158 = vmatprep.subr.mxu0 0.0
    %4159 = vmatpush1.msra.mxu0 %v3861
    %4160 = vmatprep.subr.mxu0 0.0
    %4161 = vmatpush1.msra.mxu0 %v3763
    %4162 = vmatprep.subr.mxu0 0.0
    %4163 = vmatpush2.msra.mxu0 0.0
    %4164 = vmatprep.subr.mxu0 0.0
    %4165 = vmatpush2.msra.mxu0 0.0
    %4166 = vmatprep.subr.mxu0 0.0
    %4167 = vmatpush2.msra.mxu0 0.0
    %4168 = vmatprep.subr.mxu0 0.0
    %4169 = vmatpush2.msra.mxu0 0.0
    %4170 = vmatprep.subr.mxu0 0.0
    %4171 = vmatpush2.msra.mxu0 0.0
    %4172 = vmatprep.subr.mxu0 0.0
    %4173 = vmatpush2.msra.mxu0 0.0
    %4174 = vmatprep.subr.mxu0 0.0
    %4175 = vmatpush2.msra.mxu0 0.0
    %4176 = vmatprep.subr.mxu0 0.0
    %4177 = vmatpush2.msra.mxu0 0.0
    %4178 = vmatprep.subr.mxu0 0.0
    %4179 = vmatpush2.msra.mxu0 0.0
    %4180 = vmatprep.subr.mxu0 0.0
    %4181 = vmatpush2.msra.mxu0 0.0
    %4182 = vmatprep.subr.mxu0 0.0
    %4183 = vmatpush2.msra.mxu0 0.0
    %4184 = vmatprep.subr.mxu0 0.0
    %4185 = vmatpush2.msra.mxu0 0.0
    %4186 = vmatprep.subr.mxu0 0.0
    %4187 = vmatpush2.msra.mxu0 0.0
    %4188 = vmatprep.subr.mxu0 0.0
    %4189 = vmatpush2.msra.mxu0 0.0
    %4190 = vmatprep.subr.mxu0 0.0
    %4191 = vmatpush2.msra.mxu0 0.0
    %4192 = vmatprep.subr.mxu0 0.0
    %4193 = vmatpush2.msra.mxu0 0.0
    %4194 = vmatprep.mubr.f32.mxu0 0.0
    %4195 = vmatmul.mubr.f32.gmra.mxu0 %v4128
    %v4196 = vpop.f32.mrf.mxu0
    %v4197 = vadd.f32 0.0, %v4196
    %v4198 = vpop.f32.mrf.mxu0
    %4199 = vdwg.mxu0
    %4202 = vrot.lane.b32.xlu0 %v4197, 32
    %v4203 = vpop.permute.xlu0 %4202
    %v4205 = vsel %vm1034, %v4040, %v4203
    %v4206 = vsel %vm3939, %v4205, %v4037
    %v4208 = vsel %vm3659, %v4206, 0
    %4210 = vmatprep.subr.mxu0 0.0
    %4211 = vmatpush1.msra.mxu0 0.0
    %4212 = vmatprep.subr.mxu0 0.0
    %4213 = vmatpush1.msra.mxu0 0.0
    %4214 = vmatprep.subr.mxu0 0.0
    %4215 = vmatpush1.msra.mxu0 0.0
    %4216 = vmatprep.subr.mxu0 0.0
    %4217 = vmatpush1.msra.mxu0 0.0
    %4218 = vmatprep.subr.mxu0 0.0
    %4219 = vmatpush1.msra.mxu0 %v3653
    %4220 = vmatprep.subr.mxu0 0.0
    %4221 = vmatpush1.msra.mxu0 %v3652
    %4222 = vmatprep.subr.mxu0 0.0
    %4223 = vmatpush1.msra.mxu0 %v3651
    %4224 = vmatprep.subr.mxu0 0.0
    %4225 = vmatpush1.msra.mxu0 %v3650
    %4226 = vmatprep.subr.mxu0 0.0
    %4227 = vmatpush1.msra.mxu0 %v3649
    %4228 = vmatprep.subr.mxu0 0.0
    %4229 = vmatpush1.msra.mxu0 %v3648
    %4230 = vmatprep.subr.mxu0 0.0
    %4231 = vmatpush1.msra.mxu0 %v3647
    %4232 = vmatprep.subr.mxu0 0.0
    %4233 = vmatpush1.msra.mxu0 %v3646
    %4234 = vmatprep.subr.mxu0 0.0
    %4235 = vmatpush1.msra.mxu0 %v3645
    %4236 = vmatprep.subr.mxu0 0.0
    %4237 = vmatpush1.msra.mxu0 %v3644
    %4238 = vmatprep.subr.mxu0 0.0
    %4239 = vmatpush1.msra.mxu0 %v3643
    %4240 = vmatprep.subr.mxu0 0.0
    %4241 = vmatpush1.msra.mxu0 %v3642
    %4242 = vmatprep.subr.mxu0 0.0
    %4243 = vmatpush2.msra.mxu0 0.0
    %4244 = vmatprep.subr.mxu0 0.0
    %4245 = vmatpush2.msra.mxu0 0.0
    %4246 = vmatprep.subr.mxu0 0.0
    %4247 = vmatpush2.msra.mxu0 0.0
    %4248 = vmatprep.subr.mxu0 0.0
    %4249 = vmatpush2.msra.mxu0 0.0
    %4250 = vmatprep.subr.mxu0 0.0
    %4251 = vmatpush2.msra.mxu0 0.0
    %4252 = vmatprep.subr.mxu0 0.0
    %4253 = vmatpush2.msra.mxu0 0.0
    %4254 = vmatprep.subr.mxu0 0.0
    %4255 = vmatpush2.msra.mxu0 0.0
    %4256 = vmatprep.subr.mxu0 0.0
    %4257 = vmatpush2.msra.mxu0 0.0
    %4258 = vmatprep.subr.mxu0 0.0
    %4259 = vmatpush2.msra.mxu0 0.0
    %4260 = vmatprep.subr.mxu0 0.0
    %4261 = vmatpush2.msra.mxu0 0.0
    %4262 = vmatprep.subr.mxu0 0.0
    %4263 = vmatpush2.msra.mxu0 0.0
    %4264 = vmatprep.subr.mxu0 0.0
    %4265 = vmatpush2.msra.mxu0 0.0
    %4266 = vmatprep.subr.mxu0 0.0
    %4267 = vmatpush2.msra.mxu0 0.0
    %4268 = vmatprep.subr.mxu0 0.0
    %4269 = vmatpush2.msra.mxu0 0.0
    %4270 = vmatprep.subr.mxu0 0.0
    %4271 = vmatpush2.msra.mxu0 0.0
    %4272 = vmatprep.subr.mxu0 0.0
    %4273 = vmatpush2.msra.mxu0 0.0
    %4274 = vmatprep.mubr.f32.mxu0 0.0
    %4275 = vmatmul.mubr.f32.gmra.mxu0 %v4208
    %v4276 = vpop.f32.mrf.mxu0
    %v4277 = vadd.f32 %v3658, %v4276
    %v4278 = vpop.f32.mrf.mxu0
    %4279 = vdwg.mxu0
    %v4280 = vxor.u32 %v4277, 2147483648
    %v4281 = vmul.f32 %v4280, 1.442695
    %v4282 = vpow.pop %v4281
    %v4283 = vadd.f32 %v4282, 1.0
    %v4284 = vrcp.pop %v4283
    %v4285 = vmul.f32 1.0, %v4284
    %v4286 = vtanh.pop %v4277
    %v4287 = vmul.f32 %v4285, %v4031
    %4289 = vrot.lane.b32.xlu0 %v4286, 32
    %v4290 = vpop.permute.xlu0 %4289
    %v4292 = vmul.f32 %v4285, %v4290
    %4294 = vrot.lane.b32.xlu0 %v4292, 32
    %v4295 = vpop.permute.xlu0 %4294
    %v4297 = vadd.f32 %v4287, %v4295
    %v4298 = vtanh.pop %v4297
    %4300 = vrot.lane.b32.xlu0 %v4298, 32
    %v4301 = vpop.permute.xlu0 %4300
    %v4303 = vmul.f32 %v4285, %v4301
    %4305 = vrot.lane.b32.xlu0 %v4303, 64
    %v4306 = vpop.permute.xlu0 %4305
    %v4307 = vsel %vm1034, %v4306, 0
    %4309 = vmatprep.subr.mxu0 0.0
    %4310 = vmatpush1.xpose.msra.mxu0 0.0
    %4311 = vmatprep.subr.mxu0 0.0
    %4312 = vmatpush1.xpose.msra.mxu0 0.0
    %4313 = vmatprep.subr.mxu0 0.0
    %4314 = vmatpush1.xpose.msra.mxu0 0.0
    %4315 = vmatprep.subr.mxu0 0.0
    %4316 = vmatpush1.xpose.msra.mxu0 0.0
    %4317 = vmatprep.subr.mxu0 0.0
    %4318 = vmatpush1.xpose.msra.mxu0 0.0
    %4319 = vmatprep.subr.mxu0 0.0
    %4320 = vmatpush1.xpose.msra.mxu0 0.0
    %4321 = vmatprep.subr.mxu0 0.0
    %4322 = vmatpush1.xpose.msra.mxu0 0.0
    %4323 = vmatprep.subr.mxu0 0.0
    %4324 = vmatpush1.xpose.msra.mxu0 0.0
    %4325 = vmatprep.subr.mxu0 0.0
    %4326 = vmatpush1.xpose.msra.mxu0 0.0
    %4327 = vmatprep.subr.mxu0 0.0
    %4328 = vmatpush1.xpose.msra.mxu0 0.0
    %4329 = vmatprep.subr.mxu0 0.0
    %4330 = vmatpush1.xpose.msra.mxu0 0.0
    %4331 = vmatprep.subr.mxu0 0.0
    %4332 = vmatpush1.xpose.msra.mxu0 0.0
    %4333 = vmatprep.subr.mxu0 0.0
    %4334 = vmatpush1.xpose.msra.mxu0 0.0
    %4335 = vmatprep.subr.mxu0 0.0
    %4336 = vmatpush1.xpose.msra.mxu0 0.0
    %4337 = vmatprep.subr.mxu0 0.0
    %4338 = vmatpush1.xpose.msra.mxu0 %v3770
    %4339 = vmatprep.subr.mxu0 0.0
    %4340 = vmatpush1.xpose.msra.mxu0 %v3768
    %4341 = vmatprep.subr.mxu0 0.0
    %4342 = vmatpush2.xpose.msra.mxu0 0.0
    %4343 = vmatprep.subr.mxu0 0.0
    %4344 = vmatpush2.xpose.msra.mxu0 0.0
    %4345 = vmatprep.subr.mxu0 0.0
    %4346 = vmatpush2.xpose.msra.mxu0 0.0
    %4347 = vmatprep.subr.mxu0 0.0
    %4348 = vmatpush2.xpose.msra.mxu0 0.0
    %4349 = vmatprep.subr.mxu0 0.0
    %4350 = vmatpush2.xpose.msra.mxu0 0.0
    %4351 = vmatprep.subr.mxu0 0.0
    %4352 = vmatpush2.xpose.msra.mxu0 0.0
    %4353 = vmatprep.subr.mxu0 0.0
    %4354 = vmatpush2.xpose.msra.mxu0 0.0
    %4355 = vmatprep.subr.mxu0 0.0
    %4356 = vmatpush2.xpose.msra.mxu0 0.0
    %4357 = vmatprep.subr.mxu0 0.0
    %4358 = vmatpush2.xpose.msra.mxu0 0.0
    %4359 = vmatprep.subr.mxu0 0.0
    %4360 = vmatpush2.xpose.msra.mxu0 0.0
    %4361 = vmatprep.subr.mxu0 0.0
    %4362 = vmatpush2.xpose.msra.mxu0 0.0
    %4363 = vmatprep.subr.mxu0 0.0
    %4364 = vmatpush2.xpose.msra.mxu0 0.0
    %4365 = vmatprep.subr.mxu0 0.0
    %4366 = vmatpush2.xpose.msra.mxu0 0.0
    %4367 = vmatprep.subr.mxu0 0.0
    %4368 = vmatpush2.xpose.msra.mxu0 0.0
    %4369 = vmatprep.subr.mxu0 0.0
    %4370 = vmatpush2.xpose.msra.mxu0 0.0
    %4371 = vmatprep.subr.mxu0 0.0
    %4372 = vmatpush2.xpose.msra.mxu0 0.0
    %4373 = vmatprep.mubr.f32.mxu0 0.0
    %4374 = vmatmul.mubr.f32.gmra.mxu0 %v4307
    %v4375 = vpop.f32.mrf.mxu0
    %v4376 = vadd.f32 0.0, %v4375
    %v4377 = vpop.f32.mrf.mxu0
    %4378 = vdwg.mxu0
    %v4379 = vsel %vm848, %v4376, -1e+30
    %v4380 = vsel %vm3843, %v4379, -inf
    %4381 = vmax.xlane.f32.xlu0 %v4380
    %v4382 = vpop.xlane.xlu0 %4381
    %v4383 = vsub.f32 %v4376, %v4382
    %v4384 = vmul.f32 %v4383, 1.442695
    %v4385 = vpow.pop %v4384
    %v4386 = vsel %vm848, %v4385, 0.0
    %v4387 = vsel %vm3843, %v4386, 0.0
    %4388 = vadd.xlane.f32.xlu0 %v4387
    %v4389 = vpop.xlane.xlu0 %4388
    %v4390 = vmax.f32 %v4389, 1e-30
    %v4391 = vrcp.pop %v4390
    %v4392 = vmul.f32 %v4386, %v4391
    %v4394 = vsel %vm877, %v4392, 0
    %4396 = vmatprep.subr.mxu0 0.0
    %4397 = vmatpush1.msra.mxu0 0.0
    %4398 = vmatprep.subr.mxu0 0.0
    %4399 = vmatpush1.msra.mxu0 0.0
    %4400 = vmatprep.subr.mxu0 0.0
    %4401 = vmatpush1.msra.mxu0 0.0
    %4402 = vmatprep.subr.mxu0 0.0
    %4403 = vmatpush1.msra.mxu0 0.0
    %4404 = vmatprep.subr.mxu0 0.0
    %4405 = vmatpush1.msra.mxu0 0.0
    %4406 = vmatprep.subr.mxu0 0.0
    %4407 = vmatpush1.msra.mxu0 0.0
    %4408 = vmatprep.subr.mxu0 0.0
    %4409 = vmatpush1.msra.mxu0 0.0
    %4410 = vmatprep.subr.mxu0 0.0
    %4411 = vmatpush1.msra.mxu0 0.0
    %4412 = vmatprep.subr.mxu0 0.0
    %4413 = vmatpush1.msra.mxu0 0.0
    %4414 = vmatprep.subr.mxu0 0.0
    %4415 = vmatpush1.msra.mxu0 0.0
    %4416 = vmatprep.subr.mxu0 0.0
    %4417 = vmatpush1.msra.mxu0 0.0
    %4418 = vmatprep.subr.mxu0 0.0
    %4419 = vmatpush1.msra.mxu0 0.0
    %4420 = vmatprep.subr.mxu0 0.0
    %4421 = vmatpush1.msra.mxu0 0.0
    %4422 = vmatprep.subr.mxu0 0.0
    %4423 = vmatpush1.msra.mxu0 0.0
    %4424 = vmatprep.subr.mxu0 0.0
    %4425 = vmatpush1.msra.mxu0 %v3861
    %4426 = vmatprep.subr.mxu0 0.0
    %4427 = vmatpush1.msra.mxu0 %v3763
    %4428 = vmatprep.subr.mxu0 0.0
    %4429 = vmatpush2.msra.mxu0 0.0
    %4430 = vmatprep.subr.mxu0 0.0
    %4431 = vmatpush2.msra.mxu0 0.0
    %4432 = vmatprep.subr.mxu0 0.0
    %4433 = vmatpush2.msra.mxu0 0.0
    %4434 = vmatprep.subr.mxu0 0.0
    %4435 = vmatpush2.msra.mxu0 0.0
    %4436 = vmatprep.subr.mxu0 0.0
    %4437 = vmatpush2.msra.mxu0 0.0
    %4438 = vmatprep.subr.mxu0 0.0
    %4439 = vmatpush2.msra.mxu0 0.0
    %4440 = vmatprep.subr.mxu0 0.0
    %4441 = vmatpush2.msra.mxu0 0.0
    %4442 = vmatprep.subr.mxu0 0.0
    %4443 = vmatpush2.msra.mxu0 0.0
    %4444 = vmatprep.subr.mxu0 0.0
    %4445 = vmatpush2.msra.mxu0 0.0
    %4446 = vmatprep.subr.mxu0 0.0
    %4447 = vmatpush2.msra.mxu0 0.0
    %4448 = vmatprep.subr.mxu0 0.0
    %4449 = vmatpush2.msra.mxu0 0.0
    %4450 = vmatprep.subr.mxu0 0.0
    %4451 = vmatpush2.msra.mxu0 0.0
    %4452 = vmatprep.subr.mxu0 0.0
    %4453 = vmatpush2.msra.mxu0 0.0
    %4454 = vmatprep.subr.mxu0 0.0
    %4455 = vmatpush2.msra.mxu0 0.0
    %4456 = vmatprep.subr.mxu0 0.0
    %4457 = vmatpush2.msra.mxu0 0.0
    %4458 = vmatprep.subr.mxu0 0.0
    %4459 = vmatpush2.msra.mxu0 0.0
    %4460 = vmatprep.mubr.f32.mxu0 0.0
    %4461 = vmatmul.mubr.f32.gmra.mxu0 %v4394
    %v4462 = vpop.f32.mrf.mxu0
    %v4463 = vadd.f32 0.0, %v4462
    %v4464 = vpop.f32.mrf.mxu0
    %4465 = vdwg.mxu0
    %v4466 = vld [vmem:[#allocation8 + $0xf0] sm:$0xff]
    %v4467 = vld [vmem:[#allocation8 + $0xf8] sm:$0xff]
    %v4468 = vld [vmem:[#allocation8 + $0x100] sm:$0xff]
    %v4469 = vld [vmem:[#allocation8 + $0x108] sm:$0xff]
    %v4470 = vld [vmem:[#allocation8 + $0x110] sm:$0xff]
    %v4471 = vld [vmem:[#allocation8 + $0x118] sm:$0xff]
    %v4472 = vld [vmem:[#allocation8 + $0x120] sm:$0xff]
    %v4473 = vld [vmem:[#allocation8 + $0x128] sm:$0xff]
    %v4474 = vld [vmem:[#allocation8 + $0x130] sm:$0xff]
    %4477 = vrot.lane.b32.xlu0 %v4463, 32
    %v4478 = vpop.permute.xlu0 %4477
    %v4480 = vsel %vm1034, %v4306, %v4478
    %v4481 = vlaneseq
    %v4482 = vshrl.u32 %v4481, 7
    %v4483 = vsub.s32 0, %v4482
    %v4484 = vrot.slane %v4474, %v4483
    %v4486 = vsel %vm3939, %v4480, 0
    %4488 = vmatprep.subr.mxu0 0.0
    %4489 = vmatpush1.msra.mxu0 0.0
    %4490 = vmatprep.subr.mxu0 0.0
    %4491 = vmatpush1.msra.mxu0 0.0
    %4492 = vmatprep.subr.mxu0 0.0
    %4493 = vmatpush1.msra.mxu0 0.0
    %4494 = vmatprep.subr.mxu0 0.0
    %4495 = vmatpush1.msra.mxu0 0.0
    %4496 = vmatprep.subr.mxu0 0.0
    %4497 = vmatpush1.msra.mxu0 0.0
    %4498 = vmatprep.subr.mxu0 0.0
    %4499 = vmatpush1.msra.mxu0 0.0
    %4500 = vmatprep.subr.mxu0 0.0
    %4501 = vmatpush1.msra.mxu0 0.0
    %4502 = vmatprep.subr.mxu0 0.0
    %4503 = vmatpush1.msra.mxu0 0.0
    %4504 = vmatprep.subr.mxu0 0.0
    %4505 = vmatpush1.msra.mxu0 %v4473
    %4506 = vmatprep.subr.mxu0 0.0
    %4507 = vmatpush1.msra.mxu0 %v4472
    %4508 = vmatprep.subr.mxu0 0.0
    %4509 = vmatpush1.msra.mxu0 %v4471
    %4510 = vmatprep.subr.mxu0 0.0
    %4511 = vmatpush1.msra.mxu0 %v4470
    %4512 = vmatprep.subr.mxu0 0.0
    %4513 = vmatpush1.msra.mxu0 %v4469
    %4514 = vmatprep.subr.mxu0 0.0
    %4515 = vmatpush1.msra.mxu0 %v4468
    %4516 = vmatprep.subr.mxu0 0.0
    %4517 = vmatpush1.msra.mxu0 %v4467
    %4518 = vmatprep.subr.mxu0 0.0
    %4519 = vmatpush1.msra.mxu0 %v4466
    %4520 = vmatprep.subr.mxu0 0.0
    %4521 = vmatpush2.msra.mxu0 0.0
    %4522 = vmatprep.subr.mxu0 0.0
    %4523 = vmatpush2.msra.mxu0 0.0
    %4524 = vmatprep.subr.mxu0 0.0
    %4525 = vmatpush2.msra.mxu0 0.0
    %4526 = vmatprep.subr.mxu0 0.0
    %4527 = vmatpush2.msra.mxu0 0.0
    %4528 = vmatprep.subr.mxu0 0.0
    %4529 = vmatpush2.msra.mxu0 0.0
    %4530 = vmatprep.subr.mxu0 0.0
    %4531 = vmatpush2.msra.mxu0 0.0
    %4532 = vmatprep.subr.mxu0 0.0
    %4533 = vmatpush2.msra.mxu0 0.0
    %4534 = vmatprep.subr.mxu0 0.0
    %4535 = vmatpush2.msra.mxu0 0.0
    %4536 = vmatprep.subr.mxu0 0.0
    %4537 = vmatpush2.msra.mxu0 0.0
    %4538 = vmatprep.subr.mxu0 0.0
    %4539 = vmatpush2.msra.mxu0 0.0
    %4540 = vmatprep.subr.mxu0 0.0
    %4541 = vmatpush2.msra.mxu0 0.0
    %4542 = vmatprep.subr.mxu0 0.0
    %4543 = vmatpush2.msra.mxu0 0.0
    %4544 = vmatprep.subr.mxu0 0.0
    %4545 = vmatpush2.msra.mxu0 0.0
    %4546 = vmatprep.subr.mxu0 0.0
    %4547 = vmatpush2.msra.mxu0 0.0
    %4548 = vmatprep.subr.mxu0 0.0
    %4549 = vmatpush2.msra.mxu0 0.0
    %4550 = vmatprep.subr.mxu0 0.0
    %4551 = vmatpush2.msra.mxu0 0.0
    %4552 = vmatprep.mubr.f32.mxu0 0.0
    %4553 = vmatmul.mubr.f32.gmra.mxu0 %v4486
    %v4554 = vpop.f32.mrf.mxu0
    %v4555 = vadd.f32 %v4484, %v4554
    %v4556 = vpop.f32.mrf.mxu0
    %4557 = vdwg.mxu0
    %v4558 = vmax.f32 %v4555, 0.0
    %v4559 = vld [vmem:[#allocation8 + $0x138] sm:$0xff]
    %4561 = vset.pattern.permute.xlu0 0
    %4562 = vperm.xlu0 %4561, %v4559
    %v4563 = vpop.permute.xlu0 %4562
    %v4564 = vrot.slane %v4563, 1
    %v4566 = vsel %vm1034, %v4559, 0
    %v4569 = vsel %vm1034, %v4558, 0
    %4571 = vmatprep.subr.mxu0 0.0
    %4572 = vmatpush1.xpose.msra.mxu0 0.0
    %4573 = vmatprep.subr.mxu0 0.0
    %4574 = vmatpush1.xpose.msra.mxu0 0.0
    %4575 = vmatprep.subr.mxu0 0.0
    %4576 = vmatpush1.xpose.msra.mxu0 0.0
    %4577 = vmatprep.subr.mxu0 0.0
    %4578 = vmatpush1.xpose.msra.mxu0 0.0
    %4579 = vmatprep.subr.mxu0 0.0
    %4580 = vmatpush1.xpose.msra.mxu0 0.0
    %4581 = vmatprep.subr.mxu0 0.0
    %4582 = vmatpush1.xpose.msra.mxu0 0.0
    %4583 = vmatprep.subr.mxu0 0.0
    %4584 = vmatpush1.xpose.msra.mxu0 0.0
    %4585 = vmatprep.subr.mxu0 0.0
    %4586 = vmatpush1.xpose.msra.mxu0 0.0
    %4587 = vmatprep.subr.mxu0 0.0
    %4588 = vmatpush1.xpose.msra.mxu0 0.0
    %4589 = vmatprep.subr.mxu0 0.0
    %4590 = vmatpush1.xpose.msra.mxu0 0.0
    %4591 = vmatprep.subr.mxu0 0.0
    %4592 = vmatpush1.xpose.msra.mxu0 0.0
    %4593 = vmatprep.subr.mxu0 0.0
    %4594 = vmatpush1.xpose.msra.mxu0 0.0
    %4595 = vmatprep.subr.mxu0 0.0
    %4596 = vmatpush1.xpose.msra.mxu0 0.0
    %4597 = vmatprep.subr.mxu0 0.0
    %4598 = vmatpush1.xpose.msra.mxu0 0.0
    %4599 = vmatprep.subr.mxu0 0.0
    %4600 = vmatpush1.xpose.msra.mxu0 0.0
    %4601 = vmatprep.subr.mxu0 0.0
    %4602 = vmatpush1.xpose.msra.mxu0 %v4569
    %4603 = vmatprep.subr.mxu0 0.0
    %4604 = vmatpush2.xpose.msra.mxu0 0.0
    %4605 = vmatprep.subr.mxu0 0.0
    %4606 = vmatpush2.xpose.msra.mxu0 0.0
    %4607 = vmatprep.subr.mxu0 0.0
    %4608 = vmatpush2.xpose.msra.mxu0 0.0
    %4609 = vmatprep.subr.mxu0 0.0
    %4610 = vmatpush2.xpose.msra.mxu0 0.0
    %4611 = vmatprep.subr.mxu0 0.0
    %4612 = vmatpush2.xpose.msra.mxu0 0.0
    %4613 = vmatprep.subr.mxu0 0.0
    %4614 = vmatpush2.xpose.msra.mxu0 0.0
    %4615 = vmatprep.subr.mxu0 0.0
    %4616 = vmatpush2.xpose.msra.mxu0 0.0
    %4617 = vmatprep.subr.mxu0 0.0
    %4618 = vmatpush2.xpose.msra.mxu0 0.0
    %4619 = vmatprep.subr.mxu0 0.0
    %4620 = vmatpush2.xpose.msra.mxu0 0.0
    %4621 = vmatprep.subr.mxu0 0.0
    %4622 = vmatpush2.xpose.msra.mxu0 0.0
    %4623 = vmatprep.subr.mxu0 0.0
    %4624 = vmatpush2.xpose.msra.mxu0 0.0
    %4625 = vmatprep.subr.mxu0 0.0
    %4626 = vmatpush2.xpose.msra.mxu0 0.0
    %4627 = vmatprep.subr.mxu0 0.0
    %4628 = vmatpush2.xpose.msra.mxu0 0.0
    %4629 = vmatprep.subr.mxu0 0.0
    %4630 = vmatpush2.xpose.msra.mxu0 0.0
    %4631 = vmatprep.subr.mxu0 0.0
    %4632 = vmatpush2.xpose.msra.mxu0 0.0
    %4633 = vmatprep.subr.mxu0 0.0
    %4634 = vmatpush2.xpose.msra.mxu0 0.0
    %4635 = vmatprep.mubr.f32.mxu0 0.0
    %4636 = vmatmul.mubr.f32.gmra.mxu0 %v4566
    %v4637 = vpop.f32.mrf.mxu0
    %v4638 = vadd.f32 %v4564, %v4637
    %v4639 = vpop.f32.mrf.mxu0
    %4640 = vdwg.mxu0
    %vm4641 = vcmask 8192
    %4642 = vst.msk [vmem:[#allocation9] sm:$0x1] %vm4641, %v4638
    // Predicated region
    $region38: #{tpu_custom_call.1} parent=1 // pred_check
      _
    $region39: #{tpu_custom_call.1} parent=1 // pred_check_branch
      %4644 = sbr.rel (0) target = $region41
    $region40: #{tpu_custom_call.1} parent=1 // pred_region
      %s4646 = ssub.s32 16, 16
      %4647 = vsyncadd [#allocation5], %s4646
      %s4649 = sshll.u32 [#allocation9], 4
      %s4650 = int_to_ptr.vmem [resolvable:$true] %s4649
      %4652 = dma.vmem_to_hbm [thread:$0]  %s4650, 16, %s6, [#allocation5]
    $region41: #{tpu_custom_call.1} parent=1 // pred_fallthru
      _
    // Predicated region
    $region42: #{tpu_custom_call.1} parent=1 // pred_check
      _
    $region43: #{tpu_custom_call.1} parent=1 // pred_check_branch
      %4654 = sbr.rel (0) target = $region45
    $region44: #{tpu_custom_call.1} parent=1 // pred_region
      %4655 = dma.done [#allocation5], 16
    $region45: #{tpu_custom_call.1} parent=1 // pred_fallthru
      _
    %4656 = vsyncpa [#allocation4], 1
    %4657 = vsyncpa [#allocation7], 1
    %4658 = vsyncpa [#allocation5], 1

</llo_original>
